<compile_context>
chip_gen: v7x
topology: tpu7x:2x2x1
jax: 0.10.0
libtpu: 0.0.40
codegen_flags: <defaults>
</compile_context>

<pallas_src>
import functools

import jax
import jax.numpy as jnp
from jax import lax
from jax.experimental import pallas as pl
from jax.experimental.pallas import tpu as pltpu


def _round_up(v, m):
    return ((v + m - 1) // m) * m


def _has_bf16_vpu():
    """True on chips with a bf16 VPU/EUP (v6e / v7x); conservative default False."""
    try:
        kind = jax.devices()[0].device_kind.lower()
    except Exception:
        return False
    return any(tag in kind for tag in ("v6", "v7", "tpu6", "tpu7"))


def gated_attn_kernel(x_ref, wab_ref, bab_ref, wct_ref, bct_ref, a_ref, *,
                      gate_dtype):
    d = wab_ref.shape[1] // 2

    # Fused gate projection: one (tile_n, L) @ (L, 2D) bf16 matmul, f32 acc.
    h = jnp.dot(x_ref[...], wab_ref[...], preferred_element_type=jnp.float32)
    h = (h + bab_ref[...]).astype(gate_dtype)

    a = jnp.tanh(h[:, :d])                 # attention_a: Tanh    (EUP)
    b = jax.nn.sigmoid(h[:, d:])           # attention_b: Sigmoid (EUP)
    ab = (a * b).astype(wct_ref.dtype)     # gate, (tile_n, D)

    # attention_c, lane-dense: (C, D) x (tile_n, D) contracting D -> (C, tile_n).
    out = lax.dot_general(wct_ref[...], ab,
                          dimension_numbers=(((1,), (1,)), ((), ())),
                          preferred_element_type=jnp.float32)
    out = out + bct_ref[...]               # (C, 1) broadcast over lanes
    a_ref[...] = out.astype(a_ref.dtype)


def attn_net_gated(x, wa, ba, wb, bb, wc, bc, *, tile_n=1024,
                   mxu_dtype=jnp.bfloat16):
    """Pallas forward of Attn_Net_Gated. Returns (A, x) like the PyTorch module."""
    N, L = x.shape
    D = wa.shape[1]
    C = wc.shape[1]
    out_dtype = x.dtype
    mxu_dtype = jnp.dtype(x.dtype if mxu_dtype is None else mxu_dtype)
    out_itemsize = jnp.dtype(out_dtype).itemsize

    # Fuse the two gate projections wrapper-side and cast every MXU operand to
    # one dtype (bf16 by default) so the in-kernel matmuls never get promoted
    # back to f32 by mixed-dtype inputs.  Biases stay f32 (added post-acc).
    wab = jnp.concatenate([wa, wb], axis=1).astype(mxu_dtype)    # (L, 2D)
    bab = jnp.concatenate([ba, bb], axis=1).astype(jnp.float32)  # (1, 2D)
    wct = wc.T.astype(mxu_dtype)                                 # (C, D)
    bct = jnp.reshape(bc, (C, 1)).astype(jnp.float32)            # (C, 1)

    # Row tiling: keep the grid >= ~4 steps when N permits (DMA/compute
    # overlap + both v7x TensorCores engaged), 128-row multiples for the MXU;
    # ragged N is zero-padded and the padded rows sliced off the output.
    tile_n = max(128, min(int(tile_n), _round_up(pl.cdiv(N, 4), 128)))
    tile_n = _round_up(tile_n, 128)
    n_pad = _round_up(N, tile_n)
    x_in = x.astype(mxu_dtype)
    if n_pad != N:
        x_in = jnp.pad(x_in, ((0, n_pad - N), (0, 0)))
    grid = (n_pad // tile_n,)

    # Elementwise gate dtype: bf16 VPU/EUP only on v6e/v7x; f32 elsewhere.
    gate_dtype = (jnp.bfloat16
                  if (mxu_dtype == jnp.bfloat16 and _has_bf16_vpu())
                  else jnp.float32)

    # VMEM budget from the real footprint (double-buffered x + out tiles,
    # single-buffered weights, f32 intermediates), capped for v7x's 64 MiB.
    wbytes = (wab.size * wab.dtype.itemsize + bab.size * 4
              + wct.size * wct.dtype.itemsize + bct.size * 4)
    vmem_bytes = (2 * tile_n * L * mxu_dtype.itemsize     # x tile, 2 buffers
                  + wbytes                                 # resident weights
                  + 2 * C * tile_n * out_itemsize          # out tile, 2 buffers
                  + 6 * tile_n * D * 4)                    # f32 intermediates
    vmem_limit = int(min(max(vmem_bytes + (4 << 20), 24 << 20), 40 << 20))

    cost = pl.CostEstimate(
        flops=2 * n_pad * L * (2 * D) + 2 * n_pad * D * C,
        transcendentals=2 * n_pad * D,
        bytes_accessed=(n_pad * L * mxu_dtype.itemsize
                        + wbytes
                        + n_pad * C * out_itemsize),
    )

    # Grid-invariant operands: fetched once, single-buffered.
    def res_spec(shape):
        return pl.BlockSpec(shape, lambda i: (0, 0),
                            pipeline_mode=pl.Buffered(1))

    A_lane = pl.pallas_call(
        functools.partial(gated_attn_kernel, gate_dtype=gate_dtype),
        out_shape=jax.ShapeDtypeStruct((C, n_pad), out_dtype),
        grid_spec=pltpu.PrefetchScalarGridSpec(
            num_scalar_prefetch=0,
            grid=grid,
            in_specs=[
                pl.BlockSpec((tile_n, L), lambda i: (i, 0)),  # x row tile
                res_spec((L, 2 * D)),                         # fused Wa|Wb
                res_spec((1, 2 * D)),                         # fused ba|bb
                res_spec((C, D)),                             # Wc^T
                res_spec((C, 1)),                             # bc^T
            ],
            out_specs=pl.BlockSpec((C, tile_n), lambda i: (0, i)),
        ),
        compiler_params=pltpu.CompilerParams(
            dimension_semantics=("parallel",),
            vmem_limit_bytes=vmem_limit,
        ),
        cost_estimate=cost,
    )(x_in, wab, bab, wct, bct)

    A = A_lane[:, :N].T          # undo lane-dense layout -> (N, C)
    return A, x


def init_params(key, L, D, n_classes, dtype=jnp.float32):
    """Deterministic synthetic parameter init (PyTorch-like uniform fan-in)."""
    k = jax.random.split(key, 6)
    lim_a = 1.0 / jnp.sqrt(L)
    lim_c = 1.0 / jnp.sqrt(D)
    wa = jax.random.uniform(k[0], (L, D), dtype, -lim_a, lim_a)
    ba = jax.random.uniform(k[1], (1, D), dtype, -lim_a, lim_a)
    wb = jax.random.uniform(k[2], (L, D), dtype, -lim_a, lim_a)
    bb = jax.random.uniform(k[3], (1, D), dtype, -lim_a, lim_a)
    wc = jax.random.uniform(k[4], (D, n_classes), dtype, -lim_c, lim_c)
    bc = jax.random.uniform(k[5], (1, n_classes), dtype, -lim_c, lim_c)
    return wa, ba, wb, bb, wc, bc


if __name__ == "__main__":
    # Module defaults L=1024, D=256, n_classes=1; ragged bag size N=777 to
    # exercise padding and the multi-step grid (tile_n clamps to 256 -> 4 steps,
    # pipelined and megacore-splittable).
    N, L, D, n_classes = 777, 1024, 256, 1

    key = jax.random.PRNGKey(0)
    kx, kp = jax.random.split(key)
    x = jax.random.normal(kx, (N, L), jnp.float32)
    wa, ba, wb, bb, wc, bc = init_params(kp, L, D, n_classes)

    A, x_out = attn_net_gated(x, wa, ba, wb, bb, wc, bc)
    A = jax.block_until_ready(A)
    x_out = jax.block_until_ready(x_out)

    # Pure-JAX f32 reference; the kernel feeds the MXU bf16 operands with f32
    # accumulation, so compare with a tolerance covering bf16 operand rounding.
    hp = jax.lax.Precision.HIGHEST
    a_ref = jnp.tanh(jnp.dot(x, wa, precision=hp) + ba)
    b_ref = jax.nn.sigmoid(jnp.dot(x, wb, precision=hp) + bb)
    A_ref = jnp.dot(a_ref * b_ref, wc, precision=hp) + bc

    assert A.shape == (N, n_classes)
    assert x_out.shape == (N, L)
    max_err = float(jnp.max(jnp.abs(A - A_ref)))
    assert jnp.allclose(A, A_ref, atol=3e-2, rtol=3e-2), max_err
    assert jnp.array_equal(x_out, x)

    print("KERNEL_OK")
</pallas_src>

<mosaic_0001>
module attributes {stable_mosaic.version = 11 : i64} {
  func.func @gated_attn_kernel(%arg0: i32, %arg1: memref<256x1024xbf16, #tpu.memory_space<vmem>>, %arg2: memref<1024x512xbf16, #tpu.memory_space<vmem>>, %arg3: memref<1x512xf32, #tpu.memory_space<vmem>>, %arg4: memref<1x256xbf16, #tpu.memory_space<vmem>>, %arg5: memref<1x1xf32, #tpu.memory_space<vmem>>, %arg6: memref<1x256xf32, #tpu.memory_space<vmem>>) attributes {dimension_semantics = [#tpu.dimension_semantics<parallel>], iteration_bounds = array<i64: 4>, scalar_prefetch = 0 : i64, scratch_operands = 0 : i64, tpu.core_type = #tpu.core_type<tc>, window_params = [{transform_indices = @transform_0, window_bounds = array<i64: 256, 1024>}, {pipeline_mode = #tpu.pipeline_mode<synchronous>, transform_indices = @transform_1, window_bounds = array<i64: 1024, 512>}, {pipeline_mode = #tpu.pipeline_mode<synchronous>, transform_indices = @transform_2, window_bounds = array<i64: 1, 512>}, {pipeline_mode = #tpu.pipeline_mode<synchronous>, transform_indices = @transform_3, window_bounds = array<i64: 1, 256>}, {pipeline_mode = #tpu.pipeline_mode<synchronous>, transform_indices = @transform_4, window_bounds = array<i64: 1, 1>}, {transform_indices = @transform_5, window_bounds = array<i64: 1, 256>}]} {
    %c0 = arith.constant 0 : index
    %c0_0 = arith.constant 0 : index
    %0 = vector.load %arg1[%c0, %c0_0] : memref<256x1024xbf16, #tpu.memory_space<vmem>>, vector<256x1024xbf16>
    %c0_1 = arith.constant 0 : index
    %c0_2 = arith.constant 0 : index
    %1 = vector.load %arg2[%c0_1, %c0_2] : memref<1024x512xbf16, #tpu.memory_space<vmem>>, vector<1024x512xbf16>
    %cst = arith.constant dense<0.000000e+00> : vector<256x512xf32>
    %2 = tpu.matmul %0, %1, %cst {dimension_numbers = #tpu.dot_dimension_numbers<[1], [0], [0], [1], [0, 0, 1, 1], [], []>} : vector<256x1024xbf16>, vector<1024x512xbf16>, vector<256x512xf32> -> vector<256x512xf32>
    %c0_3 = arith.constant 0 : index
    %c0_4 = arith.constant 0 : index
    %3 = vector.load %arg3[%c0_3, %c0_4] : memref<1x512xf32, #tpu.memory_space<vmem>>, vector<1x512xf32>
    %4 = vector.broadcast %3 : vector<1x512xf32> to vector<256x512xf32>
    %5 = arith.addf %2, %4 : vector<256x512xf32>
    %6 = vector.extract_strided_slice %5 {offsets = [0, 0], sizes = [256, 256], strides = [1, 1]} : vector<256x512xf32> to vector<256x256xf32>
    %7 = math.tanh %6 : vector<256x256xf32>
    %8 = vector.extract_strided_slice %5 {offsets = [0, 256], sizes = [256, 256], strides = [1, 1]} : vector<256x512xf32> to vector<256x256xf32>
    %9 = arith.negf %8 : vector<256x256xf32>
    %10 = math.exp %9 : vector<256x256xf32>
    %cst_5 = arith.constant 1.000000e+00 : f32
    %11 = vector.broadcast %cst_5 : f32 to vector<256x256xf32>
    %12 = arith.addf %11, %10 : vector<256x256xf32>
    %13 = arith.divf %11, %12 : vector<256x256xf32>
    %14 = arith.mulf %7, %13 : vector<256x256xf32>
    %15 = arith.truncf %14 : vector<256x256xf32> to vector<256x256xbf16>
    %c0_6 = arith.constant 0 : index
    %c0_7 = arith.constant 0 : index
    %16 = vector.load %arg4[%c0_6, %c0_7] : memref<1x256xbf16, #tpu.memory_space<vmem>>, vector<1x256xbf16>
    %cst_8 = arith.constant dense<0.000000e+00> : vector<1x256xf32>
    %17 = tpu.matmul %16, %15, %cst_8 {dimension_numbers = #tpu.dot_dimension_numbers<[1], [1], [0], [0], [0, 0, 1, 0], [], []>} : vector<1x256xbf16>, vector<256x256xbf16>, vector<1x256xf32> -> vector<1x256xf32>
    %c0_9 = arith.constant 0 : index
    %c0_10 = arith.constant 0 : index
    %18 = vector.load %arg5[%c0_9, %c0_10] : memref<1x1xf32, #tpu.memory_space<vmem>>, vector<1x1xf32>
    %19 = vector.broadcast %18 : vector<1x1xf32> to vector<1x256xf32>
    %20 = arith.addf %17, %19 : vector<1x256xf32>
    %c0_11 = arith.constant 0 : index
    %c0_12 = arith.constant 0 : index
    %21 = vector.load %arg6[%c0_11, %c0_12] : memref<1x256xf32, #tpu.memory_space<vmem>>, vector<1x256xf32>
    tpu.vector_store %arg6[%c0_11, %c0_12], %20 {strides = array<i32>} : memref<1x256xf32, #tpu.memory_space<vmem>>, vector<1x256xf32>,
    return
  }
  func.func @transform_0(%arg0: i32) -> (i32, i32) {
    %c0_i32 = arith.constant 0 : i32
    %c0_i32_0 = arith.constant 0 : i32
    return %arg0, %c0_i32 : i32, i32
  }
  func.func @transform_1(%arg0: i32) -> (i32, i32) {
    %c0_i32 = arith.constant 0 : i32
    %c0_i32_0 = arith.constant 0 : i32
    %c0_i32_1 = arith.constant 0 : i32
    return %c0_i32, %c0_i32_0 : i32, i32
  }
  func.func @transform_2(%arg0: i32) -> (i32, i32) {
    %c0_i32 = arith.constant 0 : i32
    %c0_i32_0 = arith.constant 0 : i32
    %c0_i32_1 = arith.constant 0 : i32
    return %c0_i32, %c0_i32_0 : i32, i32
  }
  func.func @transform_3(%arg0: i32) -> (i32, i32) {
    %c0_i32 = arith.constant 0 : i32
    %c0_i32_0 = arith.constant 0 : i32
    %c0_i32_1 = arith.constant 0 : i32
    return %c0_i32, %c0_i32_0 : i32, i32
  }
  func.func @transform_4(%arg0: i32) -> (i32, i32) {
    %c0_i32 = arith.constant 0 : i32
    %c0_i32_0 = arith.constant 0 : i32
    %c0_i32_1 = arith.constant 0 : i32
    return %c0_i32, %c0_i32_0 : i32, i32
  }
  func.func @transform_5(%arg0: i32) -> (i32, i32) {
    %c0_i32 = arith.constant 0 : i32
    %c0_i32_0 = arith.constant 0 : i32
    return %c0_i32, %arg0 : i32, i32
  }
}

</mosaic_0001>

<llo_original>
// kernel: tpu_custom_call.1
$region0: #{tpu_custom_call.1}
  #allocation0 [shape = 'u32[]', space=smem, size = 0x4, offset = 0x4, fixed_abs, tag = 'smem constant byte address 0x4 - core index']
  #allocation1 [shape = 'u32[144,128]{1,0:T(1,128)}', space=vmem, size = 0x12000, scoped, tag = 'internal scratch']
  #allocation2 [shape = 'f32[1,1]{1,0:T(1,128)S(1)}', space=vmem, size = 0x200, scoped, tag = 'scoped memory for tpu_custom_call.1']
  %s0 = inlined_call_operand.hbm [shape: bf16[1024,1024], index: 0, kind: input, shape index: {}]
  %s1 = inlined_call_operand.hbm [shape: bf16[1024,512], index: 1, kind: input, shape index: {}]
  %s2 = inlined_call_operand.hbm [shape: f32[1,512], index: 2, kind: input, shape index: {}]
  %s3 = inlined_call_operand.hbm [shape: bf16[1,256], index: 3, kind: input, shape index: {}]
  %s4 = inlined_call_operand.<no memory space> [shape: f32[1,1], index: 4, kind: input, shape index: {}]
  %s5 = inlined_call_operand.hbm [shape: f32[1,1024], index: 5, kind: output, shape index: {}]
  %s6 = sld [smem:[#allocation0]]
  $region69: #{tpu_custom_call.1} parent=0
    _
  %s8 = ssub.s32 1, %s6
  %s9 = scalar_select 0, %s8, %s6
  %v10 = vstv %s4
  %11 = vst [vmem:[#allocation2] sm:$0x1] %v10
  $region1: #{tpu_custom_call.1} parent=0
    #allocation3 [shape = 'u8[1048576]{0}', space=vmem, size = 0x100000, scoped, tag = 'input window, operand 0']
    #allocation4 [shape = 's32[2]{0}', space=sflag, size = 0x8, scoped, tag = 'scoped memory for tpu_custom_call.1']
    #allocation5 [shape = 's32[2]{0}', space=sflag, size = 0x8, scoped, tag = 'scoped memory for tpu_custom_call.1']
    #allocation6 [shape = 'u8[1048576]{0}', space=vmem, size = 0x100000, scoped, tag = 'input window, operand 1, single buffered']
    #allocation7 [shape = 's32[1]{0}', space=sflag, size = 0x4, scoped, tag = 'scoped memory for tpu_custom_call.1']
    #allocation8 [shape = 'u8[2048]{0}', space=vmem, size = 0x800, scoped, tag = 'input window, operand 2, single buffered']
    #allocation9 [shape = 'u8[1024]{0}', space=vmem, size = 0x400, scoped, tag = 'input window, operand 3, single buffered']
    #allocation10 [shape = 's32[1]{0}', space=sflag, size = 0x4, scoped, tag = 'scoped memory for tpu_custom_call.1']
    #allocation11 [shape = 'u8[2048]{0}', space=vmem, size = 0x800, scoped, tag = 'output window, operand 0']
    %12 = vsyncpa [#allocation4], 0
    %s13 = scalar_lea.sflag [#allocation4], 1
    %14 = vsyncpa %s13, 0
    %15 = vsyncpa [#allocation7], 0
    %16 = vsyncpa [#allocation10], 0
    %17 = vsyncpa [#allocation5], 0
    %s18 = scalar_lea.sflag [#allocation5], 1
    %19 = vsyncpa %s18, 0
    loop: start=0, step=1, limit=6
    $region2: #{tpu_custom_call.1} parent=1 // loop_pre_header
      _
    $region3: #{tpu_custom_call.1} parent=1 // loop_header
      %s21 = sphi 0, %s25
      %p22 = scmp.ge.s32.totalorder %s21, 6
      %s31 = sphi 0, %s33
      %s34 = sphi 0, %s31
      %s35 = sphi 0, %s34
      %s51 = sphi 0, %s35
      %s55 = sphi 0, %s55
      %s57 = sphi 0, %s55
      %s58 = sphi 0, %s57
      %s72 = sphi 0, %s58
      %s76 = sphi 0, %s76
      %s78 = sphi 0, %s76
      %s79 = sphi 0, %s78
      %s93 = sphi 0, %s79
      %s97 = sphi 0, %s97
      %s99 = sphi 0, %s97
      %s100 = sphi 0, %s99
      %s114 = sphi 0, %s100
      %s118 = sphi 0, %s118
      %s120 = sphi 0, %s118
      %s121 = sphi 0, %s120
      %s135 = sphi 0, %s121
      %s141 = sphi 0, %s143
      %s144 = sphi 0, %s141
      %s145 = sphi 0, %s144
      %s161 = sphi 0, %s145
    $region4: #{tpu_custom_call.1} parent=1 // loop_header_branch
      %24 = sbr.rel (%p22) target = $region8
    $region5: #{tpu_custom_call.1} parent=1 // loop_body
      %s26 = ssub.s32 %s21, 1
      %s27 = ssub.s32 %s21, 2
      %s28 = sadd.s32 %s21, 1
      %s29 = ssub.s32 %s21, %s28
      %p30 = scmp.eq.s32.totalorder %s29, 0
      %s32 = sadd.s32 %s31, 1
      %s33 = scalar_select %p30, %s31, %s32
      %p36 = pneg %p30
      %p37 = scmp.eq.s32.totalorder %s21, 3
      %p38 = por %p36, %p37
      %p39 = scmp.ne.s32.totalorder %s31, %s34
      %p40 = scmp.eq.s32.totalorder %s21, 0
      %p41 = por %p39, %p40
      %p42 = scmp.ne.s32.totalorder %s31, %s34
      %p43 = scmp.eq.s32.totalorder %s26, 3
      %p44 = por %p42, %p43
      %p45 = scmp.ne.s32.totalorder %s34, %s35
      %p46 = scmp.eq.s32.totalorder %s26, 0
      %p47 = por %p45, %p46
      %p48 = scmp.ne.s32.totalorder %s34, %s35
      %p49 = scmp.eq.s32.totalorder %s27, 3
      %p50 = por %p48, %p49
      %p52 = scmp.ne.s32.totalorder %s35, %s51
      %p53 = scmp.eq.s32.totalorder %s27, 0
      %p54 = por %p52, %p53
      %s56 = sadd.s32 %s55, 1
      %p59 = scmp.eq.s32.totalorder %s21, 3
      %p60 = scmp.ne.s32.totalorder %s55, %s57
      %p61 = scmp.eq.s32.totalorder %s21, 0
      %p62 = por %p60, %p61
      %p63 = scmp.ne.s32.totalorder %s55, %s57
      %p64 = scmp.eq.s32.totalorder %s26, 3
      %p65 = por %p63, %p64
      %p66 = scmp.ne.s32.totalorder %s57, %s58
      %p67 = scmp.eq.s32.totalorder %s26, 0
      %p68 = por %p66, %p67
      %p69 = scmp.ne.s32.totalorder %s57, %s58
      %p70 = scmp.eq.s32.totalorder %s27, 3
      %p71 = por %p69, %p70
      %p73 = scmp.ne.s32.totalorder %s58, %s72
      %p74 = scmp.eq.s32.totalorder %s27, 0
      %p75 = por %p73, %p74
      %s77 = sadd.s32 %s76, 1
      %p80 = scmp.eq.s32.totalorder %s21, 3
      %p81 = scmp.ne.s32.totalorder %s76, %s78
      %p82 = scmp.eq.s32.totalorder %s21, 0
      %p83 = por %p81, %p82
      %p84 = scmp.ne.s32.totalorder %s76, %s78
      %p85 = scmp.eq.s32.totalorder %s26, 3
      %p86 = por %p84, %p85
      %p87 = scmp.ne.s32.totalorder %s78, %s79
      %p88 = scmp.eq.s32.totalorder %s26, 0
      %p89 = por %p87, %p88
      %p90 = scmp.ne.s32.totalorder %s78, %s79
      %p91 = scmp.eq.s32.totalorder %s27, 3
      %p92 = por %p90, %p91
      %p94 = scmp.ne.s32.totalorder %s79, %s93
      %p95 = scmp.eq.s32.totalorder %s27, 0
      %p96 = por %p94, %p95
      %s98 = sadd.s32 %s97, 1
      %p101 = scmp.eq.s32.totalorder %s21, 3
      %p102 = scmp.ne.s32.totalorder %s97, %s99
      %p103 = scmp.eq.s32.totalorder %s21, 0
      %p104 = por %p102, %p103
      %p105 = scmp.ne.s32.totalorder %s97, %s99
      %p106 = scmp.eq.s32.totalorder %s26, 3
      %p107 = por %p105, %p106
      %p108 = scmp.ne.s32.totalorder %s99, %s100
      %p109 = scmp.eq.s32.totalorder %s26, 0
      %p110 = por %p108, %p109
      %p111 = scmp.ne.s32.totalorder %s99, %s100
      %p112 = scmp.eq.s32.totalorder %s27, 3
      %p113 = por %p111, %p112
      %p115 = scmp.ne.s32.totalorder %s100, %s114
      %p116 = scmp.eq.s32.totalorder %s27, 0
      %p117 = por %p115, %p116
      %s119 = sadd.s32 %s118, 1
      %p122 = scmp.eq.s32.totalorder %s21, 3
      %p123 = scmp.ne.s32.totalorder %s118, %s120
      %p124 = scmp.eq.s32.totalorder %s21, 0
      %p125 = por %p123, %p124
      %p126 = scmp.ne.s32.totalorder %s118, %s120
      %p127 = scmp.eq.s32.totalorder %s26, 3
      %p128 = por %p126, %p127
      %p129 = scmp.ne.s32.totalorder %s120, %s121
      %p130 = scmp.eq.s32.totalorder %s26, 0
      %p131 = por %p129, %p130
      %p132 = scmp.ne.s32.totalorder %s120, %s121
      %p133 = scmp.eq.s32.totalorder %s27, 3
      %p134 = por %p132, %p133
      %p136 = scmp.ne.s32.totalorder %s121, %s135
      %p137 = scmp.eq.s32.totalorder %s27, 0
      %p138 = por %p136, %p137
      %s139 = ssub.s32 %s21, %s28
      %p140 = scmp.eq.s32.totalorder %s139, 0
      %s142 = sadd.s32 %s141, 1
      %s143 = scalar_select %p140, %s141, %s142
      %p146 = pneg %p140
      %p147 = scmp.eq.s32.totalorder %s21, 3
      %p148 = por %p146, %p147
      %p149 = scmp.ne.s32.totalorder %s141, %s144
      %p150 = scmp.eq.s32.totalorder %s21, 0
      %p151 = por %p149, %p150
      %p152 = scmp.ne.s32.totalorder %s141, %s144
      %p153 = scmp.eq.s32.totalorder %s26, 3
      %p154 = por %p152, %p153
      %p155 = scmp.ne.s32.totalorder %s144, %s145
      %p156 = scmp.eq.s32.totalorder %s26, 0
      %p157 = por %p155, %p156
      %p158 = scmp.ne.s32.totalorder %s144, %s145
      %p159 = scmp.eq.s32.totalorder %s27, 3
      %p160 = por %p158, %p159
      %p162 = scmp.ne.s32.totalorder %s145, %s161
      %p163 = scmp.eq.s32.totalorder %s27, 0
      %p164 = por %p162, %p163
      %p165 = scmp.le.s32.totalorder 1, %s21
      %p166 = scmp.lt.s32.totalorder %s21, 5
      %p167 = pnand %p165, %p166
      %p168 = pneg %p167
      // Predicated region
      $region9: #{tpu_custom_call.1} parent=5 // pred_check
        _
      $region10: #{tpu_custom_call.1} parent=5 // pred_check_branch
        %170 = sbr.rel (%p167) target = $region12
      $region11: #{tpu_custom_call.1} parent=5 // pred_region
        %s171 = ssub.s32 %s21, 1
        // Predicated region
        $region13: #{tpu_custom_call.1} parent=11 // pred_check
          %p172 = pneg %p68
        $region14: #{tpu_custom_call.1} parent=11 // pred_check_branch
          %174 = sbr.rel (%p172) target = $region16
        $region15: #{tpu_custom_call.1} parent=11 // pred_region
          %s176 = ssub.s32 32768, 32768
          %177 = vsyncadd [#allocation7], %s176
          %s178 = sshll.u32 [#allocation6], 4
          %s179 = int_to_ptr.vmem [resolvable:$true] %s178
          %184 = dma.hbm_to_vmem [thread:$0]  %s1, 32768, %s179, [#allocation7], 256, 256, 16
        $region16: #{tpu_custom_call.1} parent=11 // pred_fallthru
          _
        // Predicated region
        $region17: #{tpu_custom_call.1} parent=11 // pred_check
          %p185 = pneg %p89
        $region18: #{tpu_custom_call.1} parent=11 // pred_check_branch
          %187 = sbr.rel (%p185) target = $region20
        $region19: #{tpu_custom_call.1} parent=11 // pred_region
          %s189 = ssub.s32 64, 64
          %190 = vsyncadd [#allocation7], %s189
          %s192 = sshll.u32 [#allocation8], 4
          %s193 = int_to_ptr.vmem [resolvable:$true] %s192
          %195 = dma.hbm_to_vmem [thread:$0]  %s2, 64, %s193, [#allocation7]
        $region20: #{tpu_custom_call.1} parent=11 // pred_fallthru
          _
        // Predicated region
        $region21: #{tpu_custom_call.1} parent=11 // pred_check
          %p196 = pneg %p110
        $region22: #{tpu_custom_call.1} parent=11 // pred_check_branch
          %198 = sbr.rel (%p196) target = $region24
        $region23: #{tpu_custom_call.1} parent=11 // pred_region
          %s200 = ssub.s32 32, 32
          %201 = vsyncadd [#allocation10], %s200
          %s203 = sshll.u32 [#allocation9], 4
          %s204 = int_to_ptr.vmem [resolvable:$true] %s203
          %206 = dma.hbm_to_vmem [thread:$0]  %s3, 32, %s204, [#allocation10]
        $region24: #{tpu_custom_call.1} parent=11 // pred_fallthru
          _
        // Predicated region
        $region25: #{tpu_custom_call.1} parent=11 // pred_check
          %p207 = pneg %p131
        $region26: #{tpu_custom_call.1} parent=11 // pred_check_branch
          %209 = sbr.rel (%p207) target = $region28
        $region27: #{tpu_custom_call.1} parent=11 // pred_region
          _
        $region28: #{tpu_custom_call.1} parent=11 // pred_fallthru
          _
      $region12: #{tpu_custom_call.1} parent=5 // pred_fallthru
        _
      %p210 = scmp.lt.s32.totalorder %s21, 4
      // Predicated region
      $region29: #{tpu_custom_call.1} parent=5 // pred_check
        %p211 = pneg %p210
      $region30: #{tpu_custom_call.1} parent=5 // pred_check_branch
        %213 = sbr.rel (%p211) target = $region32
      $region31: #{tpu_custom_call.1} parent=5 // pred_region
        // Predicated region
        $region33: #{tpu_custom_call.1} parent=31 // pred_check
          %p214 = pneg %p41
        $region34: #{tpu_custom_call.1} parent=31 // pred_check_branch
          %216 = sbr.rel (%p214) target = $region36
        $region35: #{tpu_custom_call.1} parent=31 // pred_region
          %s217 = sand.u32 %s31, 1
          %s218 = scalar_lea.sflag [#allocation4], %s217
          %s219 = sand.u32 %s31, 1
          %s220 = smul.addr %s219, 1024
          %s221 = scalar_lea.vmem [#allocation3], %s220
          %s222 = smul.u32 32, %s21
          %s224 = ssub.s32 16384, 16384
          %225 = vsyncadd %s218, %s224
          %s226 = smul.addr %s222, 8
          %s227 = smul.addr %s226, 64
          %s228 = scalar_lea.hbm %s0, %s227
          %s229 = sshll.u32 %s221, 4
          %s230 = int_to_ptr.vmem [resolvable:$true] %s229
          %235 = dma.hbm_to_vmem [thread:$0]  %s228, 16384, %s230, %s218, 512, 512, 32
        $region36: #{tpu_custom_call.1} parent=31 // pred_fallthru
          _
      $region32: #{tpu_custom_call.1} parent=5 // pred_fallthru
        _
      %p236 = scmp.le.s32.totalorder 1, %s21
      %p237 = scmp.lt.s32.totalorder %s21, 5
      %p238 = pnand %p236, %p237
      %p239 = pneg %p238
      // Predicated region
      $region37: #{tpu_custom_call.1} parent=5 // pred_check
        _
      $region38: #{tpu_custom_call.1} parent=5 // pred_check_branch
        %241 = sbr.rel (%p238) target = $region40
      $region39: #{tpu_custom_call.1} parent=5 // pred_region
        %s242 = ssub.s32 %s21, 1
        %s243 = sand.u32 %s34, 1
        %s244 = scalar_lea.sflag [#allocation4], %s243
        %s245 = sand.u32 %s34, 1
        %s246 = smul.addr %s245, 1024
        %s247 = scalar_lea.vmem [#allocation3], %s246
        // Predicated region
        $region41: #{tpu_custom_call.1} parent=39 // pred_check
          %p248 = pneg %p47
        $region42: #{tpu_custom_call.1} parent=39 // pred_check_branch
          %250 = sbr.rel (%p248) target = $region44
        $region43: #{tpu_custom_call.1} parent=39 // pred_region
          %251 = dma.done %s244, 16384
        $region44: #{tpu_custom_call.1} parent=39 // pred_fallthru
          _
        // Predicated region
        $region45: #{tpu_custom_call.1} parent=39 // pred_check
          %p252 = pneg %p68
        $region46: #{tpu_custom_call.1} parent=39 // pred_check_branch
          %254 = sbr.rel (%p252) target = $region48
        $region47: #{tpu_custom_call.1} parent=39 // pred_region
          %255 = dma.done [#allocation7], 32768
        $region48: #{tpu_custom_call.1} parent=39 // pred_fallthru
          _
        // Predicated region
        $region49: #{tpu_custom_call.1} parent=39 // pred_check
          %p256 = pneg %p89
        $region50: #{tpu_custom_call.1} parent=39 // pred_check_branch
          %258 = sbr.rel (%p256) target = $region52
        $region51: #{tpu_custom_call.1} parent=39 // pred_region
          %259 = dma.done [#allocation7], 64
        $region52: #{tpu_custom_call.1} parent=39 // pred_fallthru
          _
        // Predicated region
        $region53: #{tpu_custom_call.1} parent=39 // pred_check
          %p260 = pneg %p110
        $region54: #{tpu_custom_call.1} parent=39 // pred_check_branch
          %262 = sbr.rel (%p260) target = $region56
        $region55: #{tpu_custom_call.1} parent=39 // pred_region
          %263 = dma.done [#allocation10], 32
        $region56: #{tpu_custom_call.1} parent=39 // pred_fallthru
          _
        %s264 = sand.u32 %s34, 1
        %s265 = scalar_lea.sflag [#allocation4], %s264
        %s266 = sand.u32 %s34, 1
        %s267 = smul.addr %s266, 1024
        %s268 = scalar_lea.vmem [#allocation3], %s267
        %p269 = pneg %p47
        %p270 = pneg %p44
        %p271 = pneg %p68
        %p272 = pneg %p65
        %p273 = pneg %p89
        %p274 = pneg %p86
        %p275 = pneg %p110
        %p276 = pneg %p107
        %p277 = pneg %p131
        %p278 = pneg %p128
        %p279 = pneg %p157
        %p280 = pneg %p154
        %s281 = sand.u32 %s144, 1
        %s282 = scalar_lea.sflag [#allocation5], %s281
        %s283 = sand.u32 %s144, 1
        %s284 = smul.addr %s283, 2
        %s285 = scalar_lea.vmem [#allocation11], %s284
        %s286 = smul.u32 32, %s26
        %s287 = smul.u32 2, %s26
        %v288 = vld [vmem:[%s247] sm:$0xff]
        %v289 = vld [vmem:[%s247 + $0x8] sm:$0xff]
        %v290 = vld [vmem:[%s247 + $0x10] sm:$0xff]
        %v291 = vld [vmem:[%s247 + $0x18] sm:$0xff]
        %v292 = vld [vmem:[%s247 + $0x20] sm:$0xff]
        %v293 = vld [vmem:[%s247 + $0x28] sm:$0xff]
        %v294 = vld [vmem:[%s247 + $0x30] sm:$0xff]
        %v295 = vld [vmem:[%s247 + $0x38] sm:$0xff]
        %v296 = vld [vmem:[%s247 + $0x40] sm:$0xff]
        %v297 = vld [vmem:[%s247 + $0x48] sm:$0xff]
        %v298 = vld [vmem:[%s247 + $0x50] sm:$0xff]
        %v299 = vld [vmem:[%s247 + $0x58] sm:$0xff]
        %v300 = vld [vmem:[%s247 + $0x60] sm:$0xff]
        %v301 = vld [vmem:[%s247 + $0x68] sm:$0xff]
        %v302 = vld [vmem:[%s247 + $0x70] sm:$0xff]
        %v303 = vld [vmem:[%s247 + $0x78] sm:$0xff]
        %v304 = vld [vmem:[%s247 + $0x80] sm:$0xff]
        %v305 = vld [vmem:[%s247 + $0x88] sm:$0xff]
        %v306 = vld [vmem:[%s247 + $0x90] sm:$0xff]
        %v307 = vld [vmem:[%s247 + $0x98] sm:$0xff]
        %v308 = vld [vmem:[%s247 + $0xa0] sm:$0xff]
        %v309 = vld [vmem:[%s247 + $0xa8] sm:$0xff]
        %v310 = vld [vmem:[%s247 + $0xb0] sm:$0xff]
        %v311 = vld [vmem:[%s247 + $0xb8] sm:$0xff]
        %v312 = vld [vmem:[%s247 + $0xc0] sm:$0xff]
        %v313 = vld [vmem:[%s247 + $0xc8] sm:$0xff]
        %v314 = vld [vmem:[%s247 + $0xd0] sm:$0xff]
        %v315 = vld [vmem:[%s247 + $0xd8] sm:$0xff]
        %v316 = vld [vmem:[%s247 + $0xe0] sm:$0xff]
        %v317 = vld [vmem:[%s247 + $0xe8] sm:$0xff]
        %v318 = vld [vmem:[%s247 + $0xf0] sm:$0xff]
        %v319 = vld [vmem:[%s247 + $0xf8] sm:$0xff]
        %v320 = vld [vmem:[%s247 + $0x100] sm:$0xff]
        %v321 = vld [vmem:[%s247 + $0x108] sm:$0xff]
        %v322 = vld [vmem:[%s247 + $0x110] sm:$0xff]
        %v323 = vld [vmem:[%s247 + $0x118] sm:$0xff]
        %v324 = vld [vmem:[%s247 + $0x120] sm:$0xff]
        %v325 = vld [vmem:[%s247 + $0x128] sm:$0xff]
        %v326 = vld [vmem:[%s247 + $0x130] sm:$0xff]
        %v327 = vld [vmem:[%s247 + $0x138] sm:$0xff]
        %v328 = vld [vmem:[%s247 + $0x140] sm:$0xff]
        %v329 = vld [vmem:[%s247 + $0x148] sm:$0xff]
        %v330 = vld [vmem:[%s247 + $0x150] sm:$0xff]
        %v331 = vld [vmem:[%s247 + $0x158] sm:$0xff]
        %v332 = vld [vmem:[%s247 + $0x160] sm:$0xff]
        %v333 = vld [vmem:[%s247 + $0x168] sm:$0xff]
        %v334 = vld [vmem:[%s247 + $0x170] sm:$0xff]
        %v335 = vld [vmem:[%s247 + $0x178] sm:$0xff]
        %v336 = vld [vmem:[%s247 + $0x180] sm:$0xff]
        %v337 = vld [vmem:[%s247 + $0x188] sm:$0xff]
        %v338 = vld [vmem:[%s247 + $0x190] sm:$0xff]
        %v339 = vld [vmem:[%s247 + $0x198] sm:$0xff]
        %v340 = vld [vmem:[%s247 + $0x1a0] sm:$0xff]
        %v341 = vld [vmem:[%s247 + $0x1a8] sm:$0xff]
        %v342 = vld [vmem:[%s247 + $0x1b0] sm:$0xff]
        %v343 = vld [vmem:[%s247 + $0x1b8] sm:$0xff]
        %v344 = vld [vmem:[%s247 + $0x1c0] sm:$0xff]
        %v345 = vld [vmem:[%s247 + $0x1c8] sm:$0xff]
        %v346 = vld [vmem:[%s247 + $0x1d0] sm:$0xff]
        %v347 = vld [vmem:[%s247 + $0x1d8] sm:$0xff]
        %v348 = vld [vmem:[%s247 + $0x1e0] sm:$0xff]
        %v349 = vld [vmem:[%s247 + $0x1e8] sm:$0xff]
        %v350 = vld [vmem:[%s247 + $0x1f0] sm:$0xff]
        %v351 = vld [vmem:[%s247 + $0x1f8] sm:$0xff]
        %v352 = vld [vmem:[%s247 + $0x200] sm:$0xff]
        %v353 = vld [vmem:[%s247 + $0x208] sm:$0xff]
        %v354 = vld [vmem:[%s247 + $0x210] sm:$0xff]
        %v355 = vld [vmem:[%s247 + $0x218] sm:$0xff]
        %v356 = vld [vmem:[%s247 + $0x220] sm:$0xff]
        %v357 = vld [vmem:[%s247 + $0x228] sm:$0xff]
        %v358 = vld [vmem:[%s247 + $0x230] sm:$0xff]
        %v359 = vld [vmem:[%s247 + $0x238] sm:$0xff]
        %v360 = vld [vmem:[%s247 + $0x240] sm:$0xff]
        %v361 = vld [vmem:[%s247 + $0x248] sm:$0xff]
        %v362 = vld [vmem:[%s247 + $0x250] sm:$0xff]
        %v363 = vld [vmem:[%s247 + $0x258] sm:$0xff]
        %v364 = vld [vmem:[%s247 + $0x260] sm:$0xff]
        %v365 = vld [vmem:[%s247 + $0x268] sm:$0xff]
        %v366 = vld [vmem:[%s247 + $0x270] sm:$0xff]
        %v367 = vld [vmem:[%s247 + $0x278] sm:$0xff]
        %v368 = vld [vmem:[%s247 + $0x280] sm:$0xff]
        %v369 = vld [vmem:[%s247 + $0x288] sm:$0xff]
        %v370 = vld [vmem:[%s247 + $0x290] sm:$0xff]
        %v371 = vld [vmem:[%s247 + $0x298] sm:$0xff]
        %v372 = vld [vmem:[%s247 + $0x2a0] sm:$0xff]
        %v373 = vld [vmem:[%s247 + $0x2a8] sm:$0xff]
        %v374 = vld [vmem:[%s247 + $0x2b0] sm:$0xff]
        %v375 = vld [vmem:[%s247 + $0x2b8] sm:$0xff]
        %v376 = vld [vmem:[%s247 + $0x2c0] sm:$0xff]
        %v377 = vld [vmem:[%s247 + $0x2c8] sm:$0xff]
        %v378 = vld [vmem:[%s247 + $0x2d0] sm:$0xff]
        %v379 = vld [vmem:[%s247 + $0x2d8] sm:$0xff]
        %v380 = vld [vmem:[%s247 + $0x2e0] sm:$0xff]
        %v381 = vld [vmem:[%s247 + $0x2e8] sm:$0xff]
        %v382 = vld [vmem:[%s247 + $0x2f0] sm:$0xff]
        %v383 = vld [vmem:[%s247 + $0x2f8] sm:$0xff]
        %v384 = vld [vmem:[%s247 + $0x300] sm:$0xff]
        %v385 = vld [vmem:[%s247 + $0x308] sm:$0xff]
        %v386 = vld [vmem:[%s247 + $0x310] sm:$0xff]
        %v387 = vld [vmem:[%s247 + $0x318] sm:$0xff]
        %v388 = vld [vmem:[%s247 + $0x320] sm:$0xff]
        %v389 = vld [vmem:[%s247 + $0x328] sm:$0xff]
        %v390 = vld [vmem:[%s247 + $0x330] sm:$0xff]
        %v391 = vld [vmem:[%s247 + $0x338] sm:$0xff]
        %v392 = vld [vmem:[%s247 + $0x340] sm:$0xff]
        %v393 = vld [vmem:[%s247 + $0x348] sm:$0xff]
        %v394 = vld [vmem:[%s247 + $0x350] sm:$0xff]
        %v395 = vld [vmem:[%s247 + $0x358] sm:$0xff]
        %v396 = vld [vmem:[%s247 + $0x360] sm:$0xff]
        %v397 = vld [vmem:[%s247 + $0x368] sm:$0xff]
        %v398 = vld [vmem:[%s247 + $0x370] sm:$0xff]
        %v399 = vld [vmem:[%s247 + $0x378] sm:$0xff]
        %v400 = vld [vmem:[%s247 + $0x380] sm:$0xff]
        %v401 = vld [vmem:[%s247 + $0x388] sm:$0xff]
        %v402 = vld [vmem:[%s247 + $0x390] sm:$0xff]
        %v403 = vld [vmem:[%s247 + $0x398] sm:$0xff]
        %v404 = vld [vmem:[%s247 + $0x3a0] sm:$0xff]
        %v405 = vld [vmem:[%s247 + $0x3a8] sm:$0xff]
        %v406 = vld [vmem:[%s247 + $0x3b0] sm:$0xff]
        %v407 = vld [vmem:[%s247 + $0x3b8] sm:$0xff]
        %v408 = vld [vmem:[%s247 + $0x3c0] sm:$0xff]
        %v409 = vld [vmem:[%s247 + $0x3c8] sm:$0xff]
        %v410 = vld [vmem:[%s247 + $0x3d0] sm:$0xff]
        %v411 = vld [vmem:[%s247 + $0x3d8] sm:$0xff]
        %v412 = vld [vmem:[%s247 + $0x3e0] sm:$0xff]
        %v413 = vld [vmem:[%s247 + $0x3e8] sm:$0xff]
        %v414 = vld [vmem:[%s247 + $0x3f0] sm:$0xff]
        %v415 = vld [vmem:[%s247 + $0x3f8] sm:$0xff]
        %v416 = vld [vmem:[#allocation6] sm:$0xff]
        %v417 = vld [vmem:[#allocation6 + $0x8] sm:$0xff]
        %v418 = vld [vmem:[#allocation6 + $0x10] sm:$0xff]
        %v419 = vld [vmem:[#allocation6 + $0x18] sm:$0xff]
        %v420 = vld [vmem:[#allocation6 + $0x20] sm:$0xff]
        %v421 = vld [vmem:[#allocation6 + $0x28] sm:$0xff]
        %v422 = vld [vmem:[#allocation6 + $0x30] sm:$0xff]
        %v423 = vld [vmem:[#allocation6 + $0x38] sm:$0xff]
        %v424 = vld [vmem:[#allocation6 + $0x40] sm:$0xff]
        %v425 = vld [vmem:[#allocation6 + $0x48] sm:$0xff]
        %v426 = vld [vmem:[#allocation6 + $0x50] sm:$0xff]
        %v427 = vld [vmem:[#allocation6 + $0x58] sm:$0xff]
        %v428 = vld [vmem:[#allocation6 + $0x60] sm:$0xff]
        %v429 = vld [vmem:[#allocation6 + $0x68] sm:$0xff]
        %v430 = vld [vmem:[#allocation6 + $0x70] sm:$0xff]
        %v431 = vld [vmem:[#allocation6 + $0x78] sm:$0xff]
        %v432 = vld [vmem:[#allocation6 + $0x80] sm:$0xff]
        %v433 = vld [vmem:[#allocation6 + $0x88] sm:$0xff]
        %v434 = vld [vmem:[#allocation6 + $0x90] sm:$0xff]
        %v435 = vld [vmem:[#allocation6 + $0x98] sm:$0xff]
        %v436 = vld [vmem:[#allocation6 + $0xa0] sm:$0xff]
        %v437 = vld [vmem:[#allocation6 + $0xa8] sm:$0xff]
        %v438 = vld [vmem:[#allocation6 + $0xb0] sm:$0xff]
        %v439 = vld [vmem:[#allocation6 + $0xb8] sm:$0xff]
        %v440 = vld [vmem:[#allocation6 + $0xc0] sm:$0xff]
        %v441 = vld [vmem:[#allocation6 + $0xc8] sm:$0xff]
        %v442 = vld [vmem:[#allocation6 + $0xd0] sm:$0xff]
        %v443 = vld [vmem:[#allocation6 + $0xd8] sm:$0xff]
        %v444 = vld [vmem:[#allocation6 + $0xe0] sm:$0xff]
        %v445 = vld [vmem:[#allocation6 + $0xe8] sm:$0xff]
        %v446 = vld [vmem:[#allocation6 + $0xf0] sm:$0xff]
        %v447 = vld [vmem:[#allocation6 + $0xf8] sm:$0xff]
        %v448 = vld [vmem:[#allocation6 + $0x100] sm:$0xff]
        %v449 = vld [vmem:[#allocation6 + $0x108] sm:$0xff]
        %v450 = vld [vmem:[#allocation6 + $0x110] sm:$0xff]
        %v451 = vld [vmem:[#allocation6 + $0x118] sm:$0xff]
        %v452 = vld [vmem:[#allocation6 + $0x120] sm:$0xff]
        %v453 = vld [vmem:[#allocation6 + $0x128] sm:$0xff]
        %v454 = vld [vmem:[#allocation6 + $0x130] sm:$0xff]
        %v455 = vld [vmem:[#allocation6 + $0x138] sm:$0xff]
        %v456 = vld [vmem:[#allocation6 + $0x140] sm:$0xff]
        %v457 = vld [vmem:[#allocation6 + $0x148] sm:$0xff]
        %v458 = vld [vmem:[#allocation6 + $0x150] sm:$0xff]
        %v459 = vld [vmem:[#allocation6 + $0x158] sm:$0xff]
        %v460 = vld [vmem:[#allocation6 + $0x160] sm:$0xff]
        %v461 = vld [vmem:[#allocation6 + $0x168] sm:$0xff]
        %v462 = vld [vmem:[#allocation6 + $0x170] sm:$0xff]
        %v463 = vld [vmem:[#allocation6 + $0x178] sm:$0xff]
        %v464 = vld [vmem:[#allocation6 + $0x180] sm:$0xff]
        %v465 = vld [vmem:[#allocation6 + $0x188] sm:$0xff]
        %v466 = vld [vmem:[#allocation6 + $0x190] sm:$0xff]
        %v467 = vld [vmem:[#allocation6 + $0x198] sm:$0xff]
        %v468 = vld [vmem:[#allocation6 + $0x1a0] sm:$0xff]
        %v469 = vld [vmem:[#allocation6 + $0x1a8] sm:$0xff]
        %v470 = vld [vmem:[#allocation6 + $0x1b0] sm:$0xff]
        %v471 = vld [vmem:[#allocation6 + $0x1b8] sm:$0xff]
        %v472 = vld [vmem:[#allocation6 + $0x1c0] sm:$0xff]
        %v473 = vld [vmem:[#allocation6 + $0x1c8] sm:$0xff]
        %v474 = vld [vmem:[#allocation6 + $0x1d0] sm:$0xff]
        %v475 = vld [vmem:[#allocation6 + $0x1d8] sm:$0xff]
        %v476 = vld [vmem:[#allocation6 + $0x1e0] sm:$0xff]
        %v477 = vld [vmem:[#allocation6 + $0x1e8] sm:$0xff]
        %v478 = vld [vmem:[#allocation6 + $0x1f0] sm:$0xff]
        %v479 = vld [vmem:[#allocation6 + $0x1f8] sm:$0xff]
        %v480 = vld [vmem:[#allocation6 + $0x200] sm:$0xff]
        %v481 = vld [vmem:[#allocation6 + $0x208] sm:$0xff]
        %v482 = vld [vmem:[#allocation6 + $0x210] sm:$0xff]
        %v483 = vld [vmem:[#allocation6 + $0x218] sm:$0xff]
        %v484 = vld [vmem:[#allocation6 + $0x220] sm:$0xff]
        %v485 = vld [vmem:[#allocation6 + $0x228] sm:$0xff]
        %v486 = vld [vmem:[#allocation6 + $0x230] sm:$0xff]
        %v487 = vld [vmem:[#allocation6 + $0x238] sm:$0xff]
        %v488 = vld [vmem:[#allocation6 + $0x240] sm:$0xff]
        %v489 = vld [vmem:[#allocation6 + $0x248] sm:$0xff]
        %v490 = vld [vmem:[#allocation6 + $0x250] sm:$0xff]
        %v491 = vld [vmem:[#allocation6 + $0x258] sm:$0xff]
        %v492 = vld [vmem:[#allocation6 + $0x260] sm:$0xff]
        %v493 = vld [vmem:[#allocation6 + $0x268] sm:$0xff]
        %v494 = vld [vmem:[#allocation6 + $0x270] sm:$0xff]
        %v495 = vld [vmem:[#allocation6 + $0x278] sm:$0xff]
        %v496 = vld [vmem:[#allocation6 + $0x280] sm:$0xff]
        %v497 = vld [vmem:[#allocation6 + $0x288] sm:$0xff]
        %v498 = vld [vmem:[#allocation6 + $0x290] sm:$0xff]
        %v499 = vld [vmem:[#allocation6 + $0x298] sm:$0xff]
        %v500 = vld [vmem:[#allocation6 + $0x2a0] sm:$0xff]
        %v501 = vld [vmem:[#allocation6 + $0x2a8] sm:$0xff]
        %v502 = vld [vmem:[#allocation6 + $0x2b0] sm:$0xff]
        %v503 = vld [vmem:[#allocation6 + $0x2b8] sm:$0xff]
        %v504 = vld [vmem:[#allocation6 + $0x2c0] sm:$0xff]
        %v505 = vld [vmem:[#allocation6 + $0x2c8] sm:$0xff]
        %v506 = vld [vmem:[#allocation6 + $0x2d0] sm:$0xff]
        %v507 = vld [vmem:[#allocation6 + $0x2d8] sm:$0xff]
        %v508 = vld [vmem:[#allocation6 + $0x2e0] sm:$0xff]
        %v509 = vld [vmem:[#allocation6 + $0x2e8] sm:$0xff]
        %v510 = vld [vmem:[#allocation6 + $0x2f0] sm:$0xff]
        %v511 = vld [vmem:[#allocation6 + $0x2f8] sm:$0xff]
        %v512 = vld [vmem:[#allocation6 + $0x300] sm:$0xff]
        %v513 = vld [vmem:[#allocation6 + $0x308] sm:$0xff]
        %v514 = vld [vmem:[#allocation6 + $0x310] sm:$0xff]
        %v515 = vld [vmem:[#allocation6 + $0x318] sm:$0xff]
        %v516 = vld [vmem:[#allocation6 + $0x320] sm:$0xff]
        %v517 = vld [vmem:[#allocation6 + $0x328] sm:$0xff]
        %v518 = vld [vmem:[#allocation6 + $0x330] sm:$0xff]
        %v519 = vld [vmem:[#allocation6 + $0x338] sm:$0xff]
        %v520 = vld [vmem:[#allocation6 + $0x340] sm:$0xff]
        %v521 = vld [vmem:[#allocation6 + $0x348] sm:$0xff]
        %v522 = vld [vmem:[#allocation6 + $0x350] sm:$0xff]
        %v523 = vld [vmem:[#allocation6 + $0x358] sm:$0xff]
        %v524 = vld [vmem:[#allocation6 + $0x360] sm:$0xff]
        %v525 = vld [vmem:[#allocation6 + $0x368] sm:$0xff]
        %v526 = vld [vmem:[#allocation6 + $0x370] sm:$0xff]
        %v527 = vld [vmem:[#allocation6 + $0x378] sm:$0xff]
        %v528 = vld [vmem:[#allocation6 + $0x380] sm:$0xff]
        %v529 = vld [vmem:[#allocation6 + $0x388] sm:$0xff]
        %v530 = vld [vmem:[#allocation6 + $0x390] sm:$0xff]
        %v531 = vld [vmem:[#allocation6 + $0x398] sm:$0xff]
        %v532 = vld [vmem:[#allocation6 + $0x3a0] sm:$0xff]
        %v533 = vld [vmem:[#allocation6 + $0x3a8] sm:$0xff]
        %v534 = vld [vmem:[#allocation6 + $0x3b0] sm:$0xff]
        %v535 = vld [vmem:[#allocation6 + $0x3b8] sm:$0xff]
        %v536 = vld [vmem:[#allocation6 + $0x3c0] sm:$0xff]
        %v537 = vld [vmem:[#allocation6 + $0x3c8] sm:$0xff]
        %v538 = vld [vmem:[#allocation6 + $0x3d0] sm:$0xff]
        %v539 = vld [vmem:[#allocation6 + $0x3d8] sm:$0xff]
        %v540 = vld [vmem:[#allocation6 + $0x3e0] sm:$0xff]
        %v541 = vld [vmem:[#allocation6 + $0x3e8] sm:$0xff]
        %v542 = vld [vmem:[#allocation6 + $0x3f0] sm:$0xff]
        %v543 = vld [vmem:[#allocation6 + $0x3f8] sm:$0xff]
        %v544 = vld [vmem:[#allocation6 + $0x400] sm:$0xff]
        %v545 = vld [vmem:[#allocation6 + $0x408] sm:$0xff]
        %v546 = vld [vmem:[#allocation6 + $0x410] sm:$0xff]
        %v547 = vld [vmem:[#allocation6 + $0x418] sm:$0xff]
        %v548 = vld [vmem:[#allocation6 + $0x420] sm:$0xff]
        %v549 = vld [vmem:[#allocation6 + $0x428] sm:$0xff]
        %v550 = vld [vmem:[#allocation6 + $0x430] sm:$0xff]
        %v551 = vld [vmem:[#allocation6 + $0x438] sm:$0xff]
        %v552 = vld [vmem:[#allocation6 + $0x440] sm:$0xff]
        %v553 = vld [vmem:[#allocation6 + $0x448] sm:$0xff]
        %v554 = vld [vmem:[#allocation6 + $0x450] sm:$0xff]
        %v555 = vld [vmem:[#allocation6 + $0x458] sm:$0xff]
        %v556 = vld [vmem:[#allocation6 + $0x460] sm:$0xff]
        %v557 = vld [vmem:[#allocation6 + $0x468] sm:$0xff]
        %v558 = vld [vmem:[#allocation6 + $0x470] sm:$0xff]
        %v559 = vld [vmem:[#allocation6 + $0x478] sm:$0xff]
        %v560 = vld [vmem:[#allocation6 + $0x480] sm:$0xff]
        %v561 = vld [vmem:[#allocation6 + $0x488] sm:$0xff]
        %v562 = vld [vmem:[#allocation6 + $0x490] sm:$0xff]
        %v563 = vld [vmem:[#allocation6 + $0x498] sm:$0xff]
        %v564 = vld [vmem:[#allocation6 + $0x4a0] sm:$0xff]
        %v565 = vld [vmem:[#allocation6 + $0x4a8] sm:$0xff]
        %v566 = vld [vmem:[#allocation6 + $0x4b0] sm:$0xff]
        %v567 = vld [vmem:[#allocation6 + $0x4b8] sm:$0xff]
        %v568 = vld [vmem:[#allocation6 + $0x4c0] sm:$0xff]
        %v569 = vld [vmem:[#allocation6 + $0x4c8] sm:$0xff]
        %v570 = vld [vmem:[#allocation6 + $0x4d0] sm:$0xff]
        %v571 = vld [vmem:[#allocation6 + $0x4d8] sm:$0xff]
        %v572 = vld [vmem:[#allocation6 + $0x4e0] sm:$0xff]
        %v573 = vld [vmem:[#allocation6 + $0x4e8] sm:$0xff]
        %v574 = vld [vmem:[#allocation6 + $0x4f0] sm:$0xff]
        %v575 = vld [vmem:[#allocation6 + $0x4f8] sm:$0xff]
        %v576 = vld [vmem:[#allocation6 + $0x500] sm:$0xff]
        %v577 = vld [vmem:[#allocation6 + $0x508] sm:$0xff]
        %v578 = vld [vmem:[#allocation6 + $0x510] sm:$0xff]
        %v579 = vld [vmem:[#allocation6 + $0x518] sm:$0xff]
        %v580 = vld [vmem:[#allocation6 + $0x520] sm:$0xff]
        %v581 = vld [vmem:[#allocation6 + $0x528] sm:$0xff]
        %v582 = vld [vmem:[#allocation6 + $0x530] sm:$0xff]
        %v583 = vld [vmem:[#allocation6 + $0x538] sm:$0xff]
        %v584 = vld [vmem:[#allocation6 + $0x540] sm:$0xff]
        %v585 = vld [vmem:[#allocation6 + $0x548] sm:$0xff]
        %v586 = vld [vmem:[#allocation6 + $0x550] sm:$0xff]
        %v587 = vld [vmem:[#allocation6 + $0x558] sm:$0xff]
        %v588 = vld [vmem:[#allocation6 + $0x560] sm:$0xff]
        %v589 = vld [vmem:[#allocation6 + $0x568] sm:$0xff]
        %v590 = vld [vmem:[#allocation6 + $0x570] sm:$0xff]
        %v591 = vld [vmem:[#allocation6 + $0x578] sm:$0xff]
        %v592 = vld [vmem:[#allocation6 + $0x580] sm:$0xff]
        %v593 = vld [vmem:[#allocation6 + $0x588] sm:$0xff]
        %v594 = vld [vmem:[#allocation6 + $0x590] sm:$0xff]
        %v595 = vld [vmem:[#allocation6 + $0x598] sm:$0xff]
        %v596 = vld [vmem:[#allocation6 + $0x5a0] sm:$0xff]
        %v597 = vld [vmem:[#allocation6 + $0x5a8] sm:$0xff]
        %v598 = vld [vmem:[#allocation6 + $0x5b0] sm:$0xff]
        %v599 = vld [vmem:[#allocation6 + $0x5b8] sm:$0xff]
        %v600 = vld [vmem:[#allocation6 + $0x5c0] sm:$0xff]
        %v601 = vld [vmem:[#allocation6 + $0x5c8] sm:$0xff]
        %v602 = vld [vmem:[#allocation6 + $0x5d0] sm:$0xff]
        %v603 = vld [vmem:[#allocation6 + $0x5d8] sm:$0xff]
        %v604 = vld [vmem:[#allocation6 + $0x5e0] sm:$0xff]
        %v605 = vld [vmem:[#allocation6 + $0x5e8] sm:$0xff]
        %v606 = vld [vmem:[#allocation6 + $0x5f0] sm:$0xff]
        %v607 = vld [vmem:[#allocation6 + $0x5f8] sm:$0xff]
        %v608 = vld [vmem:[#allocation6 + $0x600] sm:$0xff]
        %v609 = vld [vmem:[#allocation6 + $0x608] sm:$0xff]
        %v610 = vld [vmem:[#allocation6 + $0x610] sm:$0xff]
        %v611 = vld [vmem:[#allocation6 + $0x618] sm:$0xff]
        %v612 = vld [vmem:[#allocation6 + $0x620] sm:$0xff]
        %v613 = vld [vmem:[#allocation6 + $0x628] sm:$0xff]
        %v614 = vld [vmem:[#allocation6 + $0x630] sm:$0xff]
        %v615 = vld [vmem:[#allocation6 + $0x638] sm:$0xff]
        %v616 = vld [vmem:[#allocation6 + $0x640] sm:$0xff]
        %v617 = vld [vmem:[#allocation6 + $0x648] sm:$0xff]
        %v618 = vld [vmem:[#allocation6 + $0x650] sm:$0xff]
        %v619 = vld [vmem:[#allocation6 + $0x658] sm:$0xff]
        %v620 = vld [vmem:[#allocation6 + $0x660] sm:$0xff]
        %v621 = vld [vmem:[#allocation6 + $0x668] sm:$0xff]
        %v622 = vld [vmem:[#allocation6 + $0x670] sm:$0xff]
        %v623 = vld [vmem:[#allocation6 + $0x678] sm:$0xff]
        %v624 = vld [vmem:[#allocation6 + $0x680] sm:$0xff]
        %v625 = vld [vmem:[#allocation6 + $0x688] sm:$0xff]
        %v626 = vld [vmem:[#allocation6 + $0x690] sm:$0xff]
        %v627 = vld [vmem:[#allocation6 + $0x698] sm:$0xff]
        %v628 = vld [vmem:[#allocation6 + $0x6a0] sm:$0xff]
        %v629 = vld [vmem:[#allocation6 + $0x6a8] sm:$0xff]
        %v630 = vld [vmem:[#allocation6 + $0x6b0] sm:$0xff]
        %v631 = vld [vmem:[#allocation6 + $0x6b8] sm:$0xff]
        %v632 = vld [vmem:[#allocation6 + $0x6c0] sm:$0xff]
        %v633 = vld [vmem:[#allocation6 + $0x6c8] sm:$0xff]
        %v634 = vld [vmem:[#allocation6 + $0x6d0] sm:$0xff]
        %v635 = vld [vmem:[#allocation6 + $0x6d8] sm:$0xff]
        %v636 = vld [vmem:[#allocation6 + $0x6e0] sm:$0xff]
        %v637 = vld [vmem:[#allocation6 + $0x6e8] sm:$0xff]
        %v638 = vld [vmem:[#allocation6 + $0x6f0] sm:$0xff]
        %v639 = vld [vmem:[#allocation6 + $0x6f8] sm:$0xff]
        %v640 = vld [vmem:[#allocation6 + $0x700] sm:$0xff]
        %v641 = vld [vmem:[#allocation6 + $0x708] sm:$0xff]
        %v642 = vld [vmem:[#allocation6 + $0x710] sm:$0xff]
        %v643 = vld [vmem:[#allocation6 + $0x718] sm:$0xff]
        %v644 = vld [vmem:[#allocation6 + $0x720] sm:$0xff]
        %v645 = vld [vmem:[#allocation6 + $0x728] sm:$0xff]
        %v646 = vld [vmem:[#allocation6 + $0x730] sm:$0xff]
        %v647 = vld [vmem:[#allocation6 + $0x738] sm:$0xff]
        %v648 = vld [vmem:[#allocation6 + $0x740] sm:$0xff]
        %v649 = vld [vmem:[#allocation6 + $0x748] sm:$0xff]
        %v650 = vld [vmem:[#allocation6 + $0x750] sm:$0xff]
        %v651 = vld [vmem:[#allocation6 + $0x758] sm:$0xff]
        %v652 = vld [vmem:[#allocation6 + $0x760] sm:$0xff]
        %v653 = vld [vmem:[#allocation6 + $0x768] sm:$0xff]
        %v654 = vld [vmem:[#allocation6 + $0x770] sm:$0xff]
        %v655 = vld [vmem:[#allocation6 + $0x778] sm:$0xff]
        %v656 = vld [vmem:[#allocation6 + $0x780] sm:$0xff]
        %v657 = vld [vmem:[#allocation6 + $0x788] sm:$0xff]
        %v658 = vld [vmem:[#allocation6 + $0x790] sm:$0xff]
        %v659 = vld [vmem:[#allocation6 + $0x798] sm:$0xff]
        %v660 = vld [vmem:[#allocation6 + $0x7a0] sm:$0xff]
        %v661 = vld [vmem:[#allocation6 + $0x7a8] sm:$0xff]
        %v662 = vld [vmem:[#allocation6 + $0x7b0] sm:$0xff]
        %v663 = vld [vmem:[#allocation6 + $0x7b8] sm:$0xff]
        %v664 = vld [vmem:[#allocation6 + $0x7c0] sm:$0xff]
        %v665 = vld [vmem:[#allocation6 + $0x7c8] sm:$0xff]
        %v666 = vld [vmem:[#allocation6 + $0x7d0] sm:$0xff]
        %v667 = vld [vmem:[#allocation6 + $0x7d8] sm:$0xff]
        %v668 = vld [vmem:[#allocation6 + $0x7e0] sm:$0xff]
        %v669 = vld [vmem:[#allocation6 + $0x7e8] sm:$0xff]
        %v670 = vld [vmem:[#allocation6 + $0x7f0] sm:$0xff]
        %v671 = vld [vmem:[#allocation6 + $0x7f8] sm:$0xff]
        %v672 = vld [vmem:[#allocation8] sm:$0xf]
        %v674 = vlaneseq
        %v675 = vshrl.u32 %v674, 7
        %v676 = vsub.s32 0, %v675
        %v677 = vrot.slane %v672, %v676
        %v678 = vlaneseq
        %v679 = vshrl.u32 %v678, 7
        %v680 = vsub.s32 1, %v679
        %v681 = vrot.slane %v672, %v680
        %v682 = vlaneseq
        %v683 = vshrl.u32 %v682, 7
        %v684 = vsub.s32 2, %v683
        %v685 = vrot.slane %v672, %v684
        %v686 = vlaneseq
        %v687 = vshrl.u32 %v686, 7
        %v688 = vsub.s32 3, %v687
        %v689 = vrot.slane %v672, %v688
        %v822 = vunpack.c.l.b16 %v288
        %v823 = vunpack.c.h.b16 %v288
        %v824 = vunpack.c.l.b16 %v289
        %v825 = vunpack.c.h.b16 %v289
        %v826 = vunpack.c.l.b16 %v290
        %v827 = vunpack.c.h.b16 %v290
        %v828 = vunpack.c.l.b16 %v291
        %v829 = vunpack.c.h.b16 %v291
        %v830 = vunpack.c.l.b16 %v292
        %v831 = vunpack.c.h.b16 %v292
        %v832 = vunpack.c.l.b16 %v293
        %v833 = vunpack.c.h.b16 %v293
        %v834 = vunpack.c.l.b16 %v294
        %v835 = vunpack.c.h.b16 %v294
        %v836 = vunpack.c.l.b16 %v295
        %v837 = vunpack.c.h.b16 %v295
        %v838 = vunpack.c.l.b16 %v296
        %v839 = vunpack.c.h.b16 %v296
        %v840 = vunpack.c.l.b16 %v297
        %v841 = vunpack.c.h.b16 %v297
        %v842 = vunpack.c.l.b16 %v298
        %v843 = vunpack.c.h.b16 %v298
        %v844 = vunpack.c.l.b16 %v299
        %v845 = vunpack.c.h.b16 %v299
        %v846 = vunpack.c.l.b16 %v300
        %v847 = vunpack.c.h.b16 %v300
        %v848 = vunpack.c.l.b16 %v301
        %v849 = vunpack.c.h.b16 %v301
        %v850 = vunpack.c.l.b16 %v302
        %v851 = vunpack.c.h.b16 %v302
        %v852 = vunpack.c.l.b16 %v303
        %v853 = vunpack.c.h.b16 %v303
        %v854 = vunpack.c.l.b16 %v304
        %v855 = vunpack.c.h.b16 %v304
        %v856 = vunpack.c.l.b16 %v305
        %v857 = vunpack.c.h.b16 %v305
        %v858 = vunpack.c.l.b16 %v306
        %v859 = vunpack.c.h.b16 %v306
        %v860 = vunpack.c.l.b16 %v307
        %v861 = vunpack.c.h.b16 %v307
        %v862 = vunpack.c.l.b16 %v308
        %v863 = vunpack.c.h.b16 %v308
        %v864 = vunpack.c.l.b16 %v309
        %v865 = vunpack.c.h.b16 %v309
        %v866 = vunpack.c.l.b16 %v310
        %v867 = vunpack.c.h.b16 %v310
        %v868 = vunpack.c.l.b16 %v311
        %v869 = vunpack.c.h.b16 %v311
        %v870 = vunpack.c.l.b16 %v312
        %v871 = vunpack.c.h.b16 %v312
        %v872 = vunpack.c.l.b16 %v313
        %v873 = vunpack.c.h.b16 %v313
        %v874 = vunpack.c.l.b16 %v314
        %v875 = vunpack.c.h.b16 %v314
        %v876 = vunpack.c.l.b16 %v315
        %v877 = vunpack.c.h.b16 %v315
        %v878 = vunpack.c.l.b16 %v316
        %v879 = vunpack.c.h.b16 %v316
        %v880 = vunpack.c.l.b16 %v317
        %v881 = vunpack.c.h.b16 %v317
        %v882 = vunpack.c.l.b16 %v318
        %v883 = vunpack.c.h.b16 %v318
        %v884 = vunpack.c.l.b16 %v319
        %v885 = vunpack.c.h.b16 %v319
        %v886 = vunpack.c.l.b16 %v320
        %v887 = vunpack.c.h.b16 %v320
        %v888 = vunpack.c.l.b16 %v321
        %v889 = vunpack.c.h.b16 %v321
        %v890 = vunpack.c.l.b16 %v322
        %v891 = vunpack.c.h.b16 %v322
        %v892 = vunpack.c.l.b16 %v323
        %v893 = vunpack.c.h.b16 %v323
        %v894 = vunpack.c.l.b16 %v324
        %v895 = vunpack.c.h.b16 %v324
        %v896 = vunpack.c.l.b16 %v325
        %v897 = vunpack.c.h.b16 %v325
        %v898 = vunpack.c.l.b16 %v326
        %v899 = vunpack.c.h.b16 %v326
        %v900 = vunpack.c.l.b16 %v327
        %v901 = vunpack.c.h.b16 %v327
        %v902 = vunpack.c.l.b16 %v328
        %v903 = vunpack.c.h.b16 %v328
        %v904 = vunpack.c.l.b16 %v329
        %v905 = vunpack.c.h.b16 %v329
        %v906 = vunpack.c.l.b16 %v330
        %v907 = vunpack.c.h.b16 %v330
        %v908 = vunpack.c.l.b16 %v331
        %v909 = vunpack.c.h.b16 %v331
        %v910 = vunpack.c.l.b16 %v332
        %v911 = vunpack.c.h.b16 %v332
        %v912 = vunpack.c.l.b16 %v333
        %v913 = vunpack.c.h.b16 %v333
        %v914 = vunpack.c.l.b16 %v334
        %v915 = vunpack.c.h.b16 %v334
        %v916 = vunpack.c.l.b16 %v335
        %v917 = vunpack.c.h.b16 %v335
        %v918 = vunpack.c.l.b16 %v336
        %v919 = vunpack.c.h.b16 %v336
        %v920 = vunpack.c.l.b16 %v337
        %v921 = vunpack.c.h.b16 %v337
        %v922 = vunpack.c.l.b16 %v338
        %v923 = vunpack.c.h.b16 %v338
        %v924 = vunpack.c.l.b16 %v339
        %v925 = vunpack.c.h.b16 %v339
        %v926 = vunpack.c.l.b16 %v340
        %v927 = vunpack.c.h.b16 %v340
        %v928 = vunpack.c.l.b16 %v341
        %v929 = vunpack.c.h.b16 %v341
        %v930 = vunpack.c.l.b16 %v342
        %v931 = vunpack.c.h.b16 %v342
        %v932 = vunpack.c.l.b16 %v343
        %v933 = vunpack.c.h.b16 %v343
        %v934 = vunpack.c.l.b16 %v344
        %v935 = vunpack.c.h.b16 %v344
        %v936 = vunpack.c.l.b16 %v345
        %v937 = vunpack.c.h.b16 %v345
        %v938 = vunpack.c.l.b16 %v346
        %v939 = vunpack.c.h.b16 %v346
        %v940 = vunpack.c.l.b16 %v347
        %v941 = vunpack.c.h.b16 %v347
        %v942 = vunpack.c.l.b16 %v348
        %v943 = vunpack.c.h.b16 %v348
        %v944 = vunpack.c.l.b16 %v349
        %v945 = vunpack.c.h.b16 %v349
        %v946 = vunpack.c.l.b16 %v350
        %v947 = vunpack.c.h.b16 %v350
        %v948 = vunpack.c.l.b16 %v351
        %v949 = vunpack.c.h.b16 %v351
        %v950 = vunpack.c.l.b16 %v352
        %v951 = vunpack.c.h.b16 %v352
        %v952 = vunpack.c.l.b16 %v353
        %v953 = vunpack.c.h.b16 %v353
        %v954 = vunpack.c.l.b16 %v354
        %v955 = vunpack.c.h.b16 %v354
        %v956 = vunpack.c.l.b16 %v355
        %v957 = vunpack.c.h.b16 %v355
        %v958 = vunpack.c.l.b16 %v356
        %v959 = vunpack.c.h.b16 %v356
        %v960 = vunpack.c.l.b16 %v357
        %v961 = vunpack.c.h.b16 %v357
        %v962 = vunpack.c.l.b16 %v358
        %v963 = vunpack.c.h.b16 %v358
        %v964 = vunpack.c.l.b16 %v359
        %v965 = vunpack.c.h.b16 %v359
        %v966 = vunpack.c.l.b16 %v360
        %v967 = vunpack.c.h.b16 %v360
        %v968 = vunpack.c.l.b16 %v361
        %v969 = vunpack.c.h.b16 %v361
        %v970 = vunpack.c.l.b16 %v362
        %v971 = vunpack.c.h.b16 %v362
        %v972 = vunpack.c.l.b16 %v363
        %v973 = vunpack.c.h.b16 %v363
        %v974 = vunpack.c.l.b16 %v364
        %v975 = vunpack.c.h.b16 %v364
        %v976 = vunpack.c.l.b16 %v365
        %v977 = vunpack.c.h.b16 %v365
        %v978 = vunpack.c.l.b16 %v366
        %v979 = vunpack.c.h.b16 %v366
        %v980 = vunpack.c.l.b16 %v367
        %v981 = vunpack.c.h.b16 %v367
        %v982 = vunpack.c.l.b16 %v368
        %v983 = vunpack.c.h.b16 %v368
        %v984 = vunpack.c.l.b16 %v369
        %v985 = vunpack.c.h.b16 %v369
        %v986 = vunpack.c.l.b16 %v370
        %v987 = vunpack.c.h.b16 %v370
        %v988 = vunpack.c.l.b16 %v371
        %v989 = vunpack.c.h.b16 %v371
        %v990 = vunpack.c.l.b16 %v372
        %v991 = vunpack.c.h.b16 %v372
        %v992 = vunpack.c.l.b16 %v373
        %v993 = vunpack.c.h.b16 %v373
        %v994 = vunpack.c.l.b16 %v374
        %v995 = vunpack.c.h.b16 %v374
        %v996 = vunpack.c.l.b16 %v375
        %v997 = vunpack.c.h.b16 %v375
        %v998 = vunpack.c.l.b16 %v376
        %v999 = vunpack.c.h.b16 %v376
        %v1000 = vunpack.c.l.b16 %v377
        %v1001 = vunpack.c.h.b16 %v377
        %v1002 = vunpack.c.l.b16 %v378
        %v1003 = vunpack.c.h.b16 %v378
        %v1004 = vunpack.c.l.b16 %v379
        %v1005 = vunpack.c.h.b16 %v379
        %v1006 = vunpack.c.l.b16 %v380
        %v1007 = vunpack.c.h.b16 %v380
        %v1008 = vunpack.c.l.b16 %v381
        %v1009 = vunpack.c.h.b16 %v381
        %v1010 = vunpack.c.l.b16 %v382
        %v1011 = vunpack.c.h.b16 %v382
        %v1012 = vunpack.c.l.b16 %v383
        %v1013 = vunpack.c.h.b16 %v383
        %v1014 = vunpack.c.l.b16 %v384
        %v1015 = vunpack.c.h.b16 %v384
        %v1016 = vunpack.c.l.b16 %v385
        %v1017 = vunpack.c.h.b16 %v385
        %v1018 = vunpack.c.l.b16 %v386
        %v1019 = vunpack.c.h.b16 %v386
        %v1020 = vunpack.c.l.b16 %v387
        %v1021 = vunpack.c.h.b16 %v387
        %v1022 = vunpack.c.l.b16 %v388
        %v1023 = vunpack.c.h.b16 %v388
        %v1024 = vunpack.c.l.b16 %v389
        %v1025 = vunpack.c.h.b16 %v389
        %v1026 = vunpack.c.l.b16 %v390
        %v1027 = vunpack.c.h.b16 %v390
        %v1028 = vunpack.c.l.b16 %v391
        %v1029 = vunpack.c.h.b16 %v391
        %v1030 = vunpack.c.l.b16 %v392
        %v1031 = vunpack.c.h.b16 %v392
        %v1032 = vunpack.c.l.b16 %v393
        %v1033 = vunpack.c.h.b16 %v393
        %v1034 = vunpack.c.l.b16 %v394
        %v1035 = vunpack.c.h.b16 %v394
        %v1036 = vunpack.c.l.b16 %v395
        %v1037 = vunpack.c.h.b16 %v395
        %v1038 = vunpack.c.l.b16 %v396
        %v1039 = vunpack.c.h.b16 %v396
        %v1040 = vunpack.c.l.b16 %v397
        %v1041 = vunpack.c.h.b16 %v397
        %v1042 = vunpack.c.l.b16 %v398
        %v1043 = vunpack.c.h.b16 %v398
        %v1044 = vunpack.c.l.b16 %v399
        %v1045 = vunpack.c.h.b16 %v399
        %v1046 = vunpack.c.l.b16 %v400
        %v1047 = vunpack.c.h.b16 %v400
        %v1048 = vunpack.c.l.b16 %v401
        %v1049 = vunpack.c.h.b16 %v401
        %v1050 = vunpack.c.l.b16 %v402
        %v1051 = vunpack.c.h.b16 %v402
        %v1052 = vunpack.c.l.b16 %v403
        %v1053 = vunpack.c.h.b16 %v403
        %v1054 = vunpack.c.l.b16 %v404
        %v1055 = vunpack.c.h.b16 %v404
        %v1056 = vunpack.c.l.b16 %v405
        %v1057 = vunpack.c.h.b16 %v405
        %v1058 = vunpack.c.l.b16 %v406
        %v1059 = vunpack.c.h.b16 %v406
        %v1060 = vunpack.c.l.b16 %v407
        %v1061 = vunpack.c.h.b16 %v407
        %v1062 = vunpack.c.l.b16 %v408
        %v1063 = vunpack.c.h.b16 %v408
        %v1064 = vunpack.c.l.b16 %v409
        %v1065 = vunpack.c.h.b16 %v409
        %v1066 = vunpack.c.l.b16 %v410
        %v1067 = vunpack.c.h.b16 %v410
        %v1068 = vunpack.c.l.b16 %v411
        %v1069 = vunpack.c.h.b16 %v411
        %v1070 = vunpack.c.l.b16 %v412
        %v1071 = vunpack.c.h.b16 %v412
        %v1072 = vunpack.c.l.b16 %v413
        %v1073 = vunpack.c.h.b16 %v413
        %v1074 = vunpack.c.l.b16 %v414
        %v1075 = vunpack.c.h.b16 %v414
        %v1076 = vunpack.c.l.b16 %v415
        %v1077 = vunpack.c.h.b16 %v415
        %v1078 = vpack.c.b16 %v830, %v822
        %v1079 = vpack.c.b16 %v831, %v823
        %v1080 = vpack.c.b16 %v832, %v824
        %v1081 = vpack.c.b16 %v833, %v825
        %v1082 = vpack.c.b16 %v834, %v826
        %v1083 = vpack.c.b16 %v835, %v827
        %v1084 = vpack.c.b16 %v836, %v828
        %v1085 = vpack.c.b16 %v837, %v829
        %v1086 = vpack.c.b16 %v846, %v838
        %v1087 = vpack.c.b16 %v847, %v839
        %v1088 = vpack.c.b16 %v848, %v840
        %v1089 = vpack.c.b16 %v849, %v841
        %v1090 = vpack.c.b16 %v850, %v842
        %v1091 = vpack.c.b16 %v851, %v843
        %v1092 = vpack.c.b16 %v852, %v844
        %v1093 = vpack.c.b16 %v853, %v845
        %v1094 = vpack.c.b16 %v862, %v854
        %v1095 = vpack.c.b16 %v863, %v855
        %v1096 = vpack.c.b16 %v864, %v856
        %v1097 = vpack.c.b16 %v865, %v857
        %v1098 = vpack.c.b16 %v866, %v858
        %v1099 = vpack.c.b16 %v867, %v859
        %v1100 = vpack.c.b16 %v868, %v860
        %v1101 = vpack.c.b16 %v869, %v861
        %v1102 = vpack.c.b16 %v878, %v870
        %v1103 = vpack.c.b16 %v879, %v871
        %v1104 = vpack.c.b16 %v880, %v872
        %v1105 = vpack.c.b16 %v881, %v873
        %v1106 = vpack.c.b16 %v882, %v874
        %v1107 = vpack.c.b16 %v883, %v875
        %v1108 = vpack.c.b16 %v884, %v876
        %v1109 = vpack.c.b16 %v885, %v877
        %v1110 = vpack.c.b16 %v894, %v886
        %v1111 = vpack.c.b16 %v895, %v887
        %v1112 = vpack.c.b16 %v896, %v888
        %v1113 = vpack.c.b16 %v897, %v889
        %v1114 = vpack.c.b16 %v898, %v890
        %v1115 = vpack.c.b16 %v899, %v891
        %v1116 = vpack.c.b16 %v900, %v892
        %v1117 = vpack.c.b16 %v901, %v893
        %v1118 = vpack.c.b16 %v910, %v902
        %v1119 = vpack.c.b16 %v911, %v903
        %v1120 = vpack.c.b16 %v912, %v904
        %v1121 = vpack.c.b16 %v913, %v905
        %v1122 = vpack.c.b16 %v914, %v906
        %v1123 = vpack.c.b16 %v915, %v907
        %v1124 = vpack.c.b16 %v916, %v908
        %v1125 = vpack.c.b16 %v917, %v909
        %v1126 = vpack.c.b16 %v926, %v918
        %v1127 = vpack.c.b16 %v927, %v919
        %v1128 = vpack.c.b16 %v928, %v920
        %v1129 = vpack.c.b16 %v929, %v921
        %v1130 = vpack.c.b16 %v930, %v922
        %v1131 = vpack.c.b16 %v931, %v923
        %v1132 = vpack.c.b16 %v932, %v924
        %v1133 = vpack.c.b16 %v933, %v925
        %v1134 = vpack.c.b16 %v942, %v934
        %v1135 = vpack.c.b16 %v943, %v935
        %v1136 = vpack.c.b16 %v944, %v936
        %v1137 = vpack.c.b16 %v945, %v937
        %v1138 = vpack.c.b16 %v946, %v938
        %v1139 = vpack.c.b16 %v947, %v939
        %v1140 = vpack.c.b16 %v948, %v940
        %v1141 = vpack.c.b16 %v949, %v941
        %v1142 = vpack.c.b16 %v958, %v950
        %v1143 = vpack.c.b16 %v959, %v951
        %v1144 = vpack.c.b16 %v960, %v952
        %v1145 = vpack.c.b16 %v961, %v953
        %v1146 = vpack.c.b16 %v962, %v954
        %v1147 = vpack.c.b16 %v963, %v955
        %v1148 = vpack.c.b16 %v964, %v956
        %v1149 = vpack.c.b16 %v965, %v957
        %v1150 = vpack.c.b16 %v974, %v966
        %v1151 = vpack.c.b16 %v975, %v967
        %v1152 = vpack.c.b16 %v976, %v968
        %v1153 = vpack.c.b16 %v977, %v969
        %v1154 = vpack.c.b16 %v978, %v970
        %v1155 = vpack.c.b16 %v979, %v971
        %v1156 = vpack.c.b16 %v980, %v972
        %v1157 = vpack.c.b16 %v981, %v973
        %v1158 = vpack.c.b16 %v990, %v982
        %v1159 = vpack.c.b16 %v991, %v983
        %v1160 = vpack.c.b16 %v992, %v984
        %v1161 = vpack.c.b16 %v993, %v985
        %v1162 = vpack.c.b16 %v994, %v986
        %v1163 = vpack.c.b16 %v995, %v987
        %v1164 = vpack.c.b16 %v996, %v988
        %v1165 = vpack.c.b16 %v997, %v989
        %v1166 = vpack.c.b16 %v1006, %v998
        %v1167 = vpack.c.b16 %v1007, %v999
        %v1168 = vpack.c.b16 %v1008, %v1000
        %v1169 = vpack.c.b16 %v1009, %v1001
        %v1170 = vpack.c.b16 %v1010, %v1002
        %v1171 = vpack.c.b16 %v1011, %v1003
        %v1172 = vpack.c.b16 %v1012, %v1004
        %v1173 = vpack.c.b16 %v1013, %v1005
        %v1174 = vpack.c.b16 %v1022, %v1014
        %v1175 = vpack.c.b16 %v1023, %v1015
        %v1176 = vpack.c.b16 %v1024, %v1016
        %v1177 = vpack.c.b16 %v1025, %v1017
        %v1178 = vpack.c.b16 %v1026, %v1018
        %v1179 = vpack.c.b16 %v1027, %v1019
        %v1180 = vpack.c.b16 %v1028, %v1020
        %v1181 = vpack.c.b16 %v1029, %v1021
        %v1182 = vpack.c.b16 %v1038, %v1030
        %v1183 = vpack.c.b16 %v1039, %v1031
        %v1184 = vpack.c.b16 %v1040, %v1032
        %v1185 = vpack.c.b16 %v1041, %v1033
        %v1186 = vpack.c.b16 %v1042, %v1034
        %v1187 = vpack.c.b16 %v1043, %v1035
        %v1188 = vpack.c.b16 %v1044, %v1036
        %v1189 = vpack.c.b16 %v1045, %v1037
        %v1190 = vpack.c.b16 %v1054, %v1046
        %v1191 = vpack.c.b16 %v1055, %v1047
        %v1192 = vpack.c.b16 %v1056, %v1048
        %v1193 = vpack.c.b16 %v1057, %v1049
        %v1194 = vpack.c.b16 %v1058, %v1050
        %v1195 = vpack.c.b16 %v1059, %v1051
        %v1196 = vpack.c.b16 %v1060, %v1052
        %v1197 = vpack.c.b16 %v1061, %v1053
        %v1198 = vpack.c.b16 %v1070, %v1062
        %v1199 = vpack.c.b16 %v1071, %v1063
        %v1200 = vpack.c.b16 %v1072, %v1064
        %v1201 = vpack.c.b16 %v1073, %v1065
        %v1202 = vpack.c.b16 %v1074, %v1066
        %v1203 = vpack.c.b16 %v1075, %v1067
        %v1204 = vpack.c.b16 %v1076, %v1068
        %v1205 = vpack.c.b16 %v1077, %v1069
        %v1590 = vunpack.c.l.b16 %v416
        %v1591 = vunpack.c.h.b16 %v416
        %v1592 = vunpack.c.l.b16 %v417
        %v1593 = vunpack.c.h.b16 %v417
        %v1594 = vunpack.c.l.b16 %v418
        %v1595 = vunpack.c.h.b16 %v418
        %v1596 = vunpack.c.l.b16 %v419
        %v1597 = vunpack.c.h.b16 %v419
        %v1598 = vunpack.c.l.b16 %v420
        %v1599 = vunpack.c.h.b16 %v420
        %v1600 = vunpack.c.l.b16 %v421
        %v1601 = vunpack.c.h.b16 %v421
        %v1602 = vunpack.c.l.b16 %v422
        %v1603 = vunpack.c.h.b16 %v422
        %v1604 = vunpack.c.l.b16 %v423
        %v1605 = vunpack.c.h.b16 %v423
        %v1606 = vunpack.c.l.b16 %v424
        %v1607 = vunpack.c.h.b16 %v424
        %v1608 = vunpack.c.l.b16 %v425
        %v1609 = vunpack.c.h.b16 %v425
        %v1610 = vunpack.c.l.b16 %v426
        %v1611 = vunpack.c.h.b16 %v426
        %v1612 = vunpack.c.l.b16 %v427
        %v1613 = vunpack.c.h.b16 %v427
        %v1614 = vunpack.c.l.b16 %v428
        %v1615 = vunpack.c.h.b16 %v428
        %v1616 = vunpack.c.l.b16 %v429
        %v1617 = vunpack.c.h.b16 %v429
        %v1618 = vunpack.c.l.b16 %v430
        %v1619 = vunpack.c.h.b16 %v430
        %v1620 = vunpack.c.l.b16 %v431
        %v1621 = vunpack.c.h.b16 %v431
        %v1622 = vunpack.c.l.b16 %v432
        %v1623 = vunpack.c.h.b16 %v432
        %v1624 = vunpack.c.l.b16 %v433
        %v1625 = vunpack.c.h.b16 %v433
        %v1626 = vunpack.c.l.b16 %v434
        %v1627 = vunpack.c.h.b16 %v434
        %v1628 = vunpack.c.l.b16 %v435
        %v1629 = vunpack.c.h.b16 %v435
        %v1630 = vunpack.c.l.b16 %v436
        %v1631 = vunpack.c.h.b16 %v436
        %v1632 = vunpack.c.l.b16 %v437
        %v1633 = vunpack.c.h.b16 %v437
        %v1634 = vunpack.c.l.b16 %v438
        %v1635 = vunpack.c.h.b16 %v438
        %v1636 = vunpack.c.l.b16 %v439
        %v1637 = vunpack.c.h.b16 %v439
        %v1638 = vunpack.c.l.b16 %v440
        %v1639 = vunpack.c.h.b16 %v440
        %v1640 = vunpack.c.l.b16 %v441
        %v1641 = vunpack.c.h.b16 %v441
        %v1642 = vunpack.c.l.b16 %v442
        %v1643 = vunpack.c.h.b16 %v442
        %v1644 = vunpack.c.l.b16 %v443
        %v1645 = vunpack.c.h.b16 %v443
        %v1646 = vunpack.c.l.b16 %v444
        %v1647 = vunpack.c.h.b16 %v444
        %v1648 = vunpack.c.l.b16 %v445
        %v1649 = vunpack.c.h.b16 %v445
        %v1650 = vunpack.c.l.b16 %v446
        %v1651 = vunpack.c.h.b16 %v446
        %v1652 = vunpack.c.l.b16 %v447
        %v1653 = vunpack.c.h.b16 %v447
        %v1654 = vunpack.c.l.b16 %v448
        %v1655 = vunpack.c.h.b16 %v448
        %v1656 = vunpack.c.l.b16 %v449
        %v1657 = vunpack.c.h.b16 %v449
        %v1658 = vunpack.c.l.b16 %v450
        %v1659 = vunpack.c.h.b16 %v450
        %v1660 = vunpack.c.l.b16 %v451
        %v1661 = vunpack.c.h.b16 %v451
        %v1662 = vunpack.c.l.b16 %v452
        %v1663 = vunpack.c.h.b16 %v452
        %v1664 = vunpack.c.l.b16 %v453
        %v1665 = vunpack.c.h.b16 %v453
        %v1666 = vunpack.c.l.b16 %v454
        %v1667 = vunpack.c.h.b16 %v454
        %v1668 = vunpack.c.l.b16 %v455
        %v1669 = vunpack.c.h.b16 %v455
        %v1670 = vunpack.c.l.b16 %v456
        %v1671 = vunpack.c.h.b16 %v456
        %v1672 = vunpack.c.l.b16 %v457
        %v1673 = vunpack.c.h.b16 %v457
        %v1674 = vunpack.c.l.b16 %v458
        %v1675 = vunpack.c.h.b16 %v458
        %v1676 = vunpack.c.l.b16 %v459
        %v1677 = vunpack.c.h.b16 %v459
        %v1678 = vunpack.c.l.b16 %v460
        %v1679 = vunpack.c.h.b16 %v460
        %v1680 = vunpack.c.l.b16 %v461
        %v1681 = vunpack.c.h.b16 %v461
        %v1682 = vunpack.c.l.b16 %v462
        %v1683 = vunpack.c.h.b16 %v462
        %v1684 = vunpack.c.l.b16 %v463
        %v1685 = vunpack.c.h.b16 %v463
        %v1686 = vunpack.c.l.b16 %v464
        %v1687 = vunpack.c.h.b16 %v464
        %v1688 = vunpack.c.l.b16 %v465
        %v1689 = vunpack.c.h.b16 %v465
        %v1690 = vunpack.c.l.b16 %v466
        %v1691 = vunpack.c.h.b16 %v466
        %v1692 = vunpack.c.l.b16 %v467
        %v1693 = vunpack.c.h.b16 %v467
        %v1694 = vunpack.c.l.b16 %v468
        %v1695 = vunpack.c.h.b16 %v468
        %v1696 = vunpack.c.l.b16 %v469
        %v1697 = vunpack.c.h.b16 %v469
        %v1698 = vunpack.c.l.b16 %v470
        %v1699 = vunpack.c.h.b16 %v470
        %v1700 = vunpack.c.l.b16 %v471
        %v1701 = vunpack.c.h.b16 %v471
        %v1702 = vunpack.c.l.b16 %v472
        %v1703 = vunpack.c.h.b16 %v472
        %v1704 = vunpack.c.l.b16 %v473
        %v1705 = vunpack.c.h.b16 %v473
        %v1706 = vunpack.c.l.b16 %v474
        %v1707 = vunpack.c.h.b16 %v474
        %v1708 = vunpack.c.l.b16 %v475
        %v1709 = vunpack.c.h.b16 %v475
        %v1710 = vunpack.c.l.b16 %v476
        %v1711 = vunpack.c.h.b16 %v476
        %v1712 = vunpack.c.l.b16 %v477
        %v1713 = vunpack.c.h.b16 %v477
        %v1714 = vunpack.c.l.b16 %v478
        %v1715 = vunpack.c.h.b16 %v478
        %v1716 = vunpack.c.l.b16 %v479
        %v1717 = vunpack.c.h.b16 %v479
        %v1718 = vunpack.c.l.b16 %v480
        %v1719 = vunpack.c.h.b16 %v480
        %v1720 = vunpack.c.l.b16 %v481
        %v1721 = vunpack.c.h.b16 %v481
        %v1722 = vunpack.c.l.b16 %v482
        %v1723 = vunpack.c.h.b16 %v482
        %v1724 = vunpack.c.l.b16 %v483
        %v1725 = vunpack.c.h.b16 %v483
        %v1726 = vunpack.c.l.b16 %v484
        %v1727 = vunpack.c.h.b16 %v484
        %v1728 = vunpack.c.l.b16 %v485
        %v1729 = vunpack.c.h.b16 %v485
        %v1730 = vunpack.c.l.b16 %v486
        %v1731 = vunpack.c.h.b16 %v486
        %v1732 = vunpack.c.l.b16 %v487
        %v1733 = vunpack.c.h.b16 %v487
        %v1734 = vunpack.c.l.b16 %v488
        %v1735 = vunpack.c.h.b16 %v488
        %v1736 = vunpack.c.l.b16 %v489
        %v1737 = vunpack.c.h.b16 %v489
        %v1738 = vunpack.c.l.b16 %v490
        %v1739 = vunpack.c.h.b16 %v490
        %v1740 = vunpack.c.l.b16 %v491
        %v1741 = vunpack.c.h.b16 %v491
        %v1742 = vunpack.c.l.b16 %v492
        %v1743 = vunpack.c.h.b16 %v492
        %v1744 = vunpack.c.l.b16 %v493
        %v1745 = vunpack.c.h.b16 %v493
        %v1746 = vunpack.c.l.b16 %v494
        %v1747 = vunpack.c.h.b16 %v494
        %v1748 = vunpack.c.l.b16 %v495
        %v1749 = vunpack.c.h.b16 %v495
        %v1750 = vunpack.c.l.b16 %v496
        %v1751 = vunpack.c.h.b16 %v496
        %v1752 = vunpack.c.l.b16 %v497
        %v1753 = vunpack.c.h.b16 %v497
        %v1754 = vunpack.c.l.b16 %v498
        %v1755 = vunpack.c.h.b16 %v498
        %v1756 = vunpack.c.l.b16 %v499
        %v1757 = vunpack.c.h.b16 %v499
        %v1758 = vunpack.c.l.b16 %v500
        %v1759 = vunpack.c.h.b16 %v500
        %v1760 = vunpack.c.l.b16 %v501
        %v1761 = vunpack.c.h.b16 %v501
        %v1762 = vunpack.c.l.b16 %v502
        %v1763 = vunpack.c.h.b16 %v502
        %v1764 = vunpack.c.l.b16 %v503
        %v1765 = vunpack.c.h.b16 %v503
        %v1766 = vunpack.c.l.b16 %v504
        %v1767 = vunpack.c.h.b16 %v504
        %v1768 = vunpack.c.l.b16 %v505
        %v1769 = vunpack.c.h.b16 %v505
        %v1770 = vunpack.c.l.b16 %v506
        %v1771 = vunpack.c.h.b16 %v506
        %v1772 = vunpack.c.l.b16 %v507
        %v1773 = vunpack.c.h.b16 %v507
        %v1774 = vunpack.c.l.b16 %v508
        %v1775 = vunpack.c.h.b16 %v508
        %v1776 = vunpack.c.l.b16 %v509
        %v1777 = vunpack.c.h.b16 %v509
        %v1778 = vunpack.c.l.b16 %v510
        %v1779 = vunpack.c.h.b16 %v510
        %v1780 = vunpack.c.l.b16 %v511
        %v1781 = vunpack.c.h.b16 %v511
        %v1782 = vunpack.c.l.b16 %v512
        %v1783 = vunpack.c.h.b16 %v512
        %v1784 = vunpack.c.l.b16 %v513
        %v1785 = vunpack.c.h.b16 %v513
        %v1786 = vunpack.c.l.b16 %v514
        %v1787 = vunpack.c.h.b16 %v514
        %v1788 = vunpack.c.l.b16 %v515
        %v1789 = vunpack.c.h.b16 %v515
        %v1790 = vunpack.c.l.b16 %v516
        %v1791 = vunpack.c.h.b16 %v516
        %v1792 = vunpack.c.l.b16 %v517
        %v1793 = vunpack.c.h.b16 %v517
        %v1794 = vunpack.c.l.b16 %v518
        %v1795 = vunpack.c.h.b16 %v518
        %v1796 = vunpack.c.l.b16 %v519
        %v1797 = vunpack.c.h.b16 %v519
        %v1798 = vunpack.c.l.b16 %v520
        %v1799 = vunpack.c.h.b16 %v520
        %v1800 = vunpack.c.l.b16 %v521
        %v1801 = vunpack.c.h.b16 %v521
        %v1802 = vunpack.c.l.b16 %v522
        %v1803 = vunpack.c.h.b16 %v522
        %v1804 = vunpack.c.l.b16 %v523
        %v1805 = vunpack.c.h.b16 %v523
        %v1806 = vunpack.c.l.b16 %v524
        %v1807 = vunpack.c.h.b16 %v524
        %v1808 = vunpack.c.l.b16 %v525
        %v1809 = vunpack.c.h.b16 %v525
        %v1810 = vunpack.c.l.b16 %v526
        %v1811 = vunpack.c.h.b16 %v526
        %v1812 = vunpack.c.l.b16 %v527
        %v1813 = vunpack.c.h.b16 %v527
        %v1814 = vunpack.c.l.b16 %v528
        %v1815 = vunpack.c.h.b16 %v528
        %v1816 = vunpack.c.l.b16 %v529
        %v1817 = vunpack.c.h.b16 %v529
        %v1818 = vunpack.c.l.b16 %v530
        %v1819 = vunpack.c.h.b16 %v530
        %v1820 = vunpack.c.l.b16 %v531
        %v1821 = vunpack.c.h.b16 %v531
        %v1822 = vunpack.c.l.b16 %v532
        %v1823 = vunpack.c.h.b16 %v532
        %v1824 = vunpack.c.l.b16 %v533
        %v1825 = vunpack.c.h.b16 %v533
        %v1826 = vunpack.c.l.b16 %v534
        %v1827 = vunpack.c.h.b16 %v534
        %v1828 = vunpack.c.l.b16 %v535
        %v1829 = vunpack.c.h.b16 %v535
        %v1830 = vunpack.c.l.b16 %v536
        %v1831 = vunpack.c.h.b16 %v536
        %v1832 = vunpack.c.l.b16 %v537
        %v1833 = vunpack.c.h.b16 %v537
        %v1834 = vunpack.c.l.b16 %v538
        %v1835 = vunpack.c.h.b16 %v538
        %v1836 = vunpack.c.l.b16 %v539
        %v1837 = vunpack.c.h.b16 %v539
        %v1838 = vunpack.c.l.b16 %v540
        %v1839 = vunpack.c.h.b16 %v540
        %v1840 = vunpack.c.l.b16 %v541
        %v1841 = vunpack.c.h.b16 %v541
        %v1842 = vunpack.c.l.b16 %v542
        %v1843 = vunpack.c.h.b16 %v542
        %v1844 = vunpack.c.l.b16 %v543
        %v1845 = vunpack.c.h.b16 %v543
        %v1846 = vunpack.c.l.b16 %v544
        %v1847 = vunpack.c.h.b16 %v544
        %v1848 = vunpack.c.l.b16 %v545
        %v1849 = vunpack.c.h.b16 %v545
        %v1850 = vunpack.c.l.b16 %v546
        %v1851 = vunpack.c.h.b16 %v546
        %v1852 = vunpack.c.l.b16 %v547
        %v1853 = vunpack.c.h.b16 %v547
        %v1854 = vunpack.c.l.b16 %v548
        %v1855 = vunpack.c.h.b16 %v548
        %v1856 = vunpack.c.l.b16 %v549
        %v1857 = vunpack.c.h.b16 %v549
        %v1858 = vunpack.c.l.b16 %v550
        %v1859 = vunpack.c.h.b16 %v550
        %v1860 = vunpack.c.l.b16 %v551
        %v1861 = vunpack.c.h.b16 %v551
        %v1862 = vunpack.c.l.b16 %v552
        %v1863 = vunpack.c.h.b16 %v552
        %v1864 = vunpack.c.l.b16 %v553
        %v1865 = vunpack.c.h.b16 %v553
        %v1866 = vunpack.c.l.b16 %v554
        %v1867 = vunpack.c.h.b16 %v554
        %v1868 = vunpack.c.l.b16 %v555
        %v1869 = vunpack.c.h.b16 %v555
        %v1870 = vunpack.c.l.b16 %v556
        %v1871 = vunpack.c.h.b16 %v556
        %v1872 = vunpack.c.l.b16 %v557
        %v1873 = vunpack.c.h.b16 %v557
        %v1874 = vunpack.c.l.b16 %v558
        %v1875 = vunpack.c.h.b16 %v558
        %v1876 = vunpack.c.l.b16 %v559
        %v1877 = vunpack.c.h.b16 %v559
        %v1878 = vunpack.c.l.b16 %v560
        %v1879 = vunpack.c.h.b16 %v560
        %v1880 = vunpack.c.l.b16 %v561
        %v1881 = vunpack.c.h.b16 %v561
        %v1882 = vunpack.c.l.b16 %v562
        %v1883 = vunpack.c.h.b16 %v562
        %v1884 = vunpack.c.l.b16 %v563
        %v1885 = vunpack.c.h.b16 %v563
        %v1886 = vunpack.c.l.b16 %v564
        %v1887 = vunpack.c.h.b16 %v564
        %v1888 = vunpack.c.l.b16 %v565
        %v1889 = vunpack.c.h.b16 %v565
        %v1890 = vunpack.c.l.b16 %v566
        %v1891 = vunpack.c.h.b16 %v566
        %v1892 = vunpack.c.l.b16 %v567
        %v1893 = vunpack.c.h.b16 %v567
        %v1894 = vunpack.c.l.b16 %v568
        %v1895 = vunpack.c.h.b16 %v568
        %v1896 = vunpack.c.l.b16 %v569
        %v1897 = vunpack.c.h.b16 %v569
        %v1898 = vunpack.c.l.b16 %v570
        %v1899 = vunpack.c.h.b16 %v570
        %v1900 = vunpack.c.l.b16 %v571
        %v1901 = vunpack.c.h.b16 %v571
        %v1902 = vunpack.c.l.b16 %v572
        %v1903 = vunpack.c.h.b16 %v572
        %v1904 = vunpack.c.l.b16 %v573
        %v1905 = vunpack.c.h.b16 %v573
        %v1906 = vunpack.c.l.b16 %v574
        %v1907 = vunpack.c.h.b16 %v574
        %v1908 = vunpack.c.l.b16 %v575
        %v1909 = vunpack.c.h.b16 %v575
        %v1910 = vunpack.c.l.b16 %v576
        %v1911 = vunpack.c.h.b16 %v576
        %v1912 = vunpack.c.l.b16 %v577
        %v1913 = vunpack.c.h.b16 %v577
        %v1914 = vunpack.c.l.b16 %v578
        %v1915 = vunpack.c.h.b16 %v578
        %v1916 = vunpack.c.l.b16 %v579
        %v1917 = vunpack.c.h.b16 %v579
        %v1918 = vunpack.c.l.b16 %v580
        %v1919 = vunpack.c.h.b16 %v580
        %v1920 = vunpack.c.l.b16 %v581
        %v1921 = vunpack.c.h.b16 %v581
        %v1922 = vunpack.c.l.b16 %v582
        %v1923 = vunpack.c.h.b16 %v582
        %v1924 = vunpack.c.l.b16 %v583
        %v1925 = vunpack.c.h.b16 %v583
        %v1926 = vunpack.c.l.b16 %v584
        %v1927 = vunpack.c.h.b16 %v584
        %v1928 = vunpack.c.l.b16 %v585
        %v1929 = vunpack.c.h.b16 %v585
        %v1930 = vunpack.c.l.b16 %v586
        %v1931 = vunpack.c.h.b16 %v586
        %v1932 = vunpack.c.l.b16 %v587
        %v1933 = vunpack.c.h.b16 %v587
        %v1934 = vunpack.c.l.b16 %v588
        %v1935 = vunpack.c.h.b16 %v588
        %v1936 = vunpack.c.l.b16 %v589
        %v1937 = vunpack.c.h.b16 %v589
        %v1938 = vunpack.c.l.b16 %v590
        %v1939 = vunpack.c.h.b16 %v590
        %v1940 = vunpack.c.l.b16 %v591
        %v1941 = vunpack.c.h.b16 %v591
        %v1942 = vunpack.c.l.b16 %v592
        %v1943 = vunpack.c.h.b16 %v592
        %v1944 = vunpack.c.l.b16 %v593
        %v1945 = vunpack.c.h.b16 %v593
        %v1946 = vunpack.c.l.b16 %v594
        %v1947 = vunpack.c.h.b16 %v594
        %v1948 = vunpack.c.l.b16 %v595
        %v1949 = vunpack.c.h.b16 %v595
        %v1950 = vunpack.c.l.b16 %v596
        %v1951 = vunpack.c.h.b16 %v596
        %v1952 = vunpack.c.l.b16 %v597
        %v1953 = vunpack.c.h.b16 %v597
        %v1954 = vunpack.c.l.b16 %v598
        %v1955 = vunpack.c.h.b16 %v598
        %v1956 = vunpack.c.l.b16 %v599
        %v1957 = vunpack.c.h.b16 %v599
        %v1958 = vunpack.c.l.b16 %v600
        %v1959 = vunpack.c.h.b16 %v600
        %v1960 = vunpack.c.l.b16 %v601
        %v1961 = vunpack.c.h.b16 %v601
        %v1962 = vunpack.c.l.b16 %v602
        %v1963 = vunpack.c.h.b16 %v602
        %v1964 = vunpack.c.l.b16 %v603
        %v1965 = vunpack.c.h.b16 %v603
        %v1966 = vunpack.c.l.b16 %v604
        %v1967 = vunpack.c.h.b16 %v604
        %v1968 = vunpack.c.l.b16 %v605
        %v1969 = vunpack.c.h.b16 %v605
        %v1970 = vunpack.c.l.b16 %v606
        %v1971 = vunpack.c.h.b16 %v606
        %v1972 = vunpack.c.l.b16 %v607
        %v1973 = vunpack.c.h.b16 %v607
        %v1974 = vunpack.c.l.b16 %v608
        %v1975 = vunpack.c.h.b16 %v608
        %v1976 = vunpack.c.l.b16 %v609
        %v1977 = vunpack.c.h.b16 %v609
        %v1978 = vunpack.c.l.b16 %v610
        %v1979 = vunpack.c.h.b16 %v610
        %v1980 = vunpack.c.l.b16 %v611
        %v1981 = vunpack.c.h.b16 %v611
        %v1982 = vunpack.c.l.b16 %v612
        %v1983 = vunpack.c.h.b16 %v612
        %v1984 = vunpack.c.l.b16 %v613
        %v1985 = vunpack.c.h.b16 %v613
        %v1986 = vunpack.c.l.b16 %v614
        %v1987 = vunpack.c.h.b16 %v614
        %v1988 = vunpack.c.l.b16 %v615
        %v1989 = vunpack.c.h.b16 %v615
        %v1990 = vunpack.c.l.b16 %v616
        %v1991 = vunpack.c.h.b16 %v616
        %v1992 = vunpack.c.l.b16 %v617
        %v1993 = vunpack.c.h.b16 %v617
        %v1994 = vunpack.c.l.b16 %v618
        %v1995 = vunpack.c.h.b16 %v618
        %v1996 = vunpack.c.l.b16 %v619
        %v1997 = vunpack.c.h.b16 %v619
        %v1998 = vunpack.c.l.b16 %v620
        %v1999 = vunpack.c.h.b16 %v620
        %v2000 = vunpack.c.l.b16 %v621
        %v2001 = vunpack.c.h.b16 %v621
        %v2002 = vunpack.c.l.b16 %v622
        %v2003 = vunpack.c.h.b16 %v622
        %v2004 = vunpack.c.l.b16 %v623
        %v2005 = vunpack.c.h.b16 %v623
        %v2006 = vunpack.c.l.b16 %v624
        %v2007 = vunpack.c.h.b16 %v624
        %v2008 = vunpack.c.l.b16 %v625
        %v2009 = vunpack.c.h.b16 %v625
        %v2010 = vunpack.c.l.b16 %v626
        %v2011 = vunpack.c.h.b16 %v626
        %v2012 = vunpack.c.l.b16 %v627
        %v2013 = vunpack.c.h.b16 %v627
        %v2014 = vunpack.c.l.b16 %v628
        %v2015 = vunpack.c.h.b16 %v628
        %v2016 = vunpack.c.l.b16 %v629
        %v2017 = vunpack.c.h.b16 %v629
        %v2018 = vunpack.c.l.b16 %v630
        %v2019 = vunpack.c.h.b16 %v630
        %v2020 = vunpack.c.l.b16 %v631
        %v2021 = vunpack.c.h.b16 %v631
        %v2022 = vunpack.c.l.b16 %v632
        %v2023 = vunpack.c.h.b16 %v632
        %v2024 = vunpack.c.l.b16 %v633
        %v2025 = vunpack.c.h.b16 %v633
        %v2026 = vunpack.c.l.b16 %v634
        %v2027 = vunpack.c.h.b16 %v634
        %v2028 = vunpack.c.l.b16 %v635
        %v2029 = vunpack.c.h.b16 %v635
        %v2030 = vunpack.c.l.b16 %v636
        %v2031 = vunpack.c.h.b16 %v636
        %v2032 = vunpack.c.l.b16 %v637
        %v2033 = vunpack.c.h.b16 %v637
        %v2034 = vunpack.c.l.b16 %v638
        %v2035 = vunpack.c.h.b16 %v638
        %v2036 = vunpack.c.l.b16 %v639
        %v2037 = vunpack.c.h.b16 %v639
        %v2038 = vunpack.c.l.b16 %v640
        %v2039 = vunpack.c.h.b16 %v640
        %v2040 = vunpack.c.l.b16 %v641
        %v2041 = vunpack.c.h.b16 %v641
        %v2042 = vunpack.c.l.b16 %v642
        %v2043 = vunpack.c.h.b16 %v642
        %v2044 = vunpack.c.l.b16 %v643
        %v2045 = vunpack.c.h.b16 %v643
        %v2046 = vunpack.c.l.b16 %v644
        %v2047 = vunpack.c.h.b16 %v644
        %v2048 = vunpack.c.l.b16 %v645
        %v2049 = vunpack.c.h.b16 %v645
        %v2050 = vunpack.c.l.b16 %v646
        %v2051 = vunpack.c.h.b16 %v646
        %v2052 = vunpack.c.l.b16 %v647
        %v2053 = vunpack.c.h.b16 %v647
        %v2054 = vunpack.c.l.b16 %v648
        %v2055 = vunpack.c.h.b16 %v648
        %v2056 = vunpack.c.l.b16 %v649
        %v2057 = vunpack.c.h.b16 %v649
        %v2058 = vunpack.c.l.b16 %v650
        %v2059 = vunpack.c.h.b16 %v650
        %v2060 = vunpack.c.l.b16 %v651
        %v2061 = vunpack.c.h.b16 %v651
        %v2062 = vunpack.c.l.b16 %v652
        %v2063 = vunpack.c.h.b16 %v652
        %v2064 = vunpack.c.l.b16 %v653
        %v2065 = vunpack.c.h.b16 %v653
        %v2066 = vunpack.c.l.b16 %v654
        %v2067 = vunpack.c.h.b16 %v654
        %v2068 = vunpack.c.l.b16 %v655
        %v2069 = vunpack.c.h.b16 %v655
        %v2070 = vunpack.c.l.b16 %v656
        %v2071 = vunpack.c.h.b16 %v656
        %v2072 = vunpack.c.l.b16 %v657
        %v2073 = vunpack.c.h.b16 %v657
        %v2074 = vunpack.c.l.b16 %v658
        %v2075 = vunpack.c.h.b16 %v658
        %v2076 = vunpack.c.l.b16 %v659
        %v2077 = vunpack.c.h.b16 %v659
        %v2078 = vunpack.c.l.b16 %v660
        %v2079 = vunpack.c.h.b16 %v660
        %v2080 = vunpack.c.l.b16 %v661
        %v2081 = vunpack.c.h.b16 %v661
        %v2082 = vunpack.c.l.b16 %v662
        %v2083 = vunpack.c.h.b16 %v662
        %v2084 = vunpack.c.l.b16 %v663
        %v2085 = vunpack.c.h.b16 %v663
        %v2086 = vunpack.c.l.b16 %v664
        %v2087 = vunpack.c.h.b16 %v664
        %v2088 = vunpack.c.l.b16 %v665
        %v2089 = vunpack.c.h.b16 %v665
        %v2090 = vunpack.c.l.b16 %v666
        %v2091 = vunpack.c.h.b16 %v666
        %v2092 = vunpack.c.l.b16 %v667
        %v2093 = vunpack.c.h.b16 %v667
        %v2094 = vunpack.c.l.b16 %v668
        %v2095 = vunpack.c.h.b16 %v668
        %v2096 = vunpack.c.l.b16 %v669
        %v2097 = vunpack.c.h.b16 %v669
        %v2098 = vunpack.c.l.b16 %v670
        %v2099 = vunpack.c.h.b16 %v670
        %v2100 = vunpack.c.l.b16 %v671
        %v2101 = vunpack.c.h.b16 %v671
        %v2102 = vpack.c.b16 %v1594, %v1590
        %v2103 = vpack.c.b16 %v1595, %v1591
        %v2104 = vpack.c.b16 %v1596, %v1592
        %v2105 = vpack.c.b16 %v1597, %v1593
        %v2106 = vpack.c.b16 %v1602, %v1598
        %v2107 = vpack.c.b16 %v1603, %v1599
        %v2108 = vpack.c.b16 %v1604, %v1600
        %v2109 = vpack.c.b16 %v1605, %v1601
        %v2110 = vpack.c.b16 %v1610, %v1606
        %v2111 = vpack.c.b16 %v1611, %v1607
        %v2112 = vpack.c.b16 %v1612, %v1608
        %v2113 = vpack.c.b16 %v1613, %v1609
        %v2114 = vpack.c.b16 %v1618, %v1614
        %v2115 = vpack.c.b16 %v1619, %v1615
        %v2116 = vpack.c.b16 %v1620, %v1616
        %v2117 = vpack.c.b16 %v1621, %v1617
        %v2118 = vpack.c.b16 %v1626, %v1622
        %v2119 = vpack.c.b16 %v1627, %v1623
        %v2120 = vpack.c.b16 %v1628, %v1624
        %v2121 = vpack.c.b16 %v1629, %v1625
        %v2122 = vpack.c.b16 %v1634, %v1630
        %v2123 = vpack.c.b16 %v1635, %v1631
        %v2124 = vpack.c.b16 %v1636, %v1632
        %v2125 = vpack.c.b16 %v1637, %v1633
        %v2126 = vpack.c.b16 %v1642, %v1638
        %v2127 = vpack.c.b16 %v1643, %v1639
        %v2128 = vpack.c.b16 %v1644, %v1640
        %v2129 = vpack.c.b16 %v1645, %v1641
        %v2130 = vpack.c.b16 %v1650, %v1646
        %v2131 = vpack.c.b16 %v1651, %v1647
        %v2132 = vpack.c.b16 %v1652, %v1648
        %v2133 = vpack.c.b16 %v1653, %v1649
        %v2134 = vpack.c.b16 %v1658, %v1654
        %v2135 = vpack.c.b16 %v1659, %v1655
        %v2136 = vpack.c.b16 %v1660, %v1656
        %v2137 = vpack.c.b16 %v1661, %v1657
        %v2138 = vpack.c.b16 %v1666, %v1662
        %v2139 = vpack.c.b16 %v1667, %v1663
        %v2140 = vpack.c.b16 %v1668, %v1664
        %v2141 = vpack.c.b16 %v1669, %v1665
        %v2142 = vpack.c.b16 %v1674, %v1670
        %v2143 = vpack.c.b16 %v1675, %v1671
        %v2144 = vpack.c.b16 %v1676, %v1672
        %v2145 = vpack.c.b16 %v1677, %v1673
        %v2146 = vpack.c.b16 %v1682, %v1678
        %v2147 = vpack.c.b16 %v1683, %v1679
        %v2148 = vpack.c.b16 %v1684, %v1680
        %v2149 = vpack.c.b16 %v1685, %v1681
        %v2150 = vpack.c.b16 %v1690, %v1686
        %v2151 = vpack.c.b16 %v1691, %v1687
        %v2152 = vpack.c.b16 %v1692, %v1688
        %v2153 = vpack.c.b16 %v1693, %v1689
        %v2154 = vpack.c.b16 %v1698, %v1694
        %v2155 = vpack.c.b16 %v1699, %v1695
        %v2156 = vpack.c.b16 %v1700, %v1696
        %v2157 = vpack.c.b16 %v1701, %v1697
        %v2158 = vpack.c.b16 %v1706, %v1702
        %v2159 = vpack.c.b16 %v1707, %v1703
        %v2160 = vpack.c.b16 %v1708, %v1704
        %v2161 = vpack.c.b16 %v1709, %v1705
        %v2162 = vpack.c.b16 %v1714, %v1710
        %v2163 = vpack.c.b16 %v1715, %v1711
        %v2164 = vpack.c.b16 %v1716, %v1712
        %v2165 = vpack.c.b16 %v1717, %v1713
        %v2166 = vpack.c.b16 %v1722, %v1718
        %v2167 = vpack.c.b16 %v1723, %v1719
        %v2168 = vpack.c.b16 %v1724, %v1720
        %v2169 = vpack.c.b16 %v1725, %v1721
        %v2170 = vpack.c.b16 %v1730, %v1726
        %v2171 = vpack.c.b16 %v1731, %v1727
        %v2172 = vpack.c.b16 %v1732, %v1728
        %v2173 = vpack.c.b16 %v1733, %v1729
        %v2174 = vpack.c.b16 %v1738, %v1734
        %v2175 = vpack.c.b16 %v1739, %v1735
        %v2176 = vpack.c.b16 %v1740, %v1736
        %v2177 = vpack.c.b16 %v1741, %v1737
        %v2178 = vpack.c.b16 %v1746, %v1742
        %v2179 = vpack.c.b16 %v1747, %v1743
        %v2180 = vpack.c.b16 %v1748, %v1744
        %v2181 = vpack.c.b16 %v1749, %v1745
        %v2182 = vpack.c.b16 %v1754, %v1750
        %v2183 = vpack.c.b16 %v1755, %v1751
        %v2184 = vpack.c.b16 %v1756, %v1752
        %v2185 = vpack.c.b16 %v1757, %v1753
        %v2186 = vpack.c.b16 %v1762, %v1758
        %v2187 = vpack.c.b16 %v1763, %v1759
        %v2188 = vpack.c.b16 %v1764, %v1760
        %v2189 = vpack.c.b16 %v1765, %v1761
        %v2190 = vpack.c.b16 %v1770, %v1766
        %v2191 = vpack.c.b16 %v1771, %v1767
        %v2192 = vpack.c.b16 %v1772, %v1768
        %v2193 = vpack.c.b16 %v1773, %v1769
        %v2194 = vpack.c.b16 %v1778, %v1774
        %v2195 = vpack.c.b16 %v1779, %v1775
        %v2196 = vpack.c.b16 %v1780, %v1776
        %v2197 = vpack.c.b16 %v1781, %v1777
        %v2198 = vpack.c.b16 %v1786, %v1782
        %v2199 = vpack.c.b16 %v1787, %v1783
        %v2200 = vpack.c.b16 %v1788, %v1784
        %v2201 = vpack.c.b16 %v1789, %v1785
        %v2202 = vpack.c.b16 %v1794, %v1790
        %v2203 = vpack.c.b16 %v1795, %v1791
        %v2204 = vpack.c.b16 %v1796, %v1792
        %v2205 = vpack.c.b16 %v1797, %v1793
        %v2206 = vpack.c.b16 %v1802, %v1798
        %v2207 = vpack.c.b16 %v1803, %v1799
        %v2208 = vpack.c.b16 %v1804, %v1800
        %v2209 = vpack.c.b16 %v1805, %v1801
        %v2210 = vpack.c.b16 %v1810, %v1806
        %v2211 = vpack.c.b16 %v1811, %v1807
        %v2212 = vpack.c.b16 %v1812, %v1808
        %v2213 = vpack.c.b16 %v1813, %v1809
        %v2214 = vpack.c.b16 %v1818, %v1814
        %v2215 = vpack.c.b16 %v1819, %v1815
        %v2216 = vpack.c.b16 %v1820, %v1816
        %v2217 = vpack.c.b16 %v1821, %v1817
        %v2218 = vpack.c.b16 %v1826, %v1822
        %v2219 = vpack.c.b16 %v1827, %v1823
        %v2220 = vpack.c.b16 %v1828, %v1824
        %v2221 = vpack.c.b16 %v1829, %v1825
        %v2222 = vpack.c.b16 %v1834, %v1830
        %v2223 = vpack.c.b16 %v1835, %v1831
        %v2224 = vpack.c.b16 %v1836, %v1832
        %v2225 = vpack.c.b16 %v1837, %v1833
        %v2226 = vpack.c.b16 %v1842, %v1838
        %v2227 = vpack.c.b16 %v1843, %v1839
        %v2228 = vpack.c.b16 %v1844, %v1840
        %v2229 = vpack.c.b16 %v1845, %v1841
        %v2230 = vpack.c.b16 %v1850, %v1846
        %v2231 = vpack.c.b16 %v1851, %v1847
        %v2232 = vpack.c.b16 %v1852, %v1848
        %v2233 = vpack.c.b16 %v1853, %v1849
        %v2234 = vpack.c.b16 %v1858, %v1854
        %v2235 = vpack.c.b16 %v1859, %v1855
        %v2236 = vpack.c.b16 %v1860, %v1856
        %v2237 = vpack.c.b16 %v1861, %v1857
        %v2238 = vpack.c.b16 %v1866, %v1862
        %v2239 = vpack.c.b16 %v1867, %v1863
        %v2240 = vpack.c.b16 %v1868, %v1864
        %v2241 = vpack.c.b16 %v1869, %v1865
        %v2242 = vpack.c.b16 %v1874, %v1870
        %v2243 = vpack.c.b16 %v1875, %v1871
        %v2244 = vpack.c.b16 %v1876, %v1872
        %v2245 = vpack.c.b16 %v1877, %v1873
        %v2246 = vpack.c.b16 %v1882, %v1878
        %v2247 = vpack.c.b16 %v1883, %v1879
        %v2248 = vpack.c.b16 %v1884, %v1880
        %v2249 = vpack.c.b16 %v1885, %v1881
        %v2250 = vpack.c.b16 %v1890, %v1886
        %v2251 = vpack.c.b16 %v1891, %v1887
        %v2252 = vpack.c.b16 %v1892, %v1888
        %v2253 = vpack.c.b16 %v1893, %v1889
        %v2254 = vpack.c.b16 %v1898, %v1894
        %v2255 = vpack.c.b16 %v1899, %v1895
        %v2256 = vpack.c.b16 %v1900, %v1896
        %v2257 = vpack.c.b16 %v1901, %v1897
        %v2258 = vpack.c.b16 %v1906, %v1902
        %v2259 = vpack.c.b16 %v1907, %v1903
        %v2260 = vpack.c.b16 %v1908, %v1904
        %v2261 = vpack.c.b16 %v1909, %v1905
        %v2262 = vpack.c.b16 %v1914, %v1910
        %v2263 = vpack.c.b16 %v1915, %v1911
        %v2264 = vpack.c.b16 %v1916, %v1912
        %v2265 = vpack.c.b16 %v1917, %v1913
        %v2266 = vpack.c.b16 %v1922, %v1918
        %v2267 = vpack.c.b16 %v1923, %v1919
        %v2268 = vpack.c.b16 %v1924, %v1920
        %v2269 = vpack.c.b16 %v1925, %v1921
        %v2270 = vpack.c.b16 %v1930, %v1926
        %v2271 = vpack.c.b16 %v1931, %v1927
        %v2272 = vpack.c.b16 %v1932, %v1928
        %v2273 = vpack.c.b16 %v1933, %v1929
        %v2274 = vpack.c.b16 %v1938, %v1934
        %v2275 = vpack.c.b16 %v1939, %v1935
        %v2276 = vpack.c.b16 %v1940, %v1936
        %v2277 = vpack.c.b16 %v1941, %v1937
        %v2278 = vpack.c.b16 %v1946, %v1942
        %v2279 = vpack.c.b16 %v1947, %v1943
        %v2280 = vpack.c.b16 %v1948, %v1944
        %v2281 = vpack.c.b16 %v1949, %v1945
        %v2282 = vpack.c.b16 %v1954, %v1950
        %v2283 = vpack.c.b16 %v1955, %v1951
        %v2284 = vpack.c.b16 %v1956, %v1952
        %v2285 = vpack.c.b16 %v1957, %v1953
        %v2286 = vpack.c.b16 %v1962, %v1958
        %v2287 = vpack.c.b16 %v1963, %v1959
        %v2288 = vpack.c.b16 %v1964, %v1960
        %v2289 = vpack.c.b16 %v1965, %v1961
        %v2290 = vpack.c.b16 %v1970, %v1966
        %v2291 = vpack.c.b16 %v1971, %v1967
        %v2292 = vpack.c.b16 %v1972, %v1968
        %v2293 = vpack.c.b16 %v1973, %v1969
        %v2294 = vpack.c.b16 %v1978, %v1974
        %v2295 = vpack.c.b16 %v1979, %v1975
        %v2296 = vpack.c.b16 %v1980, %v1976
        %v2297 = vpack.c.b16 %v1981, %v1977
        %v2298 = vpack.c.b16 %v1986, %v1982
        %v2299 = vpack.c.b16 %v1987, %v1983
        %v2300 = vpack.c.b16 %v1988, %v1984
        %v2301 = vpack.c.b16 %v1989, %v1985
        %v2302 = vpack.c.b16 %v1994, %v1990
        %v2303 = vpack.c.b16 %v1995, %v1991
        %v2304 = vpack.c.b16 %v1996, %v1992
        %v2305 = vpack.c.b16 %v1997, %v1993
        %v2306 = vpack.c.b16 %v2002, %v1998
        %v2307 = vpack.c.b16 %v2003, %v1999
        %v2308 = vpack.c.b16 %v2004, %v2000
        %v2309 = vpack.c.b16 %v2005, %v2001
        %v2310 = vpack.c.b16 %v2010, %v2006
        %v2311 = vpack.c.b16 %v2011, %v2007
        %v2312 = vpack.c.b16 %v2012, %v2008
        %v2313 = vpack.c.b16 %v2013, %v2009
        %v2314 = vpack.c.b16 %v2018, %v2014
        %v2315 = vpack.c.b16 %v2019, %v2015
        %v2316 = vpack.c.b16 %v2020, %v2016
        %v2317 = vpack.c.b16 %v2021, %v2017
        %v2318 = vpack.c.b16 %v2026, %v2022
        %v2319 = vpack.c.b16 %v2027, %v2023
        %v2320 = vpack.c.b16 %v2028, %v2024
        %v2321 = vpack.c.b16 %v2029, %v2025
        %v2322 = vpack.c.b16 %v2034, %v2030
        %v2323 = vpack.c.b16 %v2035, %v2031
        %v2324 = vpack.c.b16 %v2036, %v2032
        %v2325 = vpack.c.b16 %v2037, %v2033
        %v2326 = vpack.c.b16 %v2042, %v2038
        %v2327 = vpack.c.b16 %v2043, %v2039
        %v2328 = vpack.c.b16 %v2044, %v2040
        %v2329 = vpack.c.b16 %v2045, %v2041
        %v2330 = vpack.c.b16 %v2050, %v2046
        %v2331 = vpack.c.b16 %v2051, %v2047
        %v2332 = vpack.c.b16 %v2052, %v2048
        %v2333 = vpack.c.b16 %v2053, %v2049
        %v2334 = vpack.c.b16 %v2058, %v2054
        %v2335 = vpack.c.b16 %v2059, %v2055
        %v2336 = vpack.c.b16 %v2060, %v2056
        %v2337 = vpack.c.b16 %v2061, %v2057
        %v2338 = vpack.c.b16 %v2066, %v2062
        %v2339 = vpack.c.b16 %v2067, %v2063
        %v2340 = vpack.c.b16 %v2068, %v2064
        %v2341 = vpack.c.b16 %v2069, %v2065
        %v2342 = vpack.c.b16 %v2074, %v2070
        %v2343 = vpack.c.b16 %v2075, %v2071
        %v2344 = vpack.c.b16 %v2076, %v2072
        %v2345 = vpack.c.b16 %v2077, %v2073
        %v2346 = vpack.c.b16 %v2082, %v2078
        %v2347 = vpack.c.b16 %v2083, %v2079
        %v2348 = vpack.c.b16 %v2084, %v2080
        %v2349 = vpack.c.b16 %v2085, %v2081
        %v2350 = vpack.c.b16 %v2090, %v2086
        %v2351 = vpack.c.b16 %v2091, %v2087
        %v2352 = vpack.c.b16 %v2092, %v2088
        %v2353 = vpack.c.b16 %v2093, %v2089
        %v2354 = vpack.c.b16 %v2098, %v2094
        %v2355 = vpack.c.b16 %v2099, %v2095
        %v2356 = vpack.c.b16 %v2100, %v2096
        %v2357 = vpack.c.b16 %v2101, %v2097
        %2614 = vmatprep.subr.bf16.mxu0 %v2103
        %2615 = vmatpush1.bf16.msra.mxu0 %v2102
        %2616 = vmatprep.subr.bf16.mxu0 %v2107
        %2617 = vmatpush1.bf16.msra.mxu0 %v2106
        %2618 = vmatprep.subr.bf16.mxu0 %v2111
        %2619 = vmatpush1.bf16.msra.mxu0 %v2110
        %2620 = vmatprep.subr.bf16.mxu0 %v2115
        %2621 = vmatpush1.bf16.msra.mxu0 %v2114
        %2622 = vmatprep.subr.bf16.mxu0 %v2119
        %2623 = vmatpush1.bf16.msra.mxu0 %v2118
        %2624 = vmatprep.subr.bf16.mxu0 %v2123
        %2625 = vmatpush1.bf16.msra.mxu0 %v2122
        %2626 = vmatprep.subr.bf16.mxu0 %v2127
        %2627 = vmatpush1.bf16.msra.mxu0 %v2126
        %2628 = vmatprep.subr.bf16.mxu0 %v2131
        %2629 = vmatpush1.bf16.msra.mxu0 %v2130
        %2630 = vmatprep.subr.bf16.mxu0 %v2135
        %2631 = vmatpush1.bf16.msra.mxu0 %v2134
        %2632 = vmatprep.subr.bf16.mxu0 %v2139
        %2633 = vmatpush1.bf16.msra.mxu0 %v2138
        %2634 = vmatprep.subr.bf16.mxu0 %v2143
        %2635 = vmatpush1.bf16.msra.mxu0 %v2142
        %2636 = vmatprep.subr.bf16.mxu0 %v2147
        %2637 = vmatpush1.bf16.msra.mxu0 %v2146
        %2638 = vmatprep.subr.bf16.mxu0 %v2151
        %2639 = vmatpush1.bf16.msra.mxu0 %v2150
        %2640 = vmatprep.subr.bf16.mxu0 %v2155
        %2641 = vmatpush1.bf16.msra.mxu0 %v2154
        %2642 = vmatprep.subr.bf16.mxu0 %v2159
        %2643 = vmatpush1.bf16.msra.mxu0 %v2158
        %2644 = vmatprep.subr.bf16.mxu0 %v2163
        %2645 = vmatpush1.bf16.msra.mxu0 %v2162
        %2646 = vmatprep.mubr.bf16.mxu0 %v1079
        %2647 = vmatmul.mubr.bf16.gmra.mrb[0].mxu0 %v1078
        %v2648 = vpop.f32.mrb[0].mxu0
        %v2649 = vadd.f32 %v677, %v2648
        %v2650 = vpop.f32.mrb[0].mxu0
        %v2651 = vadd.f32 %v681, %v2650
        %v2652 = vpop.f32.mrb[0].mxu0
        %v2653 = vadd.f32 %v677, %v2652
        %v2654 = vpop.f32.mrb[0].mxu0
        %v2655 = vadd.f32 %v681, %v2654
        %2656 = vmatprep.mubr.bf16.mxu0 %v1087
        %2657 = vmatmul.mubr.bf16.gmra.mrb[0].mxu0 %v1086
        %v2658 = vpop.f32.mrb[0].mxu0
        %v2659 = vadd.f32 %v677, %v2658
        %v2660 = vpop.f32.mrb[0].mxu0
        %v2661 = vadd.f32 %v681, %v2660
        %v2662 = vpop.f32.mrb[0].mxu0
        %v2663 = vadd.f32 %v677, %v2662
        %v2664 = vpop.f32.mrb[0].mxu0
        %v2665 = vadd.f32 %v681, %v2664
        %2666 = vmatprep.mubr.bf16.mxu0 %v1095
        %2667 = vmatmul.mubr.bf16.gmra.mrb[0].mxu0 %v1094
        %v2668 = vpop.f32.mrb[0].mxu0
        %v2669 = vadd.f32 %v677, %v2668
        %v2670 = vpop.f32.mrb[0].mxu0
        %v2671 = vadd.f32 %v681, %v2670
        %v2672 = vpop.f32.mrb[0].mxu0
        %v2673 = vadd.f32 %v677, %v2672
        %v2674 = vpop.f32.mrb[0].mxu0
        %v2675 = vadd.f32 %v681, %v2674
        %2676 = vmatprep.mubr.bf16.mxu0 %v1103
        %2677 = vmatmul.mubr.bf16.gmra.mrb[0].mxu0 %v1102
        %v2678 = vpop.f32.mrb[0].mxu0
        %v2679 = vadd.f32 %v677, %v2678
        %v2680 = vpop.f32.mrb[0].mxu0
        %v2681 = vadd.f32 %v681, %v2680
        %v2682 = vpop.f32.mrb[0].mxu0
        %v2683 = vadd.f32 %v677, %v2682
        %v2684 = vpop.f32.mrb[0].mxu0
        %v2685 = vadd.f32 %v681, %v2684
        %2686 = vmatprep.mubr.bf16.mxu0 %v1111
        %2687 = vmatmul.mubr.bf16.gmra.mrb[0].mxu0 %v1110
        %v2688 = vpop.f32.mrb[0].mxu0
        %v2689 = vadd.f32 %v677, %v2688
        %v2690 = vpop.f32.mrb[0].mxu0
        %v2691 = vadd.f32 %v681, %v2690
        %v2692 = vpop.f32.mrb[0].mxu0
        %v2693 = vadd.f32 %v677, %v2692
        %v2694 = vpop.f32.mrb[0].mxu0
        %v2695 = vadd.f32 %v681, %v2694
        %2696 = vmatprep.mubr.bf16.mxu0 %v1119
        %2697 = vmatmul.mubr.bf16.gmra.mrb[0].mxu0 %v1118
        %v2698 = vpop.f32.mrb[0].mxu0
        %v2699 = vadd.f32 %v677, %v2698
        %v2700 = vpop.f32.mrb[0].mxu0
        %v2701 = vadd.f32 %v681, %v2700
        %v2702 = vpop.f32.mrb[0].mxu0
        %v2703 = vadd.f32 %v677, %v2702
        %v2704 = vpop.f32.mrb[0].mxu0
        %v2705 = vadd.f32 %v681, %v2704
        %2706 = vmatprep.mubr.bf16.mxu0 %v1127
        %2707 = vmatmul.mubr.bf16.gmra.mrb[0].mxu0 %v1126
        %v2708 = vpop.f32.mrb[0].mxu0
        %v2709 = vadd.f32 %v677, %v2708
        %v2710 = vpop.f32.mrb[0].mxu0
        %v2711 = vadd.f32 %v681, %v2710
        %v2712 = vpop.f32.mrb[0].mxu0
        %v2713 = vadd.f32 %v677, %v2712
        %v2714 = vpop.f32.mrb[0].mxu0
        %v2715 = vadd.f32 %v681, %v2714
        %2716 = vmatprep.mubr.bf16.mxu0 %v1135
        %2717 = vmatmul.mubr.bf16.gmra.mrb[0].mxu0 %v1134
        %v2718 = vpop.f32.mrb[0].mxu0
        %v2719 = vadd.f32 %v677, %v2718
        %v2720 = vpop.f32.mrb[0].mxu0
        %v2721 = vadd.f32 %v681, %v2720
        %v2722 = vpop.f32.mrb[0].mxu0
        %v2723 = vadd.f32 %v677, %v2722
        %v2724 = vpop.f32.mrb[0].mxu0
        %v2725 = vadd.f32 %v681, %v2724
        %2726 = vmatprep.mubr.bf16.mxu0 %v1143
        %2727 = vmatmul.mubr.bf16.gmra.mrb[0].mxu0 %v1142
        %v2728 = vpop.f32.mrb[0].mxu0
        %v2729 = vadd.f32 %v677, %v2728
        %v2730 = vpop.f32.mrb[0].mxu0
        %v2731 = vadd.f32 %v681, %v2730
        %v2732 = vpop.f32.mrb[0].mxu0
        %v2733 = vadd.f32 %v677, %v2732
        %v2734 = vpop.f32.mrb[0].mxu0
        %v2735 = vadd.f32 %v681, %v2734
        %2736 = vmatprep.mubr.bf16.mxu0 %v1151
        %2737 = vmatmul.mubr.bf16.gmra.mrb[0].mxu0 %v1150
        %v2738 = vpop.f32.mrb[0].mxu0
        %v2739 = vadd.f32 %v677, %v2738
        %v2740 = vpop.f32.mrb[0].mxu0
        %v2741 = vadd.f32 %v681, %v2740
        %v2742 = vpop.f32.mrb[0].mxu0
        %v2743 = vadd.f32 %v677, %v2742
        %v2744 = vpop.f32.mrb[0].mxu0
        %v2745 = vadd.f32 %v681, %v2744
        %2746 = vmatprep.mubr.bf16.mxu0 %v1159
        %2747 = vmatmul.mubr.bf16.gmra.mrb[0].mxu0 %v1158
        %v2748 = vpop.f32.mrb[0].mxu0
        %v2749 = vadd.f32 %v677, %v2748
        %v2750 = vpop.f32.mrb[0].mxu0
        %v2751 = vadd.f32 %v681, %v2750
        %v2752 = vpop.f32.mrb[0].mxu0
        %v2753 = vadd.f32 %v677, %v2752
        %v2754 = vpop.f32.mrb[0].mxu0
        %v2755 = vadd.f32 %v681, %v2754
        %2756 = vmatprep.mubr.bf16.mxu0 %v1167
        %2757 = vmatmul.mubr.bf16.gmra.mrb[0].mxu0 %v1166
        %v2758 = vpop.f32.mrb[0].mxu0
        %v2759 = vadd.f32 %v677, %v2758
        %v2760 = vpop.f32.mrb[0].mxu0
        %v2761 = vadd.f32 %v681, %v2760
        %v2762 = vpop.f32.mrb[0].mxu0
        %v2763 = vadd.f32 %v677, %v2762
        %v2764 = vpop.f32.mrb[0].mxu0
        %v2765 = vadd.f32 %v681, %v2764
        %2766 = vmatprep.mubr.bf16.mxu0 %v1175
        %2767 = vmatmul.mubr.bf16.gmra.mrb[0].mxu0 %v1174
        %v2768 = vpop.f32.mrb[0].mxu0
        %v2769 = vadd.f32 %v677, %v2768
        %v2770 = vpop.f32.mrb[0].mxu0
        %v2771 = vadd.f32 %v681, %v2770
        %v2772 = vpop.f32.mrb[0].mxu0
        %v2773 = vadd.f32 %v677, %v2772
        %v2774 = vpop.f32.mrb[0].mxu0
        %v2775 = vadd.f32 %v681, %v2774
        %2776 = vmatprep.mubr.bf16.mxu0 %v1183
        %2777 = vmatmul.mubr.bf16.gmra.mrb[0].mxu0 %v1182
        %v2778 = vpop.f32.mrb[0].mxu0
        %v2779 = vadd.f32 %v677, %v2778
        %v2780 = vpop.f32.mrb[0].mxu0
        %v2781 = vadd.f32 %v681, %v2780
        %v2782 = vpop.f32.mrb[0].mxu0
        %v2783 = vadd.f32 %v677, %v2782
        %v2784 = vpop.f32.mrb[0].mxu0
        %v2785 = vadd.f32 %v681, %v2784
        %2786 = vmatprep.mubr.bf16.mxu0 %v1191
        %2787 = vmatmul.mubr.bf16.gmra.mrb[0].mxu0 %v1190
        %v2788 = vpop.f32.mrb[0].mxu0
        %v2789 = vadd.f32 %v677, %v2788
        %v2790 = vpop.f32.mrb[0].mxu0
        %v2791 = vadd.f32 %v681, %v2790
        %v2792 = vpop.f32.mrb[0].mxu0
        %v2793 = vadd.f32 %v677, %v2792
        %v2794 = vpop.f32.mrb[0].mxu0
        %v2795 = vadd.f32 %v681, %v2794
        %2796 = vmatprep.mubr.bf16.mxu0 %v1199
        %2797 = vmatmul.mubr.bf16.gmra.mrb[0].mxu0 %v1198
        %v2798 = vpop.f32.mrb[0].mxu0
        %v2799 = vadd.f32 %v677, %v2798
        %v2800 = vpop.f32.mrb[0].mxu0
        %v2801 = vadd.f32 %v681, %v2800
        %v2802 = vpop.f32.mrb[0].mxu0
        %v2803 = vadd.f32 %v677, %v2802
        %v2804 = vpop.f32.mrb[0].mxu0
        %v2805 = vadd.f32 %v681, %v2804
        %2806 = vdwg.mxu0
        %2807 = vmatprep.subr.bf16.mxu0 %v2167
        %2808 = vmatpush1.bf16.msra.mxu0 %v2166
        %2809 = vmatprep.subr.bf16.mxu0 %v2171
        %2810 = vmatpush1.bf16.msra.mxu0 %v2170
        %2811 = vmatprep.subr.bf16.mxu0 %v2175
        %2812 = vmatpush1.bf16.msra.mxu0 %v2174
        %2813 = vmatprep.subr.bf16.mxu0 %v2179
        %2814 = vmatpush1.bf16.msra.mxu0 %v2178
        %2815 = vmatprep.subr.bf16.mxu0 %v2183
        %2816 = vmatpush1.bf16.msra.mxu0 %v2182
        %2817 = vmatprep.subr.bf16.mxu0 %v2187
        %2818 = vmatpush1.bf16.msra.mxu0 %v2186
        %2819 = vmatprep.subr.bf16.mxu0 %v2191
        %2820 = vmatpush1.bf16.msra.mxu0 %v2190
        %2821 = vmatprep.subr.bf16.mxu0 %v2195
        %2822 = vmatpush1.bf16.msra.mxu0 %v2194
        %2823 = vmatprep.subr.bf16.mxu0 %v2199
        %2824 = vmatpush1.bf16.msra.mxu0 %v2198
        %2825 = vmatprep.subr.bf16.mxu0 %v2203
        %2826 = vmatpush1.bf16.msra.mxu0 %v2202
        %2827 = vmatprep.subr.bf16.mxu0 %v2207
        %2828 = vmatpush1.bf16.msra.mxu0 %v2206
        %2829 = vmatprep.subr.bf16.mxu0 %v2211
        %2830 = vmatpush1.bf16.msra.mxu0 %v2210
        %2831 = vmatprep.subr.bf16.mxu0 %v2215
        %2832 = vmatpush1.bf16.msra.mxu0 %v2214
        %2833 = vmatprep.subr.bf16.mxu0 %v2219
        %2834 = vmatpush1.bf16.msra.mxu0 %v2218
        %2835 = vmatprep.subr.bf16.mxu0 %v2223
        %2836 = vmatpush1.bf16.msra.mxu0 %v2222
        %2837 = vmatprep.subr.bf16.mxu0 %v2227
        %2838 = vmatpush1.bf16.msra.mxu0 %v2226
        %2839 = vmatprep.mubr.bf16.mxu0 %v1081
        %2840 = vmatmul.mubr.bf16.gmra.mrb[0].mxu0 %v1080
        %v2841 = vpop.f32.mrb[0].mxu0
        %v2842 = vadd.f32 %v2649, %v2841
        %v2843 = vpop.f32.mrb[0].mxu0
        %v2844 = vadd.f32 %v2651, %v2843
        %v2845 = vpop.f32.mrb[0].mxu0
        %v2846 = vadd.f32 %v2653, %v2845
        %v2847 = vpop.f32.mrb[0].mxu0
        %v2848 = vadd.f32 %v2655, %v2847
        %2849 = vmatprep.mubr.bf16.mxu0 %v1089
        %2850 = vmatmul.mubr.bf16.gmra.mrb[0].mxu0 %v1088
        %v2851 = vpop.f32.mrb[0].mxu0
        %v2852 = vadd.f32 %v2659, %v2851
        %v2853 = vpop.f32.mrb[0].mxu0
        %v2854 = vadd.f32 %v2661, %v2853
        %v2855 = vpop.f32.mrb[0].mxu0
        %v2856 = vadd.f32 %v2663, %v2855
        %v2857 = vpop.f32.mrb[0].mxu0
        %v2858 = vadd.f32 %v2665, %v2857
        %2859 = vmatprep.mubr.bf16.mxu0 %v1097
        %2860 = vmatmul.mubr.bf16.gmra.mrb[0].mxu0 %v1096
        %v2861 = vpop.f32.mrb[0].mxu0
        %v2862 = vadd.f32 %v2669, %v2861
        %v2863 = vpop.f32.mrb[0].mxu0
        %v2864 = vadd.f32 %v2671, %v2863
        %v2865 = vpop.f32.mrb[0].mxu0
        %v2866 = vadd.f32 %v2673, %v2865
        %v2867 = vpop.f32.mrb[0].mxu0
        %v2868 = vadd.f32 %v2675, %v2867
        %2869 = vmatprep.mubr.bf16.mxu0 %v1105
        %2870 = vmatmul.mubr.bf16.gmra.mrb[0].mxu0 %v1104
        %v2871 = vpop.f32.mrb[0].mxu0
        %v2872 = vadd.f32 %v2679, %v2871
        %v2873 = vpop.f32.mrb[0].mxu0
        %v2874 = vadd.f32 %v2681, %v2873
        %v2875 = vpop.f32.mrb[0].mxu0
        %v2876 = vadd.f32 %v2683, %v2875
        %v2877 = vpop.f32.mrb[0].mxu0
        %v2878 = vadd.f32 %v2685, %v2877
        %2879 = vmatprep.mubr.bf16.mxu0 %v1113
        %2880 = vmatmul.mubr.bf16.gmra.mrb[0].mxu0 %v1112
        %v2881 = vpop.f32.mrb[0].mxu0
        %v2882 = vadd.f32 %v2689, %v2881
        %v2883 = vpop.f32.mrb[0].mxu0
        %v2884 = vadd.f32 %v2691, %v2883
        %v2885 = vpop.f32.mrb[0].mxu0
        %v2886 = vadd.f32 %v2693, %v2885
        %v2887 = vpop.f32.mrb[0].mxu0
        %v2888 = vadd.f32 %v2695, %v2887
        %2889 = vmatprep.mubr.bf16.mxu0 %v1121
        %2890 = vmatmul.mubr.bf16.gmra.mrb[0].mxu0 %v1120
        %v2891 = vpop.f32.mrb[0].mxu0
        %v2892 = vadd.f32 %v2699, %v2891
        %v2893 = vpop.f32.mrb[0].mxu0
        %v2894 = vadd.f32 %v2701, %v2893
        %v2895 = vpop.f32.mrb[0].mxu0
        %v2896 = vadd.f32 %v2703, %v2895
        %v2897 = vpop.f32.mrb[0].mxu0
        %v2898 = vadd.f32 %v2705, %v2897
        %2899 = vmatprep.mubr.bf16.mxu0 %v1129
        %2900 = vmatmul.mubr.bf16.gmra.mrb[0].mxu0 %v1128
        %v2901 = vpop.f32.mrb[0].mxu0
        %v2902 = vadd.f32 %v2709, %v2901
        %v2903 = vpop.f32.mrb[0].mxu0
        %v2904 = vadd.f32 %v2711, %v2903
        %v2905 = vpop.f32.mrb[0].mxu0
        %v2906 = vadd.f32 %v2713, %v2905
        %v2907 = vpop.f32.mrb[0].mxu0
        %v2908 = vadd.f32 %v2715, %v2907
        %2909 = vmatprep.mubr.bf16.mxu0 %v1137
        %2910 = vmatmul.mubr.bf16.gmra.mrb[0].mxu0 %v1136
        %v2911 = vpop.f32.mrb[0].mxu0
        %v2912 = vadd.f32 %v2719, %v2911
        %v2913 = vpop.f32.mrb[0].mxu0
        %v2914 = vadd.f32 %v2721, %v2913
        %v2915 = vpop.f32.mrb[0].mxu0
        %v2916 = vadd.f32 %v2723, %v2915
        %v2917 = vpop.f32.mrb[0].mxu0
        %v2918 = vadd.f32 %v2725, %v2917
        %2919 = vmatprep.mubr.bf16.mxu0 %v1145
        %2920 = vmatmul.mubr.bf16.gmra.mrb[0].mxu0 %v1144
        %v2921 = vpop.f32.mrb[0].mxu0
        %v2922 = vadd.f32 %v2729, %v2921
        %v2923 = vpop.f32.mrb[0].mxu0
        %v2924 = vadd.f32 %v2731, %v2923
        %v2925 = vpop.f32.mrb[0].mxu0
        %v2926 = vadd.f32 %v2733, %v2925
        %v2927 = vpop.f32.mrb[0].mxu0
        %v2928 = vadd.f32 %v2735, %v2927
        %2929 = vmatprep.mubr.bf16.mxu0 %v1153
        %2930 = vmatmul.mubr.bf16.gmra.mrb[0].mxu0 %v1152
        %v2931 = vpop.f32.mrb[0].mxu0
        %v2932 = vadd.f32 %v2739, %v2931
        %v2933 = vpop.f32.mrb[0].mxu0
        %v2934 = vadd.f32 %v2741, %v2933
        %v2935 = vpop.f32.mrb[0].mxu0
        %v2936 = vadd.f32 %v2743, %v2935
        %v2937 = vpop.f32.mrb[0].mxu0
        %v2938 = vadd.f32 %v2745, %v2937
        %2939 = vmatprep.mubr.bf16.mxu0 %v1161
        %2940 = vmatmul.mubr.bf16.gmra.mrb[0].mxu0 %v1160
        %v2941 = vpop.f32.mrb[0].mxu0
        %v2942 = vadd.f32 %v2749, %v2941
        %v2943 = vpop.f32.mrb[0].mxu0
        %v2944 = vadd.f32 %v2751, %v2943
        %v2945 = vpop.f32.mrb[0].mxu0
        %v2946 = vadd.f32 %v2753, %v2945
        %v2947 = vpop.f32.mrb[0].mxu0
        %v2948 = vadd.f32 %v2755, %v2947
        %2949 = vmatprep.mubr.bf16.mxu0 %v1169
        %2950 = vmatmul.mubr.bf16.gmra.mrb[0].mxu0 %v1168
        %v2951 = vpop.f32.mrb[0].mxu0
        %v2952 = vadd.f32 %v2759, %v2951
        %v2953 = vpop.f32.mrb[0].mxu0
        %v2954 = vadd.f32 %v2761, %v2953
        %v2955 = vpop.f32.mrb[0].mxu0
        %v2956 = vadd.f32 %v2763, %v2955
        %v2957 = vpop.f32.mrb[0].mxu0
        %v2958 = vadd.f32 %v2765, %v2957
        %2959 = vmatprep.mubr.bf16.mxu0 %v1177
        %2960 = vmatmul.mubr.bf16.gmra.mrb[0].mxu0 %v1176
        %v2961 = vpop.f32.mrb[0].mxu0
        %v2962 = vadd.f32 %v2769, %v2961
        %v2963 = vpop.f32.mrb[0].mxu0
        %v2964 = vadd.f32 %v2771, %v2963
        %v2965 = vpop.f32.mrb[0].mxu0
        %v2966 = vadd.f32 %v2773, %v2965
        %v2967 = vpop.f32.mrb[0].mxu0
        %v2968 = vadd.f32 %v2775, %v2967
        %2969 = vmatprep.mubr.bf16.mxu0 %v1185
        %2970 = vmatmul.mubr.bf16.gmra.mrb[0].mxu0 %v1184
        %v2971 = vpop.f32.mrb[0].mxu0
        %v2972 = vadd.f32 %v2779, %v2971
        %v2973 = vpop.f32.mrb[0].mxu0
        %v2974 = vadd.f32 %v2781, %v2973
        %v2975 = vpop.f32.mrb[0].mxu0
        %v2976 = vadd.f32 %v2783, %v2975
        %v2977 = vpop.f32.mrb[0].mxu0
        %v2978 = vadd.f32 %v2785, %v2977
        %2979 = vmatprep.mubr.bf16.mxu0 %v1193
        %2980 = vmatmul.mubr.bf16.gmra.mrb[0].mxu0 %v1192
        %v2981 = vpop.f32.mrb[0].mxu0
        %v2982 = vadd.f32 %v2789, %v2981
        %v2983 = vpop.f32.mrb[0].mxu0
        %v2984 = vadd.f32 %v2791, %v2983
        %v2985 = vpop.f32.mrb[0].mxu0
        %v2986 = vadd.f32 %v2793, %v2985
        %v2987 = vpop.f32.mrb[0].mxu0
        %v2988 = vadd.f32 %v2795, %v2987
        %2989 = vmatprep.mubr.bf16.mxu0 %v1201
        %2990 = vmatmul.mubr.bf16.gmra.mrb[0].mxu0 %v1200
        %v2991 = vpop.f32.mrb[0].mxu0
        %v2992 = vadd.f32 %v2799, %v2991
        %v2993 = vpop.f32.mrb[0].mxu0
        %v2994 = vadd.f32 %v2801, %v2993
        %v2995 = vpop.f32.mrb[0].mxu0
        %v2996 = vadd.f32 %v2803, %v2995
        %v2997 = vpop.f32.mrb[0].mxu0
        %v2998 = vadd.f32 %v2805, %v2997
        %2999 = vdwg.mxu0
        %3000 = vmatprep.subr.bf16.mxu0 %v2231
        %3001 = vmatpush1.bf16.msra.mxu0 %v2230
        %3002 = vmatprep.subr.bf16.mxu0 %v2235
        %3003 = vmatpush1.bf16.msra.mxu0 %v2234
        %3004 = vmatprep.subr.bf16.mxu0 %v2239
        %3005 = vmatpush1.bf16.msra.mxu0 %v2238
        %3006 = vmatprep.subr.bf16.mxu0 %v2243
        %3007 = vmatpush1.bf16.msra.mxu0 %v2242
        %3008 = vmatprep.subr.bf16.mxu0 %v2247
        %3009 = vmatpush1.bf16.msra.mxu0 %v2246
        %3010 = vmatprep.subr.bf16.mxu0 %v2251
        %3011 = vmatpush1.bf16.msra.mxu0 %v2250
        %3012 = vmatprep.subr.bf16.mxu0 %v2255
        %3013 = vmatpush1.bf16.msra.mxu0 %v2254
        %3014 = vmatprep.subr.bf16.mxu0 %v2259
        %3015 = vmatpush1.bf16.msra.mxu0 %v2258
        %3016 = vmatprep.subr.bf16.mxu0 %v2263
        %3017 = vmatpush1.bf16.msra.mxu0 %v2262
        %3018 = vmatprep.subr.bf16.mxu0 %v2267
        %3019 = vmatpush1.bf16.msra.mxu0 %v2266
        %3020 = vmatprep.subr.bf16.mxu0 %v2271
        %3021 = vmatpush1.bf16.msra.mxu0 %v2270
        %3022 = vmatprep.subr.bf16.mxu0 %v2275
        %3023 = vmatpush1.bf16.msra.mxu0 %v2274
        %3024 = vmatprep.subr.bf16.mxu0 %v2279
        %3025 = vmatpush1.bf16.msra.mxu0 %v2278
        %3026 = vmatprep.subr.bf16.mxu0 %v2283
        %3027 = vmatpush1.bf16.msra.mxu0 %v2282
        %3028 = vmatprep.subr.bf16.mxu0 %v2287
        %3029 = vmatpush1.bf16.msra.mxu0 %v2286
        %3030 = vmatprep.subr.bf16.mxu0 %v2291
        %3031 = vmatpush1.bf16.msra.mxu0 %v2290
        %3032 = vmatprep.mubr.bf16.mxu0 %v1083
        %3033 = vmatmul.mubr.bf16.gmra.mrb[0].mxu0 %v1082
        %v3034 = vpop.f32.mrb[0].mxu0
        %v3035 = vadd.f32 %v2842, %v3034
        %v3036 = vpop.f32.mrb[0].mxu0
        %v3037 = vadd.f32 %v2844, %v3036
        %v3038 = vpop.f32.mrb[0].mxu0
        %v3039 = vadd.f32 %v2846, %v3038
        %v3040 = vpop.f32.mrb[0].mxu0
        %v3041 = vadd.f32 %v2848, %v3040
        %3042 = vmatprep.mubr.bf16.mxu0 %v1091
        %3043 = vmatmul.mubr.bf16.gmra.mrb[0].mxu0 %v1090
        %v3044 = vpop.f32.mrb[0].mxu0
        %v3045 = vadd.f32 %v2852, %v3044
        %v3046 = vpop.f32.mrb[0].mxu0
        %v3047 = vadd.f32 %v2854, %v3046
        %v3048 = vpop.f32.mrb[0].mxu0
        %v3049 = vadd.f32 %v2856, %v3048
        %v3050 = vpop.f32.mrb[0].mxu0
        %v3051 = vadd.f32 %v2858, %v3050
        %3052 = vmatprep.mubr.bf16.mxu0 %v1099
        %3053 = vmatmul.mubr.bf16.gmra.mrb[0].mxu0 %v1098
        %v3054 = vpop.f32.mrb[0].mxu0
        %v3055 = vadd.f32 %v2862, %v3054
        %v3056 = vpop.f32.mrb[0].mxu0
        %v3057 = vadd.f32 %v2864, %v3056
        %v3058 = vpop.f32.mrb[0].mxu0
        %v3059 = vadd.f32 %v2866, %v3058
        %v3060 = vpop.f32.mrb[0].mxu0
        %v3061 = vadd.f32 %v2868, %v3060
        %3062 = vmatprep.mubr.bf16.mxu0 %v1107
        %3063 = vmatmul.mubr.bf16.gmra.mrb[0].mxu0 %v1106
        %v3064 = vpop.f32.mrb[0].mxu0
        %v3065 = vadd.f32 %v2872, %v3064
        %v3066 = vpop.f32.mrb[0].mxu0
        %v3067 = vadd.f32 %v2874, %v3066
        %v3068 = vpop.f32.mrb[0].mxu0
        %v3069 = vadd.f32 %v2876, %v3068
        %v3070 = vpop.f32.mrb[0].mxu0
        %v3071 = vadd.f32 %v2878, %v3070
        %3072 = vmatprep.mubr.bf16.mxu0 %v1115
        %3073 = vmatmul.mubr.bf16.gmra.mrb[0].mxu0 %v1114
        %v3074 = vpop.f32.mrb[0].mxu0
        %v3075 = vadd.f32 %v2882, %v3074
        %v3076 = vpop.f32.mrb[0].mxu0
        %v3077 = vadd.f32 %v2884, %v3076
        %v3078 = vpop.f32.mrb[0].mxu0
        %v3079 = vadd.f32 %v2886, %v3078
        %v3080 = vpop.f32.mrb[0].mxu0
        %v3081 = vadd.f32 %v2888, %v3080
        %3082 = vmatprep.mubr.bf16.mxu0 %v1123
        %3083 = vmatmul.mubr.bf16.gmra.mrb[0].mxu0 %v1122
        %v3084 = vpop.f32.mrb[0].mxu0
        %v3085 = vadd.f32 %v2892, %v3084
        %v3086 = vpop.f32.mrb[0].mxu0
        %v3087 = vadd.f32 %v2894, %v3086
        %v3088 = vpop.f32.mrb[0].mxu0
        %v3089 = vadd.f32 %v2896, %v3088
        %v3090 = vpop.f32.mrb[0].mxu0
        %v3091 = vadd.f32 %v2898, %v3090
        %3092 = vmatprep.mubr.bf16.mxu0 %v1131
        %3093 = vmatmul.mubr.bf16.gmra.mrb[0].mxu0 %v1130
        %v3094 = vpop.f32.mrb[0].mxu0
        %v3095 = vadd.f32 %v2902, %v3094
        %v3096 = vpop.f32.mrb[0].mxu0
        %v3097 = vadd.f32 %v2904, %v3096
        %v3098 = vpop.f32.mrb[0].mxu0
        %v3099 = vadd.f32 %v2906, %v3098
        %v3100 = vpop.f32.mrb[0].mxu0
        %v3101 = vadd.f32 %v2908, %v3100
        %3102 = vmatprep.mubr.bf16.mxu0 %v1139
        %3103 = vmatmul.mubr.bf16.gmra.mrb[0].mxu0 %v1138
        %v3104 = vpop.f32.mrb[0].mxu0
        %v3105 = vadd.f32 %v2912, %v3104
        %v3106 = vpop.f32.mrb[0].mxu0
        %v3107 = vadd.f32 %v2914, %v3106
        %v3108 = vpop.f32.mrb[0].mxu0
        %v3109 = vadd.f32 %v2916, %v3108
        %v3110 = vpop.f32.mrb[0].mxu0
        %v3111 = vadd.f32 %v2918, %v3110
        %3112 = vmatprep.mubr.bf16.mxu0 %v1147
        %3113 = vmatmul.mubr.bf16.gmra.mrb[0].mxu0 %v1146
        %v3114 = vpop.f32.mrb[0].mxu0
        %v3115 = vadd.f32 %v2922, %v3114
        %v3116 = vpop.f32.mrb[0].mxu0
        %v3117 = vadd.f32 %v2924, %v3116
        %v3118 = vpop.f32.mrb[0].mxu0
        %v3119 = vadd.f32 %v2926, %v3118
        %v3120 = vpop.f32.mrb[0].mxu0
        %v3121 = vadd.f32 %v2928, %v3120
        %3122 = vmatprep.mubr.bf16.mxu0 %v1155
        %3123 = vmatmul.mubr.bf16.gmra.mrb[0].mxu0 %v1154
        %v3124 = vpop.f32.mrb[0].mxu0
        %v3125 = vadd.f32 %v2932, %v3124
        %v3126 = vpop.f32.mrb[0].mxu0
        %v3127 = vadd.f32 %v2934, %v3126
        %v3128 = vpop.f32.mrb[0].mxu0
        %v3129 = vadd.f32 %v2936, %v3128
        %v3130 = vpop.f32.mrb[0].mxu0
        %v3131 = vadd.f32 %v2938, %v3130
        %3132 = vmatprep.mubr.bf16.mxu0 %v1163
        %3133 = vmatmul.mubr.bf16.gmra.mrb[0].mxu0 %v1162
        %v3134 = vpop.f32.mrb[0].mxu0
        %v3135 = vadd.f32 %v2942, %v3134
        %v3136 = vpop.f32.mrb[0].mxu0
        %v3137 = vadd.f32 %v2944, %v3136
        %v3138 = vpop.f32.mrb[0].mxu0
        %v3139 = vadd.f32 %v2946, %v3138
        %v3140 = vpop.f32.mrb[0].mxu0
        %v3141 = vadd.f32 %v2948, %v3140
        %3142 = vmatprep.mubr.bf16.mxu0 %v1171
        %3143 = vmatmul.mubr.bf16.gmra.mrb[0].mxu0 %v1170
        %v3144 = vpop.f32.mrb[0].mxu0
        %v3145 = vadd.f32 %v2952, %v3144
        %v3146 = vpop.f32.mrb[0].mxu0
        %v3147 = vadd.f32 %v2954, %v3146
        %v3148 = vpop.f32.mrb[0].mxu0
        %v3149 = vadd.f32 %v2956, %v3148
        %v3150 = vpop.f32.mrb[0].mxu0
        %v3151 = vadd.f32 %v2958, %v3150
        %3152 = vmatprep.mubr.bf16.mxu0 %v1179
        %3153 = vmatmul.mubr.bf16.gmra.mrb[0].mxu0 %v1178
        %v3154 = vpop.f32.mrb[0].mxu0
        %v3155 = vadd.f32 %v2962, %v3154
        %v3156 = vpop.f32.mrb[0].mxu0
        %v3157 = vadd.f32 %v2964, %v3156
        %v3158 = vpop.f32.mrb[0].mxu0
        %v3159 = vadd.f32 %v2966, %v3158
        %v3160 = vpop.f32.mrb[0].mxu0
        %v3161 = vadd.f32 %v2968, %v3160
        %3162 = vmatprep.mubr.bf16.mxu0 %v1187
        %3163 = vmatmul.mubr.bf16.gmra.mrb[0].mxu0 %v1186
        %v3164 = vpop.f32.mrb[0].mxu0
        %v3165 = vadd.f32 %v2972, %v3164
        %v3166 = vpop.f32.mrb[0].mxu0
        %v3167 = vadd.f32 %v2974, %v3166
        %v3168 = vpop.f32.mrb[0].mxu0
        %v3169 = vadd.f32 %v2976, %v3168
        %v3170 = vpop.f32.mrb[0].mxu0
        %v3171 = vadd.f32 %v2978, %v3170
        %3172 = vmatprep.mubr.bf16.mxu0 %v1195
        %3173 = vmatmul.mubr.bf16.gmra.mrb[0].mxu0 %v1194
        %v3174 = vpop.f32.mrb[0].mxu0
        %v3175 = vadd.f32 %v2982, %v3174
        %v3176 = vpop.f32.mrb[0].mxu0
        %v3177 = vadd.f32 %v2984, %v3176
        %v3178 = vpop.f32.mrb[0].mxu0
        %v3179 = vadd.f32 %v2986, %v3178
        %v3180 = vpop.f32.mrb[0].mxu0
        %v3181 = vadd.f32 %v2988, %v3180
        %3182 = vmatprep.mubr.bf16.mxu0 %v1203
        %3183 = vmatmul.mubr.bf16.gmra.mrb[0].mxu0 %v1202
        %v3184 = vpop.f32.mrb[0].mxu0
        %v3185 = vadd.f32 %v2992, %v3184
        %v3186 = vpop.f32.mrb[0].mxu0
        %v3187 = vadd.f32 %v2994, %v3186
        %v3188 = vpop.f32.mrb[0].mxu0
        %v3189 = vadd.f32 %v2996, %v3188
        %v3190 = vpop.f32.mrb[0].mxu0
        %v3191 = vadd.f32 %v2998, %v3190
        %3192 = vdwg.mxu0
        %3193 = vmatprep.subr.bf16.mxu0 %v2295
        %3194 = vmatpush1.bf16.msra.mxu0 %v2294
        %3195 = vmatprep.subr.bf16.mxu0 %v2299
        %3196 = vmatpush1.bf16.msra.mxu0 %v2298
        %3197 = vmatprep.subr.bf16.mxu0 %v2303
        %3198 = vmatpush1.bf16.msra.mxu0 %v2302
        %3199 = vmatprep.subr.bf16.mxu0 %v2307
        %3200 = vmatpush1.bf16.msra.mxu0 %v2306
        %3201 = vmatprep.subr.bf16.mxu0 %v2311
        %3202 = vmatpush1.bf16.msra.mxu0 %v2310
        %3203 = vmatprep.subr.bf16.mxu0 %v2315
        %3204 = vmatpush1.bf16.msra.mxu0 %v2314
        %3205 = vmatprep.subr.bf16.mxu0 %v2319
        %3206 = vmatpush1.bf16.msra.mxu0 %v2318
        %3207 = vmatprep.subr.bf16.mxu0 %v2323
        %3208 = vmatpush1.bf16.msra.mxu0 %v2322
        %3209 = vmatprep.subr.bf16.mxu0 %v2327
        %3210 = vmatpush1.bf16.msra.mxu0 %v2326
        %3211 = vmatprep.subr.bf16.mxu0 %v2331
        %3212 = vmatpush1.bf16.msra.mxu0 %v2330
        %3213 = vmatprep.subr.bf16.mxu0 %v2335
        %3214 = vmatpush1.bf16.msra.mxu0 %v2334
        %3215 = vmatprep.subr.bf16.mxu0 %v2339
        %3216 = vmatpush1.bf16.msra.mxu0 %v2338
        %3217 = vmatprep.subr.bf16.mxu0 %v2343
        %3218 = vmatpush1.bf16.msra.mxu0 %v2342
        %3219 = vmatprep.subr.bf16.mxu0 %v2347
        %3220 = vmatpush1.bf16.msra.mxu0 %v2346
        %3221 = vmatprep.subr.bf16.mxu0 %v2351
        %3222 = vmatpush1.bf16.msra.mxu0 %v2350
        %3223 = vmatprep.subr.bf16.mxu0 %v2355
        %3224 = vmatpush1.bf16.msra.mxu0 %v2354
        %3225 = vmatprep.mubr.bf16.mxu0 %v1085
        %3226 = vmatmul.mubr.bf16.gmra.mrb[0].mxu0 %v1084
        %v3227 = vpop.f32.mrb[0].mxu0
        %v3228 = vadd.f32 %v3035, %v3227
        %v3229 = vpop.f32.mrb[0].mxu0
        %v3230 = vadd.f32 %v3037, %v3229
        %v3231 = vpop.f32.mrb[0].mxu0
        %v3232 = vadd.f32 %v3039, %v3231
        %v3233 = vpop.f32.mrb[0].mxu0
        %v3234 = vadd.f32 %v3041, %v3233
        %3235 = vmatprep.mubr.bf16.mxu0 %v1093
        %3236 = vmatmul.mubr.bf16.gmra.mrb[0].mxu0 %v1092
        %v3237 = vpop.f32.mrb[0].mxu0
        %v3238 = vadd.f32 %v3045, %v3237
        %v3239 = vpop.f32.mrb[0].mxu0
        %v3240 = vadd.f32 %v3047, %v3239
        %v3241 = vpop.f32.mrb[0].mxu0
        %v3242 = vadd.f32 %v3049, %v3241
        %v3243 = vpop.f32.mrb[0].mxu0
        %v3244 = vadd.f32 %v3051, %v3243
        %3245 = vmatprep.mubr.bf16.mxu0 %v1101
        %3246 = vmatmul.mubr.bf16.gmra.mrb[0].mxu0 %v1100
        %v3247 = vpop.f32.mrb[0].mxu0
        %v3248 = vadd.f32 %v3055, %v3247
        %v3249 = vpop.f32.mrb[0].mxu0
        %v3250 = vadd.f32 %v3057, %v3249
        %v3251 = vpop.f32.mrb[0].mxu0
        %v3252 = vadd.f32 %v3059, %v3251
        %v3253 = vpop.f32.mrb[0].mxu0
        %v3254 = vadd.f32 %v3061, %v3253
        %3255 = vmatprep.mubr.bf16.mxu0 %v1109
        %3256 = vmatmul.mubr.bf16.gmra.mrb[0].mxu0 %v1108
        %v3257 = vpop.f32.mrb[0].mxu0
        %v3258 = vadd.f32 %v3065, %v3257
        %v3259 = vpop.f32.mrb[0].mxu0
        %v3260 = vadd.f32 %v3067, %v3259
        %v3261 = vpop.f32.mrb[0].mxu0
        %v3262 = vadd.f32 %v3069, %v3261
        %v3263 = vpop.f32.mrb[0].mxu0
        %v3264 = vadd.f32 %v3071, %v3263
        %3265 = vmatprep.mubr.bf16.mxu0 %v1117
        %3266 = vmatmul.mubr.bf16.gmra.mrb[0].mxu0 %v1116
        %v3267 = vpop.f32.mrb[0].mxu0
        %v3268 = vadd.f32 %v3075, %v3267
        %v3269 = vpop.f32.mrb[0].mxu0
        %v3270 = vadd.f32 %v3077, %v3269
        %v3271 = vpop.f32.mrb[0].mxu0
        %v3272 = vadd.f32 %v3079, %v3271
        %v3273 = vpop.f32.mrb[0].mxu0
        %v3274 = vadd.f32 %v3081, %v3273
        %3275 = vmatprep.mubr.bf16.mxu0 %v1125
        %3276 = vmatmul.mubr.bf16.gmra.mrb[0].mxu0 %v1124
        %v3277 = vpop.f32.mrb[0].mxu0
        %v3278 = vadd.f32 %v3085, %v3277
        %v3279 = vpop.f32.mrb[0].mxu0
        %v3280 = vadd.f32 %v3087, %v3279
        %v3281 = vpop.f32.mrb[0].mxu0
        %v3282 = vadd.f32 %v3089, %v3281
        %v3283 = vpop.f32.mrb[0].mxu0
        %v3284 = vadd.f32 %v3091, %v3283
        %3285 = vmatprep.mubr.bf16.mxu0 %v1133
        %3286 = vmatmul.mubr.bf16.gmra.mrb[0].mxu0 %v1132
        %v3287 = vpop.f32.mrb[0].mxu0
        %v3288 = vadd.f32 %v3095, %v3287
        %v3289 = vpop.f32.mrb[0].mxu0
        %v3290 = vadd.f32 %v3097, %v3289
        %v3291 = vpop.f32.mrb[0].mxu0
        %v3292 = vadd.f32 %v3099, %v3291
        %v3293 = vpop.f32.mrb[0].mxu0
        %v3294 = vadd.f32 %v3101, %v3293
        %3295 = vmatprep.mubr.bf16.mxu0 %v1141
        %3296 = vmatmul.mubr.bf16.gmra.mrb[0].mxu0 %v1140
        %v3297 = vpop.f32.mrb[0].mxu0
        %v3298 = vadd.f32 %v3105, %v3297
        %v3299 = vpop.f32.mrb[0].mxu0
        %v3300 = vadd.f32 %v3107, %v3299
        %v3301 = vpop.f32.mrb[0].mxu0
        %v3302 = vadd.f32 %v3109, %v3301
        %v3303 = vpop.f32.mrb[0].mxu0
        %v3304 = vadd.f32 %v3111, %v3303
        %3305 = vmatprep.mubr.bf16.mxu0 %v1149
        %3306 = vmatmul.mubr.bf16.gmra.mrb[0].mxu0 %v1148
        %v3307 = vpop.f32.mrb[0].mxu0
        %v3308 = vadd.f32 %v3115, %v3307
        %v3309 = vpop.f32.mrb[0].mxu0
        %v3310 = vadd.f32 %v3117, %v3309
        %v3311 = vpop.f32.mrb[0].mxu0
        %v3312 = vadd.f32 %v3119, %v3311
        %v3313 = vpop.f32.mrb[0].mxu0
        %v3314 = vadd.f32 %v3121, %v3313
        %3315 = vmatprep.mubr.bf16.mxu0 %v1157
        %3316 = vmatmul.mubr.bf16.gmra.mrb[0].mxu0 %v1156
        %v3317 = vpop.f32.mrb[0].mxu0
        %v3318 = vadd.f32 %v3125, %v3317
        %v3319 = vpop.f32.mrb[0].mxu0
        %v3320 = vadd.f32 %v3127, %v3319
        %v3321 = vpop.f32.mrb[0].mxu0
        %v3322 = vadd.f32 %v3129, %v3321
        %v3323 = vpop.f32.mrb[0].mxu0
        %v3324 = vadd.f32 %v3131, %v3323
        %3325 = vmatprep.mubr.bf16.mxu0 %v1165
        %3326 = vmatmul.mubr.bf16.gmra.mrb[0].mxu0 %v1164
        %v3327 = vpop.f32.mrb[0].mxu0
        %v3328 = vadd.f32 %v3135, %v3327
        %v3329 = vpop.f32.mrb[0].mxu0
        %v3330 = vadd.f32 %v3137, %v3329
        %v3331 = vpop.f32.mrb[0].mxu0
        %v3332 = vadd.f32 %v3139, %v3331
        %v3333 = vpop.f32.mrb[0].mxu0
        %v3334 = vadd.f32 %v3141, %v3333
        %3335 = vmatprep.mubr.bf16.mxu0 %v1173
        %3336 = vmatmul.mubr.bf16.gmra.mrb[0].mxu0 %v1172
        %v3337 = vpop.f32.mrb[0].mxu0
        %v3338 = vadd.f32 %v3145, %v3337
        %v3339 = vpop.f32.mrb[0].mxu0
        %v3340 = vadd.f32 %v3147, %v3339
        %v3341 = vpop.f32.mrb[0].mxu0
        %v3342 = vadd.f32 %v3149, %v3341
        %v3343 = vpop.f32.mrb[0].mxu0
        %v3344 = vadd.f32 %v3151, %v3343
        %3345 = vmatprep.mubr.bf16.mxu0 %v1181
        %3346 = vmatmul.mubr.bf16.gmra.mrb[0].mxu0 %v1180
        %v3347 = vpop.f32.mrb[0].mxu0
        %v3348 = vadd.f32 %v3155, %v3347
        %v3349 = vpop.f32.mrb[0].mxu0
        %v3350 = vadd.f32 %v3157, %v3349
        %v3351 = vpop.f32.mrb[0].mxu0
        %v3352 = vadd.f32 %v3159, %v3351
        %v3353 = vpop.f32.mrb[0].mxu0
        %v3354 = vadd.f32 %v3161, %v3353
        %3355 = vmatprep.mubr.bf16.mxu0 %v1189
        %3356 = vmatmul.mubr.bf16.gmra.mrb[0].mxu0 %v1188
        %v3357 = vpop.f32.mrb[0].mxu0
        %v3358 = vadd.f32 %v3165, %v3357
        %v3359 = vpop.f32.mrb[0].mxu0
        %v3360 = vadd.f32 %v3167, %v3359
        %v3361 = vpop.f32.mrb[0].mxu0
        %v3362 = vadd.f32 %v3169, %v3361
        %v3363 = vpop.f32.mrb[0].mxu0
        %v3364 = vadd.f32 %v3171, %v3363
        %3365 = vmatprep.mubr.bf16.mxu0 %v1197
        %3366 = vmatmul.mubr.bf16.gmra.mrb[0].mxu0 %v1196
        %v3367 = vpop.f32.mrb[0].mxu0
        %v3368 = vadd.f32 %v3175, %v3367
        %v3369 = vpop.f32.mrb[0].mxu0
        %v3370 = vadd.f32 %v3177, %v3369
        %v3371 = vpop.f32.mrb[0].mxu0
        %v3372 = vadd.f32 %v3179, %v3371
        %v3373 = vpop.f32.mrb[0].mxu0
        %v3374 = vadd.f32 %v3181, %v3373
        %3375 = vmatprep.mubr.bf16.mxu0 %v1205
        %3376 = vmatmul.mubr.bf16.gmra.mrb[0].mxu0 %v1204
        %v3377 = vpop.f32.mrb[0].mxu0
        %v3378 = vadd.f32 %v3185, %v3377
        %v3379 = vpop.f32.mrb[0].mxu0
        %v3380 = vadd.f32 %v3187, %v3379
        %v3381 = vpop.f32.mrb[0].mxu0
        %v3382 = vadd.f32 %v3189, %v3381
        %v3383 = vpop.f32.mrb[0].mxu0
        %v3384 = vadd.f32 %v3191, %v3383
        %3385 = vdwg.mxu0
        %3386 = vmatprep.subr.bf16.mxu0 %v2105
        %3387 = vmatpush1.bf16.msra.mxu0 %v2104
        %3388 = vmatprep.subr.bf16.mxu0 %v2109
        %3389 = vmatpush1.bf16.msra.mxu0 %v2108
        %3390 = vmatprep.subr.bf16.mxu0 %v2113
        %3391 = vmatpush1.bf16.msra.mxu0 %v2112
        %3392 = vmatprep.subr.bf16.mxu0 %v2117
        %3393 = vmatpush1.bf16.msra.mxu0 %v2116
        %3394 = vmatprep.subr.bf16.mxu0 %v2121
        %3395 = vmatpush1.bf16.msra.mxu0 %v2120
        %3396 = vmatprep.subr.bf16.mxu0 %v2125
        %3397 = vmatpush1.bf16.msra.mxu0 %v2124
        %3398 = vmatprep.subr.bf16.mxu0 %v2129
        %3399 = vmatpush1.bf16.msra.mxu0 %v2128
        %3400 = vmatprep.subr.bf16.mxu0 %v2133
        %3401 = vmatpush1.bf16.msra.mxu0 %v2132
        %3402 = vmatprep.subr.bf16.mxu0 %v2137
        %3403 = vmatpush1.bf16.msra.mxu0 %v2136
        %3404 = vmatprep.subr.bf16.mxu0 %v2141
        %3405 = vmatpush1.bf16.msra.mxu0 %v2140
        %3406 = vmatprep.subr.bf16.mxu0 %v2145
        %3407 = vmatpush1.bf16.msra.mxu0 %v2144
        %3408 = vmatprep.subr.bf16.mxu0 %v2149
        %3409 = vmatpush1.bf16.msra.mxu0 %v2148
        %3410 = vmatprep.subr.bf16.mxu0 %v2153
        %3411 = vmatpush1.bf16.msra.mxu0 %v2152
        %3412 = vmatprep.subr.bf16.mxu0 %v2157
        %3413 = vmatpush1.bf16.msra.mxu0 %v2156
        %3414 = vmatprep.subr.bf16.mxu0 %v2161
        %3415 = vmatpush1.bf16.msra.mxu0 %v2160
        %3416 = vmatprep.subr.bf16.mxu0 %v2165
        %3417 = vmatpush1.bf16.msra.mxu0 %v2164
        %3418 = vmatprep.mubr.bf16.mxu0 %v1079
        %3419 = vmatmul.mubr.bf16.gmra.mrb[0].mxu0 %v1078
        %v3420 = vpop.f32.mrb[0].mxu0
        %v3421 = vadd.f32 %v685, %v3420
        %v3422 = vpop.f32.mrb[0].mxu0
        %v3423 = vadd.f32 %v689, %v3422
        %v3424 = vpop.f32.mrb[0].mxu0
        %v3425 = vadd.f32 %v685, %v3424
        %v3426 = vpop.f32.mrb[0].mxu0
        %v3427 = vadd.f32 %v689, %v3426
        %3428 = vmatprep.mubr.bf16.mxu0 %v1087
        %3429 = vmatmul.mubr.bf16.gmra.mrb[0].mxu0 %v1086
        %v3430 = vpop.f32.mrb[0].mxu0
        %v3431 = vadd.f32 %v685, %v3430
        %v3432 = vpop.f32.mrb[0].mxu0
        %v3433 = vadd.f32 %v689, %v3432
        %v3434 = vpop.f32.mrb[0].mxu0
        %v3435 = vadd.f32 %v685, %v3434
        %v3436 = vpop.f32.mrb[0].mxu0
        %v3437 = vadd.f32 %v689, %v3436
        %3438 = vmatprep.mubr.bf16.mxu0 %v1095
        %3439 = vmatmul.mubr.bf16.gmra.mrb[0].mxu0 %v1094
        %v3440 = vpop.f32.mrb[0].mxu0
        %v3441 = vadd.f32 %v685, %v3440
        %v3442 = vpop.f32.mrb[0].mxu0
        %v3443 = vadd.f32 %v689, %v3442
        %v3444 = vpop.f32.mrb[0].mxu0
        %v3445 = vadd.f32 %v685, %v3444
        %v3446 = vpop.f32.mrb[0].mxu0
        %v3447 = vadd.f32 %v689, %v3446
        %3448 = vmatprep.mubr.bf16.mxu0 %v1103
        %3449 = vmatmul.mubr.bf16.gmra.mrb[0].mxu0 %v1102
        %v3450 = vpop.f32.mrb[0].mxu0
        %v3451 = vadd.f32 %v685, %v3450
        %v3452 = vpop.f32.mrb[0].mxu0
        %v3453 = vadd.f32 %v689, %v3452
        %v3454 = vpop.f32.mrb[0].mxu0
        %v3455 = vadd.f32 %v685, %v3454
        %v3456 = vpop.f32.mrb[0].mxu0
        %v3457 = vadd.f32 %v689, %v3456
        %3458 = vmatprep.mubr.bf16.mxu0 %v1111
        %3459 = vmatmul.mubr.bf16.gmra.mrb[0].mxu0 %v1110
        %v3460 = vpop.f32.mrb[0].mxu0
        %v3461 = vadd.f32 %v685, %v3460
        %v3462 = vpop.f32.mrb[0].mxu0
        %v3463 = vadd.f32 %v689, %v3462
        %v3464 = vpop.f32.mrb[0].mxu0
        %v3465 = vadd.f32 %v685, %v3464
        %v3466 = vpop.f32.mrb[0].mxu0
        %v3467 = vadd.f32 %v689, %v3466
        %3468 = vmatprep.mubr.bf16.mxu0 %v1119
        %3469 = vmatmul.mubr.bf16.gmra.mrb[0].mxu0 %v1118
        %v3470 = vpop.f32.mrb[0].mxu0
        %v3471 = vadd.f32 %v685, %v3470
        %v3472 = vpop.f32.mrb[0].mxu0
        %v3473 = vadd.f32 %v689, %v3472
        %v3474 = vpop.f32.mrb[0].mxu0
        %v3475 = vadd.f32 %v685, %v3474
        %v3476 = vpop.f32.mrb[0].mxu0
        %v3477 = vadd.f32 %v689, %v3476
        %3478 = vmatprep.mubr.bf16.mxu0 %v1127
        %3479 = vmatmul.mubr.bf16.gmra.mrb[0].mxu0 %v1126
        %v3480 = vpop.f32.mrb[0].mxu0
        %v3481 = vadd.f32 %v685, %v3480
        %v3482 = vpop.f32.mrb[0].mxu0
        %v3483 = vadd.f32 %v689, %v3482
        %v3484 = vpop.f32.mrb[0].mxu0
        %v3485 = vadd.f32 %v685, %v3484
        %v3486 = vpop.f32.mrb[0].mxu0
        %v3487 = vadd.f32 %v689, %v3486
        %3488 = vmatprep.mubr.bf16.mxu0 %v1135
        %3489 = vmatmul.mubr.bf16.gmra.mrb[0].mxu0 %v1134
        %v3490 = vpop.f32.mrb[0].mxu0
        %v3491 = vadd.f32 %v685, %v3490
        %v3492 = vpop.f32.mrb[0].mxu0
        %v3493 = vadd.f32 %v689, %v3492
        %v3494 = vpop.f32.mrb[0].mxu0
        %v3495 = vadd.f32 %v685, %v3494
        %v3496 = vpop.f32.mrb[0].mxu0
        %v3497 = vadd.f32 %v689, %v3496
        %3498 = vmatprep.mubr.bf16.mxu0 %v1143
        %3499 = vmatmul.mubr.bf16.gmra.mrb[0].mxu0 %v1142
        %v3500 = vpop.f32.mrb[0].mxu0
        %v3501 = vadd.f32 %v685, %v3500
        %v3502 = vpop.f32.mrb[0].mxu0
        %v3503 = vadd.f32 %v689, %v3502
        %v3504 = vpop.f32.mrb[0].mxu0
        %v3505 = vadd.f32 %v685, %v3504
        %v3506 = vpop.f32.mrb[0].mxu0
        %v3507 = vadd.f32 %v689, %v3506
        %3508 = vmatprep.mubr.bf16.mxu0 %v1151
        %3509 = vmatmul.mubr.bf16.gmra.mrb[0].mxu0 %v1150
        %v3510 = vpop.f32.mrb[0].mxu0
        %v3511 = vadd.f32 %v685, %v3510
        %v3512 = vpop.f32.mrb[0].mxu0
        %v3513 = vadd.f32 %v689, %v3512
        %v3514 = vpop.f32.mrb[0].mxu0
        %v3515 = vadd.f32 %v685, %v3514
        %v3516 = vpop.f32.mrb[0].mxu0
        %v3517 = vadd.f32 %v689, %v3516
        %3518 = vmatprep.mubr.bf16.mxu0 %v1159
        %3519 = vmatmul.mubr.bf16.gmra.mrb[0].mxu0 %v1158
        %v3520 = vpop.f32.mrb[0].mxu0
        %v3521 = vadd.f32 %v685, %v3520
        %v3522 = vpop.f32.mrb[0].mxu0
        %v3523 = vadd.f32 %v689, %v3522
        %v3524 = vpop.f32.mrb[0].mxu0
        %v3525 = vadd.f32 %v685, %v3524
        %v3526 = vpop.f32.mrb[0].mxu0
        %v3527 = vadd.f32 %v689, %v3526
        %3528 = vmatprep.mubr.bf16.mxu0 %v1167
        %3529 = vmatmul.mubr.bf16.gmra.mrb[0].mxu0 %v1166
        %v3530 = vpop.f32.mrb[0].mxu0
        %v3531 = vadd.f32 %v685, %v3530
        %v3532 = vpop.f32.mrb[0].mxu0
        %v3533 = vadd.f32 %v689, %v3532
        %v3534 = vpop.f32.mrb[0].mxu0
        %v3535 = vadd.f32 %v685, %v3534
        %v3536 = vpop.f32.mrb[0].mxu0
        %v3537 = vadd.f32 %v689, %v3536
        %3538 = vmatprep.mubr.bf16.mxu0 %v1175
        %3539 = vmatmul.mubr.bf16.gmra.mrb[0].mxu0 %v1174
        %v3540 = vpop.f32.mrb[0].mxu0
        %v3541 = vadd.f32 %v685, %v3540
        %v3542 = vpop.f32.mrb[0].mxu0
        %v3543 = vadd.f32 %v689, %v3542
        %v3544 = vpop.f32.mrb[0].mxu0
        %v3545 = vadd.f32 %v685, %v3544
        %v3546 = vpop.f32.mrb[0].mxu0
        %v3547 = vadd.f32 %v689, %v3546
        %3548 = vmatprep.mubr.bf16.mxu0 %v1183
        %3549 = vmatmul.mubr.bf16.gmra.mrb[0].mxu0 %v1182
        %v3550 = vpop.f32.mrb[0].mxu0
        %v3551 = vadd.f32 %v685, %v3550
        %v3552 = vpop.f32.mrb[0].mxu0
        %v3553 = vadd.f32 %v689, %v3552
        %v3554 = vpop.f32.mrb[0].mxu0
        %v3555 = vadd.f32 %v685, %v3554
        %v3556 = vpop.f32.mrb[0].mxu0
        %v3557 = vadd.f32 %v689, %v3556
        %3558 = vmatprep.mubr.bf16.mxu0 %v1191
        %3559 = vmatmul.mubr.bf16.gmra.mrb[0].mxu0 %v1190
        %v3560 = vpop.f32.mrb[0].mxu0
        %v3561 = vadd.f32 %v685, %v3560
        %v3562 = vpop.f32.mrb[0].mxu0
        %v3563 = vadd.f32 %v689, %v3562
        %v3564 = vpop.f32.mrb[0].mxu0
        %v3565 = vadd.f32 %v685, %v3564
        %v3566 = vpop.f32.mrb[0].mxu0
        %v3567 = vadd.f32 %v689, %v3566
        %3568 = vmatprep.mubr.bf16.mxu0 %v1199
        %3569 = vmatmul.mubr.bf16.gmra.mrb[0].mxu0 %v1198
        %v3570 = vpop.f32.mrb[0].mxu0
        %v3571 = vadd.f32 %v685, %v3570
        %v3572 = vpop.f32.mrb[0].mxu0
        %v3573 = vadd.f32 %v689, %v3572
        %v3574 = vpop.f32.mrb[0].mxu0
        %v3575 = vadd.f32 %v685, %v3574
        %v3576 = vpop.f32.mrb[0].mxu0
        %v3577 = vadd.f32 %v689, %v3576
        %3578 = vdwg.mxu0
        %3579 = vmatprep.subr.bf16.mxu0 %v2169
        %3580 = vmatpush1.bf16.msra.mxu0 %v2168
        %3581 = vmatprep.subr.bf16.mxu0 %v2173
        %3582 = vmatpush1.bf16.msra.mxu0 %v2172
        %3583 = vmatprep.subr.bf16.mxu0 %v2177
        %3584 = vmatpush1.bf16.msra.mxu0 %v2176
        %3585 = vmatprep.subr.bf16.mxu0 %v2181
        %3586 = vmatpush1.bf16.msra.mxu0 %v2180
        %3587 = vmatprep.subr.bf16.mxu0 %v2185
        %3588 = vmatpush1.bf16.msra.mxu0 %v2184
        %3589 = vmatprep.subr.bf16.mxu0 %v2189
        %3590 = vmatpush1.bf16.msra.mxu0 %v2188
        %3591 = vmatprep.subr.bf16.mxu0 %v2193
        %3592 = vmatpush1.bf16.msra.mxu0 %v2192
        %3593 = vmatprep.subr.bf16.mxu0 %v2197
        %3594 = vmatpush1.bf16.msra.mxu0 %v2196
        %3595 = vmatprep.subr.bf16.mxu0 %v2201
        %3596 = vmatpush1.bf16.msra.mxu0 %v2200
        %3597 = vmatprep.subr.bf16.mxu0 %v2205
        %3598 = vmatpush1.bf16.msra.mxu0 %v2204
        %3599 = vmatprep.subr.bf16.mxu0 %v2209
        %3600 = vmatpush1.bf16.msra.mxu0 %v2208
        %3601 = vmatprep.subr.bf16.mxu0 %v2213
        %3602 = vmatpush1.bf16.msra.mxu0 %v2212
        %3603 = vmatprep.subr.bf16.mxu0 %v2217
        %3604 = vmatpush1.bf16.msra.mxu0 %v2216
        %3605 = vmatprep.subr.bf16.mxu0 %v2221
        %3606 = vmatpush1.bf16.msra.mxu0 %v2220
        %3607 = vmatprep.subr.bf16.mxu0 %v2225
        %3608 = vmatpush1.bf16.msra.mxu0 %v2224
        %3609 = vmatprep.subr.bf16.mxu0 %v2229
        %3610 = vmatpush1.bf16.msra.mxu0 %v2228
        %3611 = vmatprep.mubr.bf16.mxu0 %v1081
        %3612 = vmatmul.mubr.bf16.gmra.mrb[0].mxu0 %v1080
        %v3613 = vpop.f32.mrb[0].mxu0
        %v3614 = vadd.f32 %v3421, %v3613
        %v3615 = vpop.f32.mrb[0].mxu0
        %v3616 = vadd.f32 %v3423, %v3615
        %v3617 = vpop.f32.mrb[0].mxu0
        %v3618 = vadd.f32 %v3425, %v3617
        %v3619 = vpop.f32.mrb[0].mxu0
        %v3620 = vadd.f32 %v3427, %v3619
        %3621 = vmatprep.mubr.bf16.mxu0 %v1089
        %3622 = vmatmul.mubr.bf16.gmra.mrb[0].mxu0 %v1088
        %v3623 = vpop.f32.mrb[0].mxu0
        %v3624 = vadd.f32 %v3431, %v3623
        %v3625 = vpop.f32.mrb[0].mxu0
        %v3626 = vadd.f32 %v3433, %v3625
        %v3627 = vpop.f32.mrb[0].mxu0
        %v3628 = vadd.f32 %v3435, %v3627
        %v3629 = vpop.f32.mrb[0].mxu0
        %v3630 = vadd.f32 %v3437, %v3629
        %3631 = vmatprep.mubr.bf16.mxu0 %v1097
        %3632 = vmatmul.mubr.bf16.gmra.mrb[0].mxu0 %v1096
        %v3633 = vpop.f32.mrb[0].mxu0
        %v3634 = vadd.f32 %v3441, %v3633
        %v3635 = vpop.f32.mrb[0].mxu0
        %v3636 = vadd.f32 %v3443, %v3635
        %v3637 = vpop.f32.mrb[0].mxu0
        %v3638 = vadd.f32 %v3445, %v3637
        %v3639 = vpop.f32.mrb[0].mxu0
        %v3640 = vadd.f32 %v3447, %v3639
        %3641 = vmatprep.mubr.bf16.mxu0 %v1105
        %3642 = vmatmul.mubr.bf16.gmra.mrb[0].mxu0 %v1104
        %v3643 = vpop.f32.mrb[0].mxu0
        %v3644 = vadd.f32 %v3451, %v3643
        %v3645 = vpop.f32.mrb[0].mxu0
        %v3646 = vadd.f32 %v3453, %v3645
        %v3647 = vpop.f32.mrb[0].mxu0
        %v3648 = vadd.f32 %v3455, %v3647
        %v3649 = vpop.f32.mrb[0].mxu0
        %v3650 = vadd.f32 %v3457, %v3649
        %3651 = vmatprep.mubr.bf16.mxu0 %v1113
        %3652 = vmatmul.mubr.bf16.gmra.mrb[0].mxu0 %v1112
        %v3653 = vpop.f32.mrb[0].mxu0
        %v3654 = vadd.f32 %v3461, %v3653
        %v3655 = vpop.f32.mrb[0].mxu0
        %v3656 = vadd.f32 %v3463, %v3655
        %v3657 = vpop.f32.mrb[0].mxu0
        %v3658 = vadd.f32 %v3465, %v3657
        %v3659 = vpop.f32.mrb[0].mxu0
        %v3660 = vadd.f32 %v3467, %v3659
        %3661 = vmatprep.mubr.bf16.mxu0 %v1121
        %3662 = vmatmul.mubr.bf16.gmra.mrb[0].mxu0 %v1120
        %v3663 = vpop.f32.mrb[0].mxu0
        %v3664 = vadd.f32 %v3471, %v3663
        %v3665 = vpop.f32.mrb[0].mxu0
        %v3666 = vadd.f32 %v3473, %v3665
        %v3667 = vpop.f32.mrb[0].mxu0
        %v3668 = vadd.f32 %v3475, %v3667
        %v3669 = vpop.f32.mrb[0].mxu0
        %v3670 = vadd.f32 %v3477, %v3669
        %3671 = vmatprep.mubr.bf16.mxu0 %v1129
        %3672 = vmatmul.mubr.bf16.gmra.mrb[0].mxu0 %v1128
        %v3673 = vpop.f32.mrb[0].mxu0
        %v3674 = vadd.f32 %v3481, %v3673
        %v3675 = vpop.f32.mrb[0].mxu0
        %v3676 = vadd.f32 %v3483, %v3675
        %v3677 = vpop.f32.mrb[0].mxu0
        %v3678 = vadd.f32 %v3485, %v3677
        %v3679 = vpop.f32.mrb[0].mxu0
        %v3680 = vadd.f32 %v3487, %v3679
        %3681 = vmatprep.mubr.bf16.mxu0 %v1137
        %3682 = vmatmul.mubr.bf16.gmra.mrb[0].mxu0 %v1136
        %v3683 = vpop.f32.mrb[0].mxu0
        %v3684 = vadd.f32 %v3491, %v3683
        %v3685 = vpop.f32.mrb[0].mxu0
        %v3686 = vadd.f32 %v3493, %v3685
        %v3687 = vpop.f32.mrb[0].mxu0
        %v3688 = vadd.f32 %v3495, %v3687
        %v3689 = vpop.f32.mrb[0].mxu0
        %v3690 = vadd.f32 %v3497, %v3689
        %3691 = vmatprep.mubr.bf16.mxu0 %v1145
        %3692 = vmatmul.mubr.bf16.gmra.mrb[0].mxu0 %v1144
        %v3693 = vpop.f32.mrb[0].mxu0
        %v3694 = vadd.f32 %v3501, %v3693
        %v3695 = vpop.f32.mrb[0].mxu0
        %v3696 = vadd.f32 %v3503, %v3695
        %v3697 = vpop.f32.mrb[0].mxu0
        %v3698 = vadd.f32 %v3505, %v3697
        %v3699 = vpop.f32.mrb[0].mxu0
        %v3700 = vadd.f32 %v3507, %v3699
        %3701 = vmatprep.mubr.bf16.mxu0 %v1153
        %3702 = vmatmul.mubr.bf16.gmra.mrb[0].mxu0 %v1152
        %v3703 = vpop.f32.mrb[0].mxu0
        %v3704 = vadd.f32 %v3511, %v3703
        %v3705 = vpop.f32.mrb[0].mxu0
        %v3706 = vadd.f32 %v3513, %v3705
        %v3707 = vpop.f32.mrb[0].mxu0
        %v3708 = vadd.f32 %v3515, %v3707
        %v3709 = vpop.f32.mrb[0].mxu0
        %v3710 = vadd.f32 %v3517, %v3709
        %3711 = vmatprep.mubr.bf16.mxu0 %v1161
        %3712 = vmatmul.mubr.bf16.gmra.mrb[0].mxu0 %v1160
        %v3713 = vpop.f32.mrb[0].mxu0
        %v3714 = vadd.f32 %v3521, %v3713
        %v3715 = vpop.f32.mrb[0].mxu0
        %v3716 = vadd.f32 %v3523, %v3715
        %v3717 = vpop.f32.mrb[0].mxu0
        %v3718 = vadd.f32 %v3525, %v3717
        %v3719 = vpop.f32.mrb[0].mxu0
        %v3720 = vadd.f32 %v3527, %v3719
        %3721 = vmatprep.mubr.bf16.mxu0 %v1169
        %3722 = vmatmul.mubr.bf16.gmra.mrb[0].mxu0 %v1168
        %v3723 = vpop.f32.mrb[0].mxu0
        %v3724 = vadd.f32 %v3531, %v3723
        %v3725 = vpop.f32.mrb[0].mxu0
        %v3726 = vadd.f32 %v3533, %v3725
        %v3727 = vpop.f32.mrb[0].mxu0
        %v3728 = vadd.f32 %v3535, %v3727
        %v3729 = vpop.f32.mrb[0].mxu0
        %v3730 = vadd.f32 %v3537, %v3729
        %3731 = vmatprep.mubr.bf16.mxu0 %v1177
        %3732 = vmatmul.mubr.bf16.gmra.mrb[0].mxu0 %v1176
        %v3733 = vpop.f32.mrb[0].mxu0
        %v3734 = vadd.f32 %v3541, %v3733
        %v3735 = vpop.f32.mrb[0].mxu0
        %v3736 = vadd.f32 %v3543, %v3735
        %v3737 = vpop.f32.mrb[0].mxu0
        %v3738 = vadd.f32 %v3545, %v3737
        %v3739 = vpop.f32.mrb[0].mxu0
        %v3740 = vadd.f32 %v3547, %v3739
        %3741 = vmatprep.mubr.bf16.mxu0 %v1185
        %3742 = vmatmul.mubr.bf16.gmra.mrb[0].mxu0 %v1184
        %v3743 = vpop.f32.mrb[0].mxu0
        %v3744 = vadd.f32 %v3551, %v3743
        %v3745 = vpop.f32.mrb[0].mxu0
        %v3746 = vadd.f32 %v3553, %v3745
        %v3747 = vpop.f32.mrb[0].mxu0
        %v3748 = vadd.f32 %v3555, %v3747
        %v3749 = vpop.f32.mrb[0].mxu0
        %v3750 = vadd.f32 %v3557, %v3749
        %3751 = vmatprep.mubr.bf16.mxu0 %v1193
        %3752 = vmatmul.mubr.bf16.gmra.mrb[0].mxu0 %v1192
        %v3753 = vpop.f32.mrb[0].mxu0
        %v3754 = vadd.f32 %v3561, %v3753
        %v3755 = vpop.f32.mrb[0].mxu0
        %v3756 = vadd.f32 %v3563, %v3755
        %v3757 = vpop.f32.mrb[0].mxu0
        %v3758 = vadd.f32 %v3565, %v3757
        %v3759 = vpop.f32.mrb[0].mxu0
        %v3760 = vadd.f32 %v3567, %v3759
        %3761 = vmatprep.mubr.bf16.mxu0 %v1201
        %3762 = vmatmul.mubr.bf16.gmra.mrb[0].mxu0 %v1200
        %v3763 = vpop.f32.mrb[0].mxu0
        %v3764 = vadd.f32 %v3571, %v3763
        %v3765 = vpop.f32.mrb[0].mxu0
        %v3766 = vadd.f32 %v3573, %v3765
        %v3767 = vpop.f32.mrb[0].mxu0
        %v3768 = vadd.f32 %v3575, %v3767
        %v3769 = vpop.f32.mrb[0].mxu0
        %v3770 = vadd.f32 %v3577, %v3769
        %3771 = vdwg.mxu0
        %3772 = vmatprep.subr.bf16.mxu0 %v2233
        %3773 = vmatpush1.bf16.msra.mxu0 %v2232
        %3774 = vmatprep.subr.bf16.mxu0 %v2237
        %3775 = vmatpush1.bf16.msra.mxu0 %v2236
        %3776 = vmatprep.subr.bf16.mxu0 %v2241
        %3777 = vmatpush1.bf16.msra.mxu0 %v2240
        %3778 = vmatprep.subr.bf16.mxu0 %v2245
        %3779 = vmatpush1.bf16.msra.mxu0 %v2244
        %3780 = vmatprep.subr.bf16.mxu0 %v2249
        %3781 = vmatpush1.bf16.msra.mxu0 %v2248
        %3782 = vmatprep.subr.bf16.mxu0 %v2253
        %3783 = vmatpush1.bf16.msra.mxu0 %v2252
        %3784 = vmatprep.subr.bf16.mxu0 %v2257
        %3785 = vmatpush1.bf16.msra.mxu0 %v2256
        %3786 = vmatprep.subr.bf16.mxu0 %v2261
        %3787 = vmatpush1.bf16.msra.mxu0 %v2260
        %3788 = vmatprep.subr.bf16.mxu0 %v2265
        %3789 = vmatpush1.bf16.msra.mxu0 %v2264
        %3790 = vmatprep.subr.bf16.mxu0 %v2269
        %3791 = vmatpush1.bf16.msra.mxu0 %v2268
        %3792 = vmatprep.subr.bf16.mxu0 %v2273
        %3793 = vmatpush1.bf16.msra.mxu0 %v2272
        %3794 = vmatprep.subr.bf16.mxu0 %v2277
        %3795 = vmatpush1.bf16.msra.mxu0 %v2276
        %3796 = vmatprep.subr.bf16.mxu0 %v2281
        %3797 = vmatpush1.bf16.msra.mxu0 %v2280
        %3798 = vmatprep.subr.bf16.mxu0 %v2285
        %3799 = vmatpush1.bf16.msra.mxu0 %v2284
        %3800 = vmatprep.subr.bf16.mxu0 %v2289
        %3801 = vmatpush1.bf16.msra.mxu0 %v2288
        %3802 = vmatprep.subr.bf16.mxu0 %v2293
        %3803 = vmatpush1.bf16.msra.mxu0 %v2292
        %3804 = vmatprep.mubr.bf16.mxu0 %v1083
        %3805 = vmatmul.mubr.bf16.gmra.mrb[0].mxu0 %v1082
        %v3806 = vpop.f32.mrb[0].mxu0
        %v3807 = vadd.f32 %v3614, %v3806
        %v3808 = vpop.f32.mrb[0].mxu0
        %v3809 = vadd.f32 %v3616, %v3808
        %v3810 = vpop.f32.mrb[0].mxu0
        %v3811 = vadd.f32 %v3618, %v3810
        %v3812 = vpop.f32.mrb[0].mxu0
        %v3813 = vadd.f32 %v3620, %v3812
        %3814 = vmatprep.mubr.bf16.mxu0 %v1091
        %3815 = vmatmul.mubr.bf16.gmra.mrb[0].mxu0 %v1090
        %v3816 = vpop.f32.mrb[0].mxu0
        %v3817 = vadd.f32 %v3624, %v3816
        %v3818 = vpop.f32.mrb[0].mxu0
        %v3819 = vadd.f32 %v3626, %v3818
        %v3820 = vpop.f32.mrb[0].mxu0
        %v3821 = vadd.f32 %v3628, %v3820
        %v3822 = vpop.f32.mrb[0].mxu0
        %v3823 = vadd.f32 %v3630, %v3822
        %3824 = vmatprep.mubr.bf16.mxu0 %v1099
        %3825 = vmatmul.mubr.bf16.gmra.mrb[0].mxu0 %v1098
        %v3826 = vpop.f32.mrb[0].mxu0
        %v3827 = vadd.f32 %v3634, %v3826
        %v3828 = vpop.f32.mrb[0].mxu0
        %v3829 = vadd.f32 %v3636, %v3828
        %v3830 = vpop.f32.mrb[0].mxu0
        %v3831 = vadd.f32 %v3638, %v3830
        %v3832 = vpop.f32.mrb[0].mxu0
        %v3833 = vadd.f32 %v3640, %v3832
        %3834 = vmatprep.mubr.bf16.mxu0 %v1107
        %3835 = vmatmul.mubr.bf16.gmra.mrb[0].mxu0 %v1106
        %v3836 = vpop.f32.mrb[0].mxu0
        %v3837 = vadd.f32 %v3644, %v3836
        %v3838 = vpop.f32.mrb[0].mxu0
        %v3839 = vadd.f32 %v3646, %v3838
        %v3840 = vpop.f32.mrb[0].mxu0
        %v3841 = vadd.f32 %v3648, %v3840
        %v3842 = vpop.f32.mrb[0].mxu0
        %v3843 = vadd.f32 %v3650, %v3842
        %3844 = vmatprep.mubr.bf16.mxu0 %v1115
        %3845 = vmatmul.mubr.bf16.gmra.mrb[0].mxu0 %v1114
        %v3846 = vpop.f32.mrb[0].mxu0
        %v3847 = vadd.f32 %v3654, %v3846
        %v3848 = vpop.f32.mrb[0].mxu0
        %v3849 = vadd.f32 %v3656, %v3848
        %v3850 = vpop.f32.mrb[0].mxu0
        %v3851 = vadd.f32 %v3658, %v3850
        %v3852 = vpop.f32.mrb[0].mxu0
        %v3853 = vadd.f32 %v3660, %v3852
        %3854 = vmatprep.mubr.bf16.mxu0 %v1123
        %3855 = vmatmul.mubr.bf16.gmra.mrb[0].mxu0 %v1122
        %v3856 = vpop.f32.mrb[0].mxu0
        %v3857 = vadd.f32 %v3664, %v3856
        %v3858 = vpop.f32.mrb[0].mxu0
        %v3859 = vadd.f32 %v3666, %v3858
        %v3860 = vpop.f32.mrb[0].mxu0
        %v3861 = vadd.f32 %v3668, %v3860
        %v3862 = vpop.f32.mrb[0].mxu0
        %v3863 = vadd.f32 %v3670, %v3862
        %3864 = vmatprep.mubr.bf16.mxu0 %v1131
        %3865 = vmatmul.mubr.bf16.gmra.mrb[0].mxu0 %v1130
        %v3866 = vpop.f32.mrb[0].mxu0
        %v3867 = vadd.f32 %v3674, %v3866
        %v3868 = vpop.f32.mrb[0].mxu0
        %v3869 = vadd.f32 %v3676, %v3868
        %v3870 = vpop.f32.mrb[0].mxu0
        %v3871 = vadd.f32 %v3678, %v3870
        %v3872 = vpop.f32.mrb[0].mxu0
        %v3873 = vadd.f32 %v3680, %v3872
        %3874 = vmatprep.mubr.bf16.mxu0 %v1139
        %3875 = vmatmul.mubr.bf16.gmra.mrb[0].mxu0 %v1138
        %v3876 = vpop.f32.mrb[0].mxu0
        %v3877 = vadd.f32 %v3684, %v3876
        %v3878 = vpop.f32.mrb[0].mxu0
        %v3879 = vadd.f32 %v3686, %v3878
        %v3880 = vpop.f32.mrb[0].mxu0
        %v3881 = vadd.f32 %v3688, %v3880
        %v3882 = vpop.f32.mrb[0].mxu0
        %v3883 = vadd.f32 %v3690, %v3882
        %3884 = vmatprep.mubr.bf16.mxu0 %v1147
        %3885 = vmatmul.mubr.bf16.gmra.mrb[0].mxu0 %v1146
        %v3886 = vpop.f32.mrb[0].mxu0
        %v3887 = vadd.f32 %v3694, %v3886
        %v3888 = vpop.f32.mrb[0].mxu0
        %v3889 = vadd.f32 %v3696, %v3888
        %v3890 = vpop.f32.mrb[0].mxu0
        %v3891 = vadd.f32 %v3698, %v3890
        %v3892 = vpop.f32.mrb[0].mxu0
        %v3893 = vadd.f32 %v3700, %v3892
        %3894 = vmatprep.mubr.bf16.mxu0 %v1155
        %3895 = vmatmul.mubr.bf16.gmra.mrb[0].mxu0 %v1154
        %v3896 = vpop.f32.mrb[0].mxu0
        %v3897 = vadd.f32 %v3704, %v3896
        %v3898 = vpop.f32.mrb[0].mxu0
        %v3899 = vadd.f32 %v3706, %v3898
        %v3900 = vpop.f32.mrb[0].mxu0
        %v3901 = vadd.f32 %v3708, %v3900
        %v3902 = vpop.f32.mrb[0].mxu0
        %v3903 = vadd.f32 %v3710, %v3902
        %3904 = vmatprep.mubr.bf16.mxu0 %v1163
        %3905 = vmatmul.mubr.bf16.gmra.mrb[0].mxu0 %v1162
        %v3906 = vpop.f32.mrb[0].mxu0
        %v3907 = vadd.f32 %v3714, %v3906
        %v3908 = vpop.f32.mrb[0].mxu0
        %v3909 = vadd.f32 %v3716, %v3908
        %v3910 = vpop.f32.mrb[0].mxu0
        %v3911 = vadd.f32 %v3718, %v3910
        %v3912 = vpop.f32.mrb[0].mxu0
        %v3913 = vadd.f32 %v3720, %v3912
        %3914 = vmatprep.mubr.bf16.mxu0 %v1171
        %3915 = vmatmul.mubr.bf16.gmra.mrb[0].mxu0 %v1170
        %v3916 = vpop.f32.mrb[0].mxu0
        %v3917 = vadd.f32 %v3724, %v3916
        %v3918 = vpop.f32.mrb[0].mxu0
        %v3919 = vadd.f32 %v3726, %v3918
        %v3920 = vpop.f32.mrb[0].mxu0
        %v3921 = vadd.f32 %v3728, %v3920
        %v3922 = vpop.f32.mrb[0].mxu0
        %v3923 = vadd.f32 %v3730, %v3922
        %3924 = vmatprep.mubr.bf16.mxu0 %v1179
        %3925 = vmatmul.mubr.bf16.gmra.mrb[0].mxu0 %v1178
        %v3926 = vpop.f32.mrb[0].mxu0
        %v3927 = vadd.f32 %v3734, %v3926
        %v3928 = vpop.f32.mrb[0].mxu0
        %v3929 = vadd.f32 %v3736, %v3928
        %v3930 = vpop.f32.mrb[0].mxu0
        %v3931 = vadd.f32 %v3738, %v3930
        %v3932 = vpop.f32.mrb[0].mxu0
        %v3933 = vadd.f32 %v3740, %v3932
        %3934 = vmatprep.mubr.bf16.mxu0 %v1187
        %3935 = vmatmul.mubr.bf16.gmra.mrb[0].mxu0 %v1186
        %v3936 = vpop.f32.mrb[0].mxu0
        %v3937 = vadd.f32 %v3744, %v3936
        %v3938 = vpop.f32.mrb[0].mxu0
        %v3939 = vadd.f32 %v3746, %v3938
        %v3940 = vpop.f32.mrb[0].mxu0
        %v3941 = vadd.f32 %v3748, %v3940
        %v3942 = vpop.f32.mrb[0].mxu0
        %v3943 = vadd.f32 %v3750, %v3942
        %3944 = vmatprep.mubr.bf16.mxu0 %v1195
        %3945 = vmatmul.mubr.bf16.gmra.mrb[0].mxu0 %v1194
        %v3946 = vpop.f32.mrb[0].mxu0
        %v3947 = vadd.f32 %v3754, %v3946
        %v3948 = vpop.f32.mrb[0].mxu0
        %v3949 = vadd.f32 %v3756, %v3948
        %v3950 = vpop.f32.mrb[0].mxu0
        %v3951 = vadd.f32 %v3758, %v3950
        %v3952 = vpop.f32.mrb[0].mxu0
        %v3953 = vadd.f32 %v3760, %v3952
        %3954 = vmatprep.mubr.bf16.mxu0 %v1203
        %3955 = vmatmul.mubr.bf16.gmra.mrb[0].mxu0 %v1202
        %v3956 = vpop.f32.mrb[0].mxu0
        %v3957 = vadd.f32 %v3764, %v3956
        %v3958 = vpop.f32.mrb[0].mxu0
        %v3959 = vadd.f32 %v3766, %v3958
        %v3960 = vpop.f32.mrb[0].mxu0
        %v3961 = vadd.f32 %v3768, %v3960
        %v3962 = vpop.f32.mrb[0].mxu0
        %v3963 = vadd.f32 %v3770, %v3962
        %3964 = vdwg.mxu0
        %3965 = vmatprep.subr.bf16.mxu0 %v2297
        %3966 = vmatpush1.bf16.msra.mxu0 %v2296
        %3967 = vmatprep.subr.bf16.mxu0 %v2301
        %3968 = vmatpush1.bf16.msra.mxu0 %v2300
        %3969 = vmatprep.subr.bf16.mxu0 %v2305
        %3970 = vmatpush1.bf16.msra.mxu0 %v2304
        %3971 = vmatprep.subr.bf16.mxu0 %v2309
        %3972 = vmatpush1.bf16.msra.mxu0 %v2308
        %3973 = vmatprep.subr.bf16.mxu0 %v2313
        %3974 = vmatpush1.bf16.msra.mxu0 %v2312
        %3975 = vmatprep.subr.bf16.mxu0 %v2317
        %3976 = vmatpush1.bf16.msra.mxu0 %v2316
        %3977 = vmatprep.subr.bf16.mxu0 %v2321
        %3978 = vmatpush1.bf16.msra.mxu0 %v2320
        %3979 = vmatprep.subr.bf16.mxu0 %v2325
        %3980 = vmatpush1.bf16.msra.mxu0 %v2324
        %3981 = vmatprep.subr.bf16.mxu0 %v2329
        %3982 = vmatpush1.bf16.msra.mxu0 %v2328
        %3983 = vmatprep.subr.bf16.mxu0 %v2333
        %3984 = vmatpush1.bf16.msra.mxu0 %v2332
        %3985 = vmatprep.subr.bf16.mxu0 %v2337
        %3986 = vmatpush1.bf16.msra.mxu0 %v2336
        %3987 = vmatprep.subr.bf16.mxu0 %v2341
        %3988 = vmatpush1.bf16.msra.mxu0 %v2340
        %3989 = vmatprep.subr.bf16.mxu0 %v2345
        %3990 = vmatpush1.bf16.msra.mxu0 %v2344
        %3991 = vmatprep.subr.bf16.mxu0 %v2349
        %3992 = vmatpush1.bf16.msra.mxu0 %v2348
        %3993 = vmatprep.subr.bf16.mxu0 %v2353
        %3994 = vmatpush1.bf16.msra.mxu0 %v2352
        %3995 = vmatprep.subr.bf16.mxu0 %v2357
        %3996 = vmatpush1.bf16.msra.mxu0 %v2356
        %3997 = vmatprep.mubr.bf16.mxu0 %v1085
        %3998 = vmatmul.mubr.bf16.gmra.mrb[0].mxu0 %v1084
        %v3999 = vpop.f32.mrb[0].mxu0
        %v4000 = vadd.f32 %v3807, %v3999
        %v4001 = vpop.f32.mrb[0].mxu0
        %v4002 = vadd.f32 %v3809, %v4001
        %v4003 = vpop.f32.mrb[0].mxu0
        %v4004 = vadd.f32 %v3811, %v4003
        %v4005 = vpop.f32.mrb[0].mxu0
        %v4006 = vadd.f32 %v3813, %v4005
        %4007 = vmatprep.mubr.bf16.mxu0 %v1093
        %4008 = vmatmul.mubr.bf16.gmra.mrb[0].mxu0 %v1092
        %v4009 = vpop.f32.mrb[0].mxu0
        %v4010 = vadd.f32 %v3817, %v4009
        %v4011 = vpop.f32.mrb[0].mxu0
        %v4012 = vadd.f32 %v3819, %v4011
        %v4013 = vpop.f32.mrb[0].mxu0
        %v4014 = vadd.f32 %v3821, %v4013
        %v4015 = vpop.f32.mrb[0].mxu0
        %v4016 = vadd.f32 %v3823, %v4015
        %4017 = vmatprep.mubr.bf16.mxu0 %v1101
        %4018 = vmatmul.mubr.bf16.gmra.mrb[0].mxu0 %v1100
        %v4019 = vpop.f32.mrb[0].mxu0
        %v4020 = vadd.f32 %v3827, %v4019
        %v4021 = vpop.f32.mrb[0].mxu0
        %v4022 = vadd.f32 %v3829, %v4021
        %v4023 = vpop.f32.mrb[0].mxu0
        %v4024 = vadd.f32 %v3831, %v4023
        %v4025 = vpop.f32.mrb[0].mxu0
        %v4026 = vadd.f32 %v3833, %v4025
        %4027 = vmatprep.mubr.bf16.mxu0 %v1109
        %4028 = vmatmul.mubr.bf16.gmra.mrb[0].mxu0 %v1108
        %v4029 = vpop.f32.mrb[0].mxu0
        %v4030 = vadd.f32 %v3837, %v4029
        %v4031 = vpop.f32.mrb[0].mxu0
        %v4032 = vadd.f32 %v3839, %v4031
        %v4033 = vpop.f32.mrb[0].mxu0
        %v4034 = vadd.f32 %v3841, %v4033
        %v4035 = vpop.f32.mrb[0].mxu0
        %v4036 = vadd.f32 %v3843, %v4035
        %4037 = vmatprep.mubr.bf16.mxu0 %v1117
        %4038 = vmatmul.mubr.bf16.gmra.mrb[0].mxu0 %v1116
        %v4039 = vpop.f32.mrb[0].mxu0
        %v4040 = vadd.f32 %v3847, %v4039
        %v4041 = vpop.f32.mrb[0].mxu0
        %v4042 = vadd.f32 %v3849, %v4041
        %v4043 = vpop.f32.mrb[0].mxu0
        %v4044 = vadd.f32 %v3851, %v4043
        %v4045 = vpop.f32.mrb[0].mxu0
        %v4046 = vadd.f32 %v3853, %v4045
        %4047 = vmatprep.mubr.bf16.mxu0 %v1125
        %4048 = vmatmul.mubr.bf16.gmra.mrb[0].mxu0 %v1124
        %v4049 = vpop.f32.mrb[0].mxu0
        %v4050 = vadd.f32 %v3857, %v4049
        %v4051 = vpop.f32.mrb[0].mxu0
        %v4052 = vadd.f32 %v3859, %v4051
        %v4053 = vpop.f32.mrb[0].mxu0
        %v4054 = vadd.f32 %v3861, %v4053
        %v4055 = vpop.f32.mrb[0].mxu0
        %v4056 = vadd.f32 %v3863, %v4055
        %4057 = vmatprep.mubr.bf16.mxu0 %v1133
        %4058 = vmatmul.mubr.bf16.gmra.mrb[0].mxu0 %v1132
        %v4059 = vpop.f32.mrb[0].mxu0
        %v4060 = vadd.f32 %v3867, %v4059
        %v4061 = vpop.f32.mrb[0].mxu0
        %v4062 = vadd.f32 %v3869, %v4061
        %v4063 = vpop.f32.mrb[0].mxu0
        %v4064 = vadd.f32 %v3871, %v4063
        %v4065 = vpop.f32.mrb[0].mxu0
        %v4066 = vadd.f32 %v3873, %v4065
        %4067 = vmatprep.mubr.bf16.mxu0 %v1141
        %4068 = vmatmul.mubr.bf16.gmra.mrb[0].mxu0 %v1140
        %v4069 = vpop.f32.mrb[0].mxu0
        %v4070 = vadd.f32 %v3877, %v4069
        %v4071 = vpop.f32.mrb[0].mxu0
        %v4072 = vadd.f32 %v3879, %v4071
        %v4073 = vpop.f32.mrb[0].mxu0
        %v4074 = vadd.f32 %v3881, %v4073
        %v4075 = vpop.f32.mrb[0].mxu0
        %v4076 = vadd.f32 %v3883, %v4075
        %4077 = vmatprep.mubr.bf16.mxu0 %v1149
        %4078 = vmatmul.mubr.bf16.gmra.mrb[0].mxu0 %v1148
        %v4079 = vpop.f32.mrb[0].mxu0
        %v4080 = vadd.f32 %v3887, %v4079
        %v4081 = vpop.f32.mrb[0].mxu0
        %v4082 = vadd.f32 %v3889, %v4081
        %v4083 = vpop.f32.mrb[0].mxu0
        %v4084 = vadd.f32 %v3891, %v4083
        %v4085 = vpop.f32.mrb[0].mxu0
        %v4086 = vadd.f32 %v3893, %v4085
        %4087 = vmatprep.mubr.bf16.mxu0 %v1157
        %4088 = vmatmul.mubr.bf16.gmra.mrb[0].mxu0 %v1156
        %v4089 = vpop.f32.mrb[0].mxu0
        %v4090 = vadd.f32 %v3897, %v4089
        %v4091 = vpop.f32.mrb[0].mxu0
        %v4092 = vadd.f32 %v3899, %v4091
        %v4093 = vpop.f32.mrb[0].mxu0
        %v4094 = vadd.f32 %v3901, %v4093
        %v4095 = vpop.f32.mrb[0].mxu0
        %v4096 = vadd.f32 %v3903, %v4095
        %4097 = vmatprep.mubr.bf16.mxu0 %v1165
        %4098 = vmatmul.mubr.bf16.gmra.mrb[0].mxu0 %v1164
        %v4099 = vpop.f32.mrb[0].mxu0
        %v4100 = vadd.f32 %v3907, %v4099
        %v4101 = vpop.f32.mrb[0].mxu0
        %v4102 = vadd.f32 %v3909, %v4101
        %v4103 = vpop.f32.mrb[0].mxu0
        %v4104 = vadd.f32 %v3911, %v4103
        %v4105 = vpop.f32.mrb[0].mxu0
        %v4106 = vadd.f32 %v3913, %v4105
        %4107 = vmatprep.mubr.bf16.mxu0 %v1173
        %4108 = vmatmul.mubr.bf16.gmra.mrb[0].mxu0 %v1172
        %v4109 = vpop.f32.mrb[0].mxu0
        %v4110 = vadd.f32 %v3917, %v4109
        %v4111 = vpop.f32.mrb[0].mxu0
        %v4112 = vadd.f32 %v3919, %v4111
        %v4113 = vpop.f32.mrb[0].mxu0
        %v4114 = vadd.f32 %v3921, %v4113
        %v4115 = vpop.f32.mrb[0].mxu0
        %v4116 = vadd.f32 %v3923, %v4115
        %4117 = vmatprep.mubr.bf16.mxu0 %v1181
        %4118 = vmatmul.mubr.bf16.gmra.mrb[0].mxu0 %v1180
        %v4119 = vpop.f32.mrb[0].mxu0
        %v4120 = vadd.f32 %v3927, %v4119
        %v4121 = vpop.f32.mrb[0].mxu0
        %v4122 = vadd.f32 %v3929, %v4121
        %v4123 = vpop.f32.mrb[0].mxu0
        %v4124 = vadd.f32 %v3931, %v4123
        %v4125 = vpop.f32.mrb[0].mxu0
        %v4126 = vadd.f32 %v3933, %v4125
        %4127 = vmatprep.mubr.bf16.mxu0 %v1189
        %4128 = vmatmul.mubr.bf16.gmra.mrb[0].mxu0 %v1188
        %v4129 = vpop.f32.mrb[0].mxu0
        %v4130 = vadd.f32 %v3937, %v4129
        %v4131 = vpop.f32.mrb[0].mxu0
        %v4132 = vadd.f32 %v3939, %v4131
        %v4133 = vpop.f32.mrb[0].mxu0
        %v4134 = vadd.f32 %v3941, %v4133
        %v4135 = vpop.f32.mrb[0].mxu0
        %v4136 = vadd.f32 %v3943, %v4135
        %4137 = vmatprep.mubr.bf16.mxu0 %v1197
        %4138 = vmatmul.mubr.bf16.gmra.mrb[0].mxu0 %v1196
        %v4139 = vpop.f32.mrb[0].mxu0
        %v4140 = vadd.f32 %v3947, %v4139
        %v4141 = vpop.f32.mrb[0].mxu0
        %v4142 = vadd.f32 %v3949, %v4141
        %v4143 = vpop.f32.mrb[0].mxu0
        %v4144 = vadd.f32 %v3951, %v4143
        %v4145 = vpop.f32.mrb[0].mxu0
        %v4146 = vadd.f32 %v3953, %v4145
        %4147 = vmatprep.mubr.bf16.mxu0 %v1205
        %4148 = vmatmul.mubr.bf16.gmra.mrb[0].mxu0 %v1204
        %v4149 = vpop.f32.mrb[0].mxu0
        %v4150 = vadd.f32 %v3957, %v4149
        %v4151 = vpop.f32.mrb[0].mxu0
        %v4152 = vadd.f32 %v3959, %v4151
        %v4153 = vpop.f32.mrb[0].mxu0
        %v4154 = vadd.f32 %v3961, %v4153
        %v4155 = vpop.f32.mrb[0].mxu0
        %v4156 = vadd.f32 %v3963, %v4155
        %4157 = vdwg.mxu0
        %v4158 = vtanh.pop %v3228
        %v4159 = vtanh.pop %v3230
        %v4160 = vtanh.pop %v3232
        %v4161 = vtanh.pop %v3234
        %v4162 = vtanh.pop %v3238
        %v4163 = vtanh.pop %v3240
        %v4164 = vtanh.pop %v3242
        %v4165 = vtanh.pop %v3244
        %v4166 = vtanh.pop %v3248
        %v4167 = vtanh.pop %v3250
        %v4168 = vtanh.pop %v3252
        %v4169 = vtanh.pop %v3254
        %v4170 = vtanh.pop %v3258
        %v4171 = vtanh.pop %v3260
        %v4172 = vtanh.pop %v3262
        %v4173 = vtanh.pop %v3264
        %v4174 = vtanh.pop %v3268
        %v4175 = vtanh.pop %v3270
        %v4176 = vtanh.pop %v3272
        %v4177 = vtanh.pop %v3274
        %v4178 = vtanh.pop %v3278
        %v4179 = vtanh.pop %v3280
        %v4180 = vtanh.pop %v3282
        %v4181 = vtanh.pop %v3284
        %v4182 = vtanh.pop %v3288
        %v4183 = vtanh.pop %v3290
        %v4184 = vtanh.pop %v3292
        %v4185 = vtanh.pop %v3294
        %v4186 = vtanh.pop %v3298
        %v4187 = vtanh.pop %v3300
        %v4188 = vtanh.pop %v3302
        %v4189 = vtanh.pop %v3304
        %v4190 = vtanh.pop %v3308
        %v4191 = vtanh.pop %v3310
        %v4192 = vtanh.pop %v3312
        %v4193 = vtanh.pop %v3314
        %v4194 = vtanh.pop %v3318
        %v4195 = vtanh.pop %v3320
        %v4196 = vtanh.pop %v3322
        %v4197 = vtanh.pop %v3324
        %v4198 = vtanh.pop %v3328
        %v4199 = vtanh.pop %v3330
        %v4200 = vtanh.pop %v3332
        %v4201 = vtanh.pop %v3334
        %v4202 = vtanh.pop %v3338
        %v4203 = vtanh.pop %v3340
        %v4204 = vtanh.pop %v3342
        %v4205 = vtanh.pop %v3344
        %v4206 = vtanh.pop %v3348
        %v4207 = vtanh.pop %v3350
        %v4208 = vtanh.pop %v3352
        %v4209 = vtanh.pop %v3354
        %v4210 = vtanh.pop %v3358
        %v4211 = vtanh.pop %v3360
        %v4212 = vtanh.pop %v3362
        %v4213 = vtanh.pop %v3364
        %v4214 = vtanh.pop %v3368
        %v4215 = vtanh.pop %v3370
        %v4216 = vtanh.pop %v3372
        %v4217 = vtanh.pop %v3374
        %v4218 = vtanh.pop %v3378
        %v4219 = vtanh.pop %v3380
        %v4220 = vtanh.pop %v3382
        %v4221 = vtanh.pop %v3384
        %v4222 = vxor.u32 %v4000, 2147483648
        %v4223 = vxor.u32 %v4002, 2147483648
        %v4224 = vxor.u32 %v4004, 2147483648
        %v4225 = vxor.u32 %v4006, 2147483648
        %v4226 = vxor.u32 %v4010, 2147483648
        %v4227 = vxor.u32 %v4012, 2147483648
        %v4228 = vxor.u32 %v4014, 2147483648
        %v4229 = vxor.u32 %v4016, 2147483648
        %v4230 = vxor.u32 %v4020, 2147483648
        %v4231 = vxor.u32 %v4022, 2147483648
        %v4232 = vxor.u32 %v4024, 2147483648
        %v4233 = vxor.u32 %v4026, 2147483648
        %v4234 = vxor.u32 %v4030, 2147483648
        %v4235 = vxor.u32 %v4032, 2147483648
        %v4236 = vxor.u32 %v4034, 2147483648
        %v4237 = vxor.u32 %v4036, 2147483648
        %v4238 = vxor.u32 %v4040, 2147483648
        %v4239 = vxor.u32 %v4042, 2147483648
        %v4240 = vxor.u32 %v4044, 2147483648
        %v4241 = vxor.u32 %v4046, 2147483648
        %v4242 = vxor.u32 %v4050, 2147483648
        %v4243 = vxor.u32 %v4052, 2147483648
        %v4244 = vxor.u32 %v4054, 2147483648
        %v4245 = vxor.u32 %v4056, 2147483648
        %v4246 = vxor.u32 %v4060, 2147483648
        %v4247 = vxor.u32 %v4062, 2147483648
        %v4248 = vxor.u32 %v4064, 2147483648
        %v4249 = vxor.u32 %v4066, 2147483648
        %v4250 = vxor.u32 %v4070, 2147483648
        %v4251 = vxor.u32 %v4072, 2147483648
        %v4252 = vxor.u32 %v4074, 2147483648
        %v4253 = vxor.u32 %v4076, 2147483648
        %v4254 = vxor.u32 %v4080, 2147483648
        %v4255 = vxor.u32 %v4082, 2147483648
        %v4256 = vxor.u32 %v4084, 2147483648
        %v4257 = vxor.u32 %v4086, 2147483648
        %v4258 = vxor.u32 %v4090, 2147483648
        %v4259 = vxor.u32 %v4092, 2147483648
        %v4260 = vxor.u32 %v4094, 2147483648
        %v4261 = vxor.u32 %v4096, 2147483648
        %v4262 = vxor.u32 %v4100, 2147483648
        %v4263 = vxor.u32 %v4102, 2147483648
        %v4264 = vxor.u32 %v4104, 2147483648
        %v4265 = vxor.u32 %v4106, 2147483648
        %v4266 = vxor.u32 %v4110, 2147483648
        %v4267 = vxor.u32 %v4112, 2147483648
        %v4268 = vxor.u32 %v4114, 2147483648
        %v4269 = vxor.u32 %v4116, 2147483648
        %v4270 = vxor.u32 %v4120, 2147483648
        %v4271 = vxor.u32 %v4122, 2147483648
        %v4272 = vxor.u32 %v4124, 2147483648
        %v4273 = vxor.u32 %v4126, 2147483648
        %v4274 = vxor.u32 %v4130, 2147483648
        %v4275 = vxor.u32 %v4132, 2147483648
        %v4276 = vxor.u32 %v4134, 2147483648
        %v4277 = vxor.u32 %v4136, 2147483648
        %v4278 = vxor.u32 %v4140, 2147483648
        %v4279 = vxor.u32 %v4142, 2147483648
        %v4280 = vxor.u32 %v4144, 2147483648
        %v4281 = vxor.u32 %v4146, 2147483648
        %v4282 = vxor.u32 %v4150, 2147483648
        %v4283 = vxor.u32 %v4152, 2147483648
        %v4284 = vxor.u32 %v4154, 2147483648
        %v4285 = vxor.u32 %v4156, 2147483648
        %v4286 = vmul.f32 %v4222, 1.442695
        %v4287 = vpow.pop %v4286
        %v4288 = vmul.f32 %v4223, 1.442695
        %v4289 = vpow.pop %v4288
        %v4290 = vmul.f32 %v4224, 1.442695
        %v4291 = vpow.pop %v4290
        %v4292 = vmul.f32 %v4225, 1.442695
        %v4293 = vpow.pop %v4292
        %v4294 = vmul.f32 %v4226, 1.442695
        %v4295 = vpow.pop %v4294
        %v4296 = vmul.f32 %v4227, 1.442695
        %v4297 = vpow.pop %v4296
        %v4298 = vmul.f32 %v4228, 1.442695
        %v4299 = vpow.pop %v4298
        %v4300 = vmul.f32 %v4229, 1.442695
        %v4301 = vpow.pop %v4300
        %v4302 = vmul.f32 %v4230, 1.442695
        %v4303 = vpow.pop %v4302
        %v4304 = vmul.f32 %v4231, 1.442695
        %v4305 = vpow.pop %v4304
        %v4306 = vmul.f32 %v4232, 1.442695
        %v4307 = vpow.pop %v4306
        %v4308 = vmul.f32 %v4233, 1.442695
        %v4309 = vpow.pop %v4308
        %v4310 = vmul.f32 %v4234, 1.442695
        %v4311 = vpow.pop %v4310
        %v4312 = vmul.f32 %v4235, 1.442695
        %v4313 = vpow.pop %v4312
        %v4314 = vmul.f32 %v4236, 1.442695
        %v4315 = vpow.pop %v4314
        %v4316 = vmul.f32 %v4237, 1.442695
        %v4317 = vpow.pop %v4316
        %v4318 = vmul.f32 %v4238, 1.442695
        %v4319 = vpow.pop %v4318
        %v4320 = vmul.f32 %v4239, 1.442695
        %v4321 = vpow.pop %v4320
        %v4322 = vmul.f32 %v4240, 1.442695
        %v4323 = vpow.pop %v4322
        %v4324 = vmul.f32 %v4241, 1.442695
        %v4325 = vpow.pop %v4324
        %v4326 = vmul.f32 %v4242, 1.442695
        %v4327 = vpow.pop %v4326
        %v4328 = vmul.f32 %v4243, 1.442695
        %v4329 = vpow.pop %v4328
        %v4330 = vmul.f32 %v4244, 1.442695
        %v4331 = vpow.pop %v4330
        %v4332 = vmul.f32 %v4245, 1.442695
        %v4333 = vpow.pop %v4332
        %v4334 = vmul.f32 %v4246, 1.442695
        %v4335 = vpow.pop %v4334
        %v4336 = vmul.f32 %v4247, 1.442695
        %v4337 = vpow.pop %v4336
        %v4338 = vmul.f32 %v4248, 1.442695
        %v4339 = vpow.pop %v4338
        %v4340 = vmul.f32 %v4249, 1.442695
        %v4341 = vpow.pop %v4340
        %v4342 = vmul.f32 %v4250, 1.442695
        %v4343 = vpow.pop %v4342
        %v4344 = vmul.f32 %v4251, 1.442695
        %v4345 = vpow.pop %v4344
        %v4346 = vmul.f32 %v4252, 1.442695
        %v4347 = vpow.pop %v4346
        %v4348 = vmul.f32 %v4253, 1.442695
        %v4349 = vpow.pop %v4348
        %v4350 = vmul.f32 %v4254, 1.442695
        %v4351 = vpow.pop %v4350
        %v4352 = vmul.f32 %v4255, 1.442695
        %v4353 = vpow.pop %v4352
        %v4354 = vmul.f32 %v4256, 1.442695
        %v4355 = vpow.pop %v4354
        %v4356 = vmul.f32 %v4257, 1.442695
        %v4357 = vpow.pop %v4356
        %v4358 = vmul.f32 %v4258, 1.442695
        %v4359 = vpow.pop %v4358
        %v4360 = vmul.f32 %v4259, 1.442695
        %v4361 = vpow.pop %v4360
        %v4362 = vmul.f32 %v4260, 1.442695
        %v4363 = vpow.pop %v4362
        %v4364 = vmul.f32 %v4261, 1.442695
        %v4365 = vpow.pop %v4364
        %v4366 = vmul.f32 %v4262, 1.442695
        %v4367 = vpow.pop %v4366
        %v4368 = vmul.f32 %v4263, 1.442695
        %v4369 = vpow.pop %v4368
        %v4370 = vmul.f32 %v4264, 1.442695
        %v4371 = vpow.pop %v4370
        %v4372 = vmul.f32 %v4265, 1.442695
        %v4373 = vpow.pop %v4372
        %v4374 = vmul.f32 %v4266, 1.442695
        %v4375 = vpow.pop %v4374
        %v4376 = vmul.f32 %v4267, 1.442695
        %v4377 = vpow.pop %v4376
        %v4378 = vmul.f32 %v4268, 1.442695
        %v4379 = vpow.pop %v4378
        %v4380 = vmul.f32 %v4269, 1.442695
        %v4381 = vpow.pop %v4380
        %v4382 = vmul.f32 %v4270, 1.442695
        %v4383 = vpow.pop %v4382
        %v4384 = vmul.f32 %v4271, 1.442695
        %v4385 = vpow.pop %v4384
        %v4386 = vmul.f32 %v4272, 1.442695
        %v4387 = vpow.pop %v4386
        %v4388 = vmul.f32 %v4273, 1.442695
        %v4389 = vpow.pop %v4388
        %v4390 = vmul.f32 %v4274, 1.442695
        %v4391 = vpow.pop %v4390
        %v4392 = vmul.f32 %v4275, 1.442695
        %v4393 = vpow.pop %v4392
        %v4394 = vmul.f32 %v4276, 1.442695
        %v4395 = vpow.pop %v4394
        %v4396 = vmul.f32 %v4277, 1.442695
        %v4397 = vpow.pop %v4396
        %v4398 = vmul.f32 %v4278, 1.442695
        %v4399 = vpow.pop %v4398
        %v4400 = vmul.f32 %v4279, 1.442695
        %v4401 = vpow.pop %v4400
        %v4402 = vmul.f32 %v4280, 1.442695
        %v4403 = vpow.pop %v4402
        %v4404 = vmul.f32 %v4281, 1.442695
        %v4405 = vpow.pop %v4404
        %v4406 = vmul.f32 %v4282, 1.442695
        %v4407 = vpow.pop %v4406
        %v4408 = vmul.f32 %v4283, 1.442695
        %v4409 = vpow.pop %v4408
        %v4410 = vmul.f32 %v4284, 1.442695
        %v4411 = vpow.pop %v4410
        %v4412 = vmul.f32 %v4285, 1.442695
        %v4413 = vpow.pop %v4412
        %v4414 = vadd.f32 %v4287, 1.0
        %v4415 = vadd.f32 %v4289, 1.0
        %v4416 = vadd.f32 %v4291, 1.0
        %v4417 = vadd.f32 %v4293, 1.0
        %v4418 = vadd.f32 %v4295, 1.0
        %v4419 = vadd.f32 %v4297, 1.0
        %v4420 = vadd.f32 %v4299, 1.0
        %v4421 = vadd.f32 %v4301, 1.0
        %v4422 = vadd.f32 %v4303, 1.0
        %v4423 = vadd.f32 %v4305, 1.0
        %v4424 = vadd.f32 %v4307, 1.0
        %v4425 = vadd.f32 %v4309, 1.0
        %v4426 = vadd.f32 %v4311, 1.0
        %v4427 = vadd.f32 %v4313, 1.0
        %v4428 = vadd.f32 %v4315, 1.0
        %v4429 = vadd.f32 %v4317, 1.0
        %v4430 = vadd.f32 %v4319, 1.0
        %v4431 = vadd.f32 %v4321, 1.0
        %v4432 = vadd.f32 %v4323, 1.0
        %v4433 = vadd.f32 %v4325, 1.0
        %v4434 = vadd.f32 %v4327, 1.0
        %v4435 = vadd.f32 %v4329, 1.0
        %v4436 = vadd.f32 %v4331, 1.0
        %v4437 = vadd.f32 %v4333, 1.0
        %v4438 = vadd.f32 %v4335, 1.0
        %v4439 = vadd.f32 %v4337, 1.0
        %v4440 = vadd.f32 %v4339, 1.0
        %v4441 = vadd.f32 %v4341, 1.0
        %v4442 = vadd.f32 %v4343, 1.0
        %v4443 = vadd.f32 %v4345, 1.0
        %v4444 = vadd.f32 %v4347, 1.0
        %v4445 = vadd.f32 %v4349, 1.0
        %v4446 = vadd.f32 %v4351, 1.0
        %v4447 = vadd.f32 %v4353, 1.0
        %v4448 = vadd.f32 %v4355, 1.0
        %v4449 = vadd.f32 %v4357, 1.0
        %v4450 = vadd.f32 %v4359, 1.0
        %v4451 = vadd.f32 %v4361, 1.0
        %v4452 = vadd.f32 %v4363, 1.0
        %v4453 = vadd.f32 %v4365, 1.0
        %v4454 = vadd.f32 %v4367, 1.0
        %v4455 = vadd.f32 %v4369, 1.0
        %v4456 = vadd.f32 %v4371, 1.0
        %v4457 = vadd.f32 %v4373, 1.0
        %v4458 = vadd.f32 %v4375, 1.0
        %v4459 = vadd.f32 %v4377, 1.0
        %v4460 = vadd.f32 %v4379, 1.0
        %v4461 = vadd.f32 %v4381, 1.0
        %v4462 = vadd.f32 %v4383, 1.0
        %v4463 = vadd.f32 %v4385, 1.0
        %v4464 = vadd.f32 %v4387, 1.0
        %v4465 = vadd.f32 %v4389, 1.0
        %v4466 = vadd.f32 %v4391, 1.0
        %v4467 = vadd.f32 %v4393, 1.0
        %v4468 = vadd.f32 %v4395, 1.0
        %v4469 = vadd.f32 %v4397, 1.0
        %v4470 = vadd.f32 %v4399, 1.0
        %v4471 = vadd.f32 %v4401, 1.0
        %v4472 = vadd.f32 %v4403, 1.0
        %v4473 = vadd.f32 %v4405, 1.0
        %v4474 = vadd.f32 %v4407, 1.0
        %v4475 = vadd.f32 %v4409, 1.0
        %v4476 = vadd.f32 %v4411, 1.0
        %v4477 = vadd.f32 %v4413, 1.0
        %v4478 = vrcp.pop %v4414
        %v4479 = vmul.f32 1.0, %v4478
        %v4480 = vrcp.pop %v4415
        %v4481 = vmul.f32 1.0, %v4480
        %v4482 = vrcp.pop %v4416
        %v4483 = vmul.f32 1.0, %v4482
        %v4484 = vrcp.pop %v4417
        %v4485 = vmul.f32 1.0, %v4484
        %v4486 = vrcp.pop %v4418
        %v4487 = vmul.f32 1.0, %v4486
        %v4488 = vrcp.pop %v4419
        %v4489 = vmul.f32 1.0, %v4488
        %v4490 = vrcp.pop %v4420
        %v4491 = vmul.f32 1.0, %v4490
        %v4492 = vrcp.pop %v4421
        %v4493 = vmul.f32 1.0, %v4492
        %v4494 = vrcp.pop %v4422
        %v4495 = vmul.f32 1.0, %v4494
        %v4496 = vrcp.pop %v4423
        %v4497 = vmul.f32 1.0, %v4496
        %v4498 = vrcp.pop %v4424
        %v4499 = vmul.f32 1.0, %v4498
        %v4500 = vrcp.pop %v4425
        %v4501 = vmul.f32 1.0, %v4500
        %v4502 = vrcp.pop %v4426
        %v4503 = vmul.f32 1.0, %v4502
        %v4504 = vrcp.pop %v4427
        %v4505 = vmul.f32 1.0, %v4504
        %v4506 = vrcp.pop %v4428
        %v4507 = vmul.f32 1.0, %v4506
        %v4508 = vrcp.pop %v4429
        %v4509 = vmul.f32 1.0, %v4508
        %v4510 = vrcp.pop %v4430
        %v4511 = vmul.f32 1.0, %v4510
        %v4512 = vrcp.pop %v4431
        %v4513 = vmul.f32 1.0, %v4512
        %v4514 = vrcp.pop %v4432
        %v4515 = vmul.f32 1.0, %v4514
        %v4516 = vrcp.pop %v4433
        %v4517 = vmul.f32 1.0, %v4516
        %v4518 = vrcp.pop %v4434
        %v4519 = vmul.f32 1.0, %v4518
        %v4520 = vrcp.pop %v4435
        %v4521 = vmul.f32 1.0, %v4520
        %v4522 = vrcp.pop %v4436
        %v4523 = vmul.f32 1.0, %v4522
        %v4524 = vrcp.pop %v4437
        %v4525 = vmul.f32 1.0, %v4524
        %v4526 = vrcp.pop %v4438
        %v4527 = vmul.f32 1.0, %v4526
        %v4528 = vrcp.pop %v4439
        %v4529 = vmul.f32 1.0, %v4528
        %v4530 = vrcp.pop %v4440
        %v4531 = vmul.f32 1.0, %v4530
        %v4532 = vrcp.pop %v4441
        %v4533 = vmul.f32 1.0, %v4532
        %v4534 = vrcp.pop %v4442
        %v4535 = vmul.f32 1.0, %v4534
        %v4536 = vrcp.pop %v4443
        %v4537 = vmul.f32 1.0, %v4536
        %v4538 = vrcp.pop %v4444
        %v4539 = vmul.f32 1.0, %v4538
        %v4540 = vrcp.pop %v4445
        %v4541 = vmul.f32 1.0, %v4540
        %v4542 = vrcp.pop %v4446
        %v4543 = vmul.f32 1.0, %v4542
        %v4544 = vrcp.pop %v4447
        %v4545 = vmul.f32 1.0, %v4544
        %v4546 = vrcp.pop %v4448
        %v4547 = vmul.f32 1.0, %v4546
        %v4548 = vrcp.pop %v4449
        %v4549 = vmul.f32 1.0, %v4548
        %v4550 = vrcp.pop %v4450
        %v4551 = vmul.f32 1.0, %v4550
        %v4552 = vrcp.pop %v4451
        %v4553 = vmul.f32 1.0, %v4552
        %v4554 = vrcp.pop %v4452
        %v4555 = vmul.f32 1.0, %v4554
        %v4556 = vrcp.pop %v4453
        %v4557 = vmul.f32 1.0, %v4556
        %v4558 = vrcp.pop %v4454
        %v4559 = vmul.f32 1.0, %v4558
        %v4560 = vrcp.pop %v4455
        %v4561 = vmul.f32 1.0, %v4560
        %v4562 = vrcp.pop %v4456
        %v4563 = vmul.f32 1.0, %v4562
        %v4564 = vrcp.pop %v4457
        %v4565 = vmul.f32 1.0, %v4564
        %v4566 = vrcp.pop %v4458
        %v4567 = vmul.f32 1.0, %v4566
        %v4568 = vrcp.pop %v4459
        %v4569 = vmul.f32 1.0, %v4568
        %v4570 = vrcp.pop %v4460
        %v4571 = vmul.f32 1.0, %v4570
        %v4572 = vrcp.pop %v4461
        %v4573 = vmul.f32 1.0, %v4572
        %v4574 = vrcp.pop %v4462
        %v4575 = vmul.f32 1.0, %v4574
        %v4576 = vrcp.pop %v4463
        %v4577 = vmul.f32 1.0, %v4576
        %v4578 = vrcp.pop %v4464
        %v4579 = vmul.f32 1.0, %v4578
        %v4580 = vrcp.pop %v4465
        %v4581 = vmul.f32 1.0, %v4580
        %v4582 = vrcp.pop %v4466
        %v4583 = vmul.f32 1.0, %v4582
        %v4584 = vrcp.pop %v4467
        %v4585 = vmul.f32 1.0, %v4584
        %v4586 = vrcp.pop %v4468
        %v4587 = vmul.f32 1.0, %v4586
        %v4588 = vrcp.pop %v4469
        %v4589 = vmul.f32 1.0, %v4588
        %v4590 = vrcp.pop %v4470
        %v4591 = vmul.f32 1.0, %v4590
        %v4592 = vrcp.pop %v4471
        %v4593 = vmul.f32 1.0, %v4592
        %v4594 = vrcp.pop %v4472
        %v4595 = vmul.f32 1.0, %v4594
        %v4596 = vrcp.pop %v4473
        %v4597 = vmul.f32 1.0, %v4596
        %v4598 = vrcp.pop %v4474
        %v4599 = vmul.f32 1.0, %v4598
        %v4600 = vrcp.pop %v4475
        %v4601 = vmul.f32 1.0, %v4600
        %v4602 = vrcp.pop %v4476
        %v4603 = vmul.f32 1.0, %v4602
        %v4604 = vrcp.pop %v4477
        %v4605 = vmul.f32 1.0, %v4604
        %v4606 = vmul.f32 %v4158, %v4479
        %v4607 = vmul.f32 %v4159, %v4481
        %v4608 = vmul.f32 %v4160, %v4483
        %v4609 = vmul.f32 %v4161, %v4485
        %v4610 = vmul.f32 %v4162, %v4487
        %v4611 = vmul.f32 %v4163, %v4489
        %v4612 = vmul.f32 %v4164, %v4491
        %v4613 = vmul.f32 %v4165, %v4493
        %v4614 = vmul.f32 %v4166, %v4495
        %v4615 = vmul.f32 %v4167, %v4497
        %v4616 = vmul.f32 %v4168, %v4499
        %v4617 = vmul.f32 %v4169, %v4501
        %v4618 = vmul.f32 %v4170, %v4503
        %v4619 = vmul.f32 %v4171, %v4505
        %v4620 = vmul.f32 %v4172, %v4507
        %v4621 = vmul.f32 %v4173, %v4509
        %v4622 = vmul.f32 %v4174, %v4511
        %v4623 = vmul.f32 %v4175, %v4513
        %v4624 = vmul.f32 %v4176, %v4515
        %v4625 = vmul.f32 %v4177, %v4517
        %v4626 = vmul.f32 %v4178, %v4519
        %v4627 = vmul.f32 %v4179, %v4521
        %v4628 = vmul.f32 %v4180, %v4523
        %v4629 = vmul.f32 %v4181, %v4525
        %v4630 = vmul.f32 %v4182, %v4527
        %v4631 = vmul.f32 %v4183, %v4529
        %v4632 = vmul.f32 %v4184, %v4531
        %v4633 = vmul.f32 %v4185, %v4533
        %v4634 = vmul.f32 %v4186, %v4535
        %v4635 = vmul.f32 %v4187, %v4537
        %v4636 = vmul.f32 %v4188, %v4539
        %v4637 = vmul.f32 %v4189, %v4541
        %v4638 = vmul.f32 %v4190, %v4543
        %v4639 = vmul.f32 %v4191, %v4545
        %v4640 = vmul.f32 %v4192, %v4547
        %v4641 = vmul.f32 %v4193, %v4549
        %v4642 = vmul.f32 %v4194, %v4551
        %v4643 = vmul.f32 %v4195, %v4553
        %v4644 = vmul.f32 %v4196, %v4555
        %v4645 = vmul.f32 %v4197, %v4557
        %v4646 = vmul.f32 %v4198, %v4559
        %v4647 = vmul.f32 %v4199, %v4561
        %v4648 = vmul.f32 %v4200, %v4563
        %v4649 = vmul.f32 %v4201, %v4565
        %v4650 = vmul.f32 %v4202, %v4567
        %v4651 = vmul.f32 %v4203, %v4569
        %v4652 = vmul.f32 %v4204, %v4571
        %v4653 = vmul.f32 %v4205, %v4573
        %v4654 = vmul.f32 %v4206, %v4575
        %v4655 = vmul.f32 %v4207, %v4577
        %v4656 = vmul.f32 %v4208, %v4579
        %v4657 = vmul.f32 %v4209, %v4581
        %v4658 = vmul.f32 %v4210, %v4583
        %v4659 = vmul.f32 %v4211, %v4585
        %v4660 = vmul.f32 %v4212, %v4587
        %v4661 = vmul.f32 %v4213, %v4589
        %v4662 = vmul.f32 %v4214, %v4591
        %v4663 = vmul.f32 %v4215, %v4593
        %v4664 = vmul.f32 %v4216, %v4595
        %v4665 = vmul.f32 %v4217, %v4597
        %v4666 = vmul.f32 %v4218, %v4599
        %v4667 = vmul.f32 %v4219, %v4601
        %v4668 = vmul.f32 %v4220, %v4603
        %v4669 = vmul.f32 %v4221, %v4605
        %v4670 = vpack.c.bf16 %v4608, %v4606
        %v4671 = vpack.c.bf16 %v4609, %v4607
        %v4672 = vpack.c.bf16 %v4612, %v4610
        %v4673 = vpack.c.bf16 %v4613, %v4611
        %v4674 = vpack.c.bf16 %v4616, %v4614
        %v4675 = vpack.c.bf16 %v4617, %v4615
        %v4676 = vpack.c.bf16 %v4620, %v4618
        %v4677 = vpack.c.bf16 %v4621, %v4619
        %v4678 = vpack.c.bf16 %v4624, %v4622
        %v4679 = vpack.c.bf16 %v4625, %v4623
        %v4680 = vpack.c.bf16 %v4628, %v4626
        %v4681 = vpack.c.bf16 %v4629, %v4627
        %v4682 = vpack.c.bf16 %v4632, %v4630
        %v4683 = vpack.c.bf16 %v4633, %v4631
        %v4684 = vpack.c.bf16 %v4636, %v4634
        %v4685 = vpack.c.bf16 %v4637, %v4635
        %v4686 = vpack.c.bf16 %v4640, %v4638
        %v4687 = vpack.c.bf16 %v4641, %v4639
        %v4688 = vpack.c.bf16 %v4644, %v4642
        %v4689 = vpack.c.bf16 %v4645, %v4643
        %v4690 = vpack.c.bf16 %v4648, %v4646
        %v4691 = vpack.c.bf16 %v4649, %v4647
        %v4692 = vpack.c.bf16 %v4652, %v4650
        %v4693 = vpack.c.bf16 %v4653, %v4651
        %v4694 = vpack.c.bf16 %v4656, %v4654
        %v4695 = vpack.c.bf16 %v4657, %v4655
        %v4696 = vpack.c.bf16 %v4660, %v4658
        %v4697 = vpack.c.bf16 %v4661, %v4659
        %v4698 = vpack.c.bf16 %v4664, %v4662
        %v4699 = vpack.c.bf16 %v4665, %v4663
        %v4700 = vpack.c.bf16 %v4668, %v4666
        %v4701 = vpack.c.bf16 %v4669, %v4667
        %v4702 = vld [vmem:[#allocation9] sm:$0x3]
        %v4703 = vld [vmem:[#allocation2] sm:$0x1]
        %4705 = vset.pattern.permute.xlu0 0
        %4706 = vperm.xlu0 %4705, %v4703
        %v4707 = vpop.permute.xlu0 %4706
        %v4709 = vlaneseq
        %v4710 = vshrl.u32 %v4709, 7
        %v4711 = vsub.s32 0, %v4710
        %v4712 = vrot.slane %v4707, %v4711
        %v4715 = vunpack.c.l.s4 1966171168
        %v4716 = vunpack.c.0.s8 %v4715
        %v4717 = vlaneseq
        %v4718 = vshrl.u32 %v4717, 7
        %v4719 = vsub.s32 %v4716, %v4718
        %v4720 = vrot.slane %v4702, %v4719
        %v4721 = vcombine.high %v4720, %v4720
        %v4723 = vunpack.c.l.s4 1966171168
        %v4724 = vunpack.c.0.s8 %v4723
        %v4725 = vlaneseq
        %v4726 = vshrl.u32 %v4725, 7
        %v4727 = vsub.s32 %v4724, %v4726
        %v4728 = vrot.slane %v4720, %v4727
        %v4730 = vunpack.c.l.s4 1966171168
        %v4731 = vunpack.c.0.s8 %v4730
        %v4732 = vlaneseq
        %v4733 = vshrl.u32 %v4732, 7
        %v4734 = vsub.s32 %v4731, %v4733
        %v4735 = vrot.slane %v4721, %v4734
        %4738 = vmatprep.subr.bf16.mxu0 %v4671
        %4739 = vmatpush1.bf16.xpose.msra.mxu0 %v4670
        %4740 = vmatprep.subr.bf16.mxu0 %v4673
        %4741 = vmatpush1.bf16.xpose.msra.mxu0 %v4672
        %4742 = vmatprep.subr.bf16.mxu0 %v4675
        %4743 = vmatpush1.bf16.xpose.msra.mxu0 %v4674
        %4744 = vmatprep.subr.bf16.mxu0 %v4677
        %4745 = vmatpush1.bf16.xpose.msra.mxu0 %v4676
        %4746 = vmatprep.subr.bf16.mxu0 %v4679
        %4747 = vmatpush1.bf16.xpose.msra.mxu0 %v4678
        %4748 = vmatprep.subr.bf16.mxu0 %v4681
        %4749 = vmatpush1.bf16.xpose.msra.mxu0 %v4680
        %4750 = vmatprep.subr.bf16.mxu0 %v4683
        %4751 = vmatpush1.bf16.xpose.msra.mxu0 %v4682
        %4752 = vmatprep.subr.bf16.mxu0 %v4685
        %4753 = vmatpush1.bf16.xpose.msra.mxu0 %v4684
        %4754 = vmatprep.subr.bf16.mxu0 %v4687
        %4755 = vmatpush1.bf16.xpose.msra.mxu0 %v4686
        %4756 = vmatprep.subr.bf16.mxu0 %v4689
        %4757 = vmatpush1.bf16.xpose.msra.mxu0 %v4688
        %4758 = vmatprep.subr.bf16.mxu0 %v4691
        %4759 = vmatpush1.bf16.xpose.msra.mxu0 %v4690
        %4760 = vmatprep.subr.bf16.mxu0 %v4693
        %4761 = vmatpush1.bf16.xpose.msra.mxu0 %v4692
        %4762 = vmatprep.subr.bf16.mxu0 %v4695
        %4763 = vmatpush1.bf16.xpose.msra.mxu0 %v4694
        %4764 = vmatprep.subr.bf16.mxu0 %v4697
        %4765 = vmatpush1.bf16.xpose.msra.mxu0 %v4696
        %4766 = vmatprep.subr.bf16.mxu0 %v4699
        %4767 = vmatpush1.bf16.xpose.msra.mxu0 %v4698
        %4768 = vmatprep.subr.bf16.mxu0 %v4701
        %4769 = vmatpush1.bf16.xpose.msra.mxu0 %v4700
        %4770 = vmatprep.mubr.bf16.mxu0 %v4735
        %4771 = vmatmul.mubr.bf16.gmra.mrb[0].mxu0 %v4728
        %v4772 = vpop.f32.mrb[0].mxu0
        %v4773 = vadd.f32 %v4712, %v4772
        %v4774 = vpop.f32.mrb[0].mxu0
        %v4775 = vadd.f32 %v4712, %v4774
        %v4776 = vpop.f32.mrb[0].mxu0
        %v4777 = vpop.f32.mrb[0].mxu0
        %4778 = vdwg.mxu0
        %v4781 = vcombine.low %v4773, %v4775
        %v4783 = vunpack.c.l.s4 1966171168
        %v4784 = vunpack.c.0.s8 %v4783
        %v4785 = vlaneseq
        %v4786 = vshrl.u32 %v4785, 7
        %v4787 = vsub.s32 %v4784, %v4786
        %v4788 = vrot.slane %v4781, %v4787
        %v4790 = vunpack.c.l.s4 1966171168
        %v4791 = vunpack.c.0.s8 %v4790
        %v4792 = vlaneseq
        %v4793 = vshrl.u32 %v4792, 7
        %v4794 = vsub.s32 %v4791, %v4793
        %v4795 = vrot.slane %v4788, %v4794
        %v4797 = vlaneseq
        %vm4798 = vcmp.ge.s32.totalorder %v4797, 0
        %vm4799 = vcmp.lt.s32.totalorder %v4797, 256
        %vm4800 = vmand %vm4798, %vm4799
        %4801 = vst.msk [vmem:[%s285] sm:$0x3] %vm4800, %v4795
        %s4802 = sand.u32 %s144, 1
        %s4803 = scalar_lea.sflag [#allocation5], %s4802
        %s4804 = sand.u32 %s144, 1
        %s4805 = smul.addr %s4804, 2
        %s4806 = scalar_lea.vmem [#allocation11], %s4805
        // Predicated region
        $region57: #{tpu_custom_call.1} parent=39 // pred_check
          %p4807 = pneg %p154
        $region58: #{tpu_custom_call.1} parent=39 // pred_check_branch
          %4809 = sbr.rel (%p4807) target = $region60
        $region59: #{tpu_custom_call.1} parent=39 // pred_region
          %s4810 = smul.u32 2, %s26
          %s4812 = ssub.s32 32, 32
          %4813 = vsyncadd %s4803, %s4812
          %s4814 = smul.addr %s4810, 16
          %s4815 = scalar_lea.hbm %s5, %s4814
          %s4817 = sshll.u32 %s4806, 4
          %s4818 = int_to_ptr.vmem [resolvable:$true] %s4817
          %4820 = dma.vmem_to_hbm [thread:$0]  %s4818, 32, %s4815, %s4803
        $region60: #{tpu_custom_call.1} parent=39 // pred_fallthru
          _
      $region40: #{tpu_custom_call.1} parent=5 // pred_fallthru
        _
      %p4821 = scmp.le.s32.totalorder 2, %s21
      // Predicated region
      $region61: #{tpu_custom_call.1} parent=5 // pred_check
        %p4822 = pneg %p4821
      $region62: #{tpu_custom_call.1} parent=5 // pred_check_branch
        %4824 = sbr.rel (%p4822) target = $region64
      $region63: #{tpu_custom_call.1} parent=5 // pred_region
        %s4825 = ssub.s32 %s21, 2
        // Predicated region
        $region65: #{tpu_custom_call.1} parent=63 // pred_check
          %p4826 = pneg %p160
        $region66: #{tpu_custom_call.1} parent=63 // pred_check_branch
          %4828 = sbr.rel (%p4826) target = $region68
        $region67: #{tpu_custom_call.1} parent=63 // pred_region
          %s4829 = sand.u32 %s145, 1
          %s4830 = scalar_lea.sflag [#allocation5], %s4829
          %s4831 = sand.u32 %s145, 1
          %s4832 = smul.addr %s4831, 2
          %s4833 = scalar_lea.vmem [#allocation11], %s4832
          %4834 = dma.done %s4830, 32
        $region68: #{tpu_custom_call.1} parent=63 // pred_fallthru
          _
      $region64: #{tpu_custom_call.1} parent=5 // pred_fallthru
        _
    $region6: #{tpu_custom_call.1} parent=1 // loop_footer
      %s25 = sadd.s32 1, %s21
    $region7: #{tpu_custom_call.1} parent=1 // loop_footer_branch
      %20 = sbr.rel target = $region3
    $region8: #{tpu_custom_call.1} parent=1 // loop_exit
      _
    %4835 = vsyncpa [#allocation4], 1
    %s4836 = scalar_lea.sflag [#allocation4], 1
    %4837 = vsyncpa %s4836, 1
    %4838 = vsyncpa [#allocation7], 1
    %4839 = vsyncpa [#allocation10], 1
    %4840 = vsyncpa [#allocation5], 1
    %s4841 = scalar_lea.sflag [#allocation5], 1
    %4842 = vsyncpa %s4841, 1

</llo_original>
